<compile_context>
chip_gen: v7x
topology: tpu7x:2x2x1
jax: 0.10.0
libtpu: 0.0.40
codegen_flags: <defaults>
</compile_context>

<pallas_src>
import jax
import jax.numpy as jnp
from jax.experimental import pallas as pl
from jax.experimental.pallas import tpu as pltpu

VMEM = pltpu.MemorySpace.VMEM
SMEM = pltpu.MemorySpace.SMEM


# ----------------------------- kernel helpers -----------------------------

def _softmax_last(y):
    m = jnp.max(y, axis=-1, keepdims=True)
    e = jnp.exp(y - m)
    # reciprocal on the EUP slot instead of a VALU divide
    return e * pl.reciprocal(jnp.sum(e, axis=-1, keepdims=True), approx=True)


def _layernorm(x, g, b, eps=1e-5):
    mu = jnp.mean(x, axis=-1, keepdims=True)
    var = jnp.mean((x - mu) ** 2, axis=-1, keepdims=True)
    return (x - mu) * jax.lax.rsqrt(var + eps) * g + b


# ------------------------------ fused kernel --------------------------------

def fused_forward_kernel(
    # scalars (SMEM): [weight1, weight2]
    w12_ref,
    # data
    adj_ref, x_ref, tb_ref, eps_ref,
    # gnn / tabular branch weights
    wg_ref, bg_ref, wt_ref, bt_ref,
    # BetaVAE (encoder 2f1 -> f1, decoder f1 -> 2f1)
    we_ref, be_ref, wmu_ref, bmu_ref, wlv_ref, blv_ref, wd_ref, bd_ref,
    # attention gates, stacked over the 3 branches: (3, d, d) / (3, 1, d)
    wa_ref, ba_ref,
    # transformer encoders, stacked over the 3 branches
    twv_ref, tbv_ref, two_ref, tbo_ref, tw1_ref, tb1_ref, tw2_ref, tb2_ref,
    tg1_ref, tbe1_ref, tg2_ref, tbe2_ref,
    # classification head
    fw1_ref, fb1_ref, fw2_ref, fb2_ref, fw3_ref, fb3_ref,
    # outputs
    out_ref, rec_ref, mu_ref, lv_ref, h_ref,
):
    f32 = jnp.float32

    # --- gnn branch: relu((A_norm @ X) @ Wg + bg) ---------------------------
    ax = jnp.dot(adj_ref[...], x_ref[...], preferred_element_type=f32)
    gnn_x = jnp.maximum(
        jnp.dot(ax, wg_ref[...], preferred_element_type=f32) + bg_ref[...], 0.0)

    # --- tabular branch: relu(tb @ Wt + bt) ----------------------------------
    tab_x = jnp.maximum(
        jnp.dot(tb_ref[...], wt_ref[...], preferred_element_type=f32) + bt_ref[...], 0.0)

    # --- concat (lane-aligned; f1 is a multiple of 128 in the demo) ----------
    x_cat = jnp.concatenate([gnn_x, tab_x], axis=1)          # (n, 2f1)
    h_ref[...] = x_cat                                       # h = x (pre-VAE)

    # --- BetaVAE: encode -> reparameterize -> decode --------------------------
    henc = jnp.maximum(
        jnp.dot(x_cat, we_ref[...], preferred_element_type=f32) + be_ref[...], 0.0)
    mu = jnp.dot(henc, wmu_ref[...], preferred_element_type=f32) + bmu_ref[...]
    lv = jnp.dot(henc, wlv_ref[...], preferred_element_type=f32) + blv_ref[...]
    z = mu + jnp.exp(0.5 * lv) * eps_ref[...]
    rec_ref[...] = jnp.dot(z, wd_ref[...], preferred_element_type=f32) + bd_ref[...]
    mu_ref[...] = mu
    lv_ref[...] = lv

    # --- three fusion branches: gt = [gnn|tab], gx = [gnn|z], tx = [tab|z] ----
    branches = (x_cat,
                jnp.concatenate([gnn_x, z], axis=1),
                jnp.concatenate([tab_x, z], axis=1))

    fused = []
    for i, xb in enumerate(branches):
        # attention gate: softmax(Linear(x), dim=1) * x  (dim 1 == feature dim)
        gate = _softmax_last(
            jnp.dot(xb, wa_ref[i], preferred_element_type=f32) + ba_ref[i])
        xg = gate * xb
        # transformer encoder block on seq_len == 1:
        # self-attention softmax over one position is identically 1, so only
        # the V/O projections remain, then residual+LN and FFN+residual+LN.
        attn = jnp.dot(xg, twv_ref[i], preferred_element_type=f32) + tbv_ref[i]
        attn = jnp.dot(attn, two_ref[i], preferred_element_type=f32) + tbo_ref[i]
        hh = _layernorm(xg + attn, tg1_ref[i], tbe1_ref[i])
        ff = jnp.maximum(
            jnp.dot(hh, tw1_ref[i], preferred_element_type=f32) + tb1_ref[i], 0.0)
        ff = jnp.dot(ff, tw2_ref[i], preferred_element_type=f32) + tb2_ref[i]
        fused.append(_layernorm(hh + ff, tg2_ref[i], tbe2_ref[i]))

    # --- weighted fusion + head (dropout = eval-mode identity) ----------------
    w1 = w12_ref[0]
    w2 = w12_ref[1]
    xf = w1 * fused[0] + w2 * fused[1] + (1.0 - w1 - w2) * fused[2]
    xf = jnp.maximum(
        jnp.dot(xf, fw1_ref[...], preferred_element_type=f32) + fb1_ref[...], 0.0)
    xf = jnp.maximum(
        jnp.dot(xf, fw2_ref[...], preferred_element_type=f32) + fb2_ref[...], 0.0)
    out_ref[...] = jnp.dot(xf, fw3_ref[...], preferred_element_type=f32) + fb3_ref[...]


# ------------------------------- parameters ---------------------------------

def init_params(key, fin, ftb, f1):
    d = 2 * f1
    keys = iter(jax.random.split(key, 48))

    def w(shape, scale=0.1):
        return (scale * jax.random.normal(next(keys), shape)).astype(jnp.float32)

    p = {
        # gnnmodel (single GCN layer fin -> f1)
        "wg": w((fin, f1)), "bg": w((1, f1)),
        # CrossModel / tabular MLP (ftb -> f1)
        "wt": w((ftb, f1)), "bt": w((1, f1)),
        # BetaVAE: Encoder(2f1 -> f1), Decoder(f1 -> 2f1)
        "we": w((d, d)), "be": w((1, d)),
        "wmu": w((d, f1)), "bmu": w((1, f1)),
        "wlv": w((d, f1)), "blv": w((1, f1)),
        "wd": w((f1, d)), "bd": w((1, d)),
        # [weight1, weight2]  (self.weight is unused in forward; omitted)
        "w12": (0.1 * jax.random.normal(next(keys), (2,))).astype(jnp.float32),
        # attention_1..3 : Linear(2f1, 2f1) + Softmax(dim=1), stacked
        "wa": w((3, d, d)), "ba": w((3, 1, d)),
        # TransformerEncoder_1..3, stacked
        "t_wv": w((3, d, d)), "t_bv": w((3, 1, d)),
        "t_wo": w((3, d, d)), "t_bo": w((3, 1, d)),
        "t_w1": w((3, d, d)), "t_b1": w((3, 1, d)),
        "t_w2": w((3, d, d)), "t_b2": w((3, 1, d)),
        "t_g1": jnp.ones((3, 1, d), jnp.float32),
        "t_be1": jnp.zeros((3, 1, d), jnp.float32),
        "t_g2": jnp.ones((3, 1, d), jnp.float32),
        "t_be2": jnp.zeros((3, 1, d), jnp.float32),
        # head: f1, f2, f3
        "fw1": w((d, d)), "fb1": w((1, d)),
        "fw2": w((d, d)), "fb2": w((1, d)),
        "fw3": w((d, 2)), "fb3": w((1, 2)),
    }
    return p


# -------------------------------- forward -----------------------------------

def forward(params, x_nodes, adj, tb, eps):
    n, fin = x_nodes.shape
    ftb = tb.shape[1]
    f1 = params["wg"].shape[1]
    d = 2 * f1
    f32 = jnp.float32

    inputs = (
        params["w12"],
        adj, x_nodes, tb, eps,
        params["wg"], params["bg"], params["wt"], params["bt"],
        params["we"], params["be"], params["wmu"], params["bmu"],
        params["wlv"], params["blv"], params["wd"], params["bd"],
        params["wa"], params["ba"],
        params["t_wv"], params["t_bv"], params["t_wo"], params["t_bo"],
        params["t_w1"], params["t_b1"], params["t_w2"], params["t_b2"],
        params["t_g1"], params["t_be1"], params["t_g2"], params["t_be2"],
        params["fw1"], params["fb1"], params["fw2"], params["fb2"],
        params["fw3"], params["fb3"],
    )

    # advisory cost estimate so XLA can schedule around the single custom call
    mm = lambda m, k, nn: 2 * m * k * nn
    flops = (mm(n, n, fin) + mm(n, fin, f1) + mm(n, ftb, f1)
             + mm(n, d, d) + 2 * mm(n, d, f1) + mm(n, f1, d)
             + 3 * 5 * mm(n, d, d) + 2 * mm(n, d, d) + mm(n, d, 2))
    transcendentals = n * (f1 + 3 * d) + 12 * n
    out_elems = n * (2 + d + f1 + f1 + d)
    bytes_accessed = 4 * (sum(int(a.size) for a in inputs) + out_elems)
    ce = pl.CostEstimate(flops=flops, transcendentals=transcendentals,
                         bytes_accessed=bytes_accessed)

    out2d, rec, z_mean, z_logvar, h = pl.pallas_call(
        fused_forward_kernel,
        out_shape=(
            jax.ShapeDtypeStruct((n, 2), f32),    # logits
            jax.ShapeDtypeStruct((n, d), f32),    # reconstructed
            jax.ShapeDtypeStruct((n, f1), f32),   # z_mean
            jax.ShapeDtypeStruct((n, f1), f32),   # z_logvar
            jax.ShapeDtypeStruct((n, d), f32),    # h
        ),
        in_specs=[pl.BlockSpec(memory_space=SMEM)]
                 + [pl.BlockSpec(memory_space=VMEM)] * (len(inputs) - 1),
        out_specs=tuple(pl.BlockSpec(memory_space=VMEM) for _ in range(5)),
        cost_estimate=ce,
    )(*inputs)

    out = out2d[:, None, :]   # re-attach the torch .unsqueeze(1) seq dim -> (n, 1, 2)
    return out, rec, z_mean, z_logvar, h


# --------------------------------- main --------------------------------------

if __name__ == "__main__":
    # F1 = 128 so d = 2*F1 = 256: lane-dense activations and 128-aligned concats.
    N, FIN, FTB, F1 = 8, 16, 16, 128

    key = jax.random.PRNGKey(0)
    k_par, k_x, k_a, k_tb, k_eps = jax.random.split(key, 5)

    params = init_params(k_par, FIN, FTB, F1)

    x_nodes = jax.random.normal(k_x, (N, FIN), jnp.float32)
    a = (jax.random.uniform(k_a, (N, N)) > 0.6).astype(jnp.float32)
    a = jnp.maximum(a, a.T) + jnp.eye(N, dtype=jnp.float32)
    adj = a / jnp.sum(a, axis=1, keepdims=True)               # row-normalized adjacency
    tb = jax.random.normal(k_tb, (N, FTB), jnp.float32)
    eps = jax.random.normal(k_eps, (N, F1), jnp.float32)      # VAE reparam noise

    fwd = jax.jit(forward)
    out, rec, z_mean, z_logvar, h = fwd(params, x_nodes, adj, tb, eps)
    jax.block_until_ready((out, rec, z_mean, z_logvar, h))

    assert out.shape == (N, 1, 2)
    assert rec.shape == (N, 2 * F1)
    assert z_mean.shape == (N, F1) and z_logvar.shape == (N, F1)
    assert h.shape == (N, 2 * F1)
    print("KERNEL_OK")
</pallas_src>

<mosaic_0001>
module attributes {stable_mosaic.version = 11 : i64} {
  func.func @fused_forward_kernel(%arg0: memref<2xf32, #tpu.memory_space<smem>>, %arg1: memref<8x8xf32, #tpu.memory_space<vmem>>, %arg2: memref<8x16xf32, #tpu.memory_space<vmem>>, %arg3: memref<8x16xf32, #tpu.memory_space<vmem>>, %arg4: memref<8x128xf32, #tpu.memory_space<vmem>>, %arg5: memref<16x128xf32, #tpu.memory_space<vmem>>, %arg6: memref<1x128xf32, #tpu.memory_space<vmem>>, %arg7: memref<16x128xf32, #tpu.memory_space<vmem>>, %arg8: memref<1x128xf32, #tpu.memory_space<vmem>>, %arg9: memref<256x256xf32, #tpu.memory_space<vmem>>, %arg10: memref<1x256xf32, #tpu.memory_space<vmem>>, %arg11: memref<256x128xf32, #tpu.memory_space<vmem>>, %arg12: memref<1x128xf32, #tpu.memory_space<vmem>>, %arg13: memref<256x128xf32, #tpu.memory_space<vmem>>, %arg14: memref<1x128xf32, #tpu.memory_space<vmem>>, %arg15: memref<128x256xf32, #tpu.memory_space<vmem>>, %arg16: memref<1x256xf32, #tpu.memory_space<vmem>>, %arg17: memref<3x256x256xf32, #tpu.memory_space<vmem>>, %arg18: memref<3x1x256xf32, #tpu.memory_space<vmem>>, %arg19: memref<3x256x256xf32, #tpu.memory_space<vmem>>, %arg20: memref<3x1x256xf32, #tpu.memory_space<vmem>>, %arg21: memref<3x256x256xf32, #tpu.memory_space<vmem>>, %arg22: memref<3x1x256xf32, #tpu.memory_space<vmem>>, %arg23: memref<3x256x256xf32, #tpu.memory_space<vmem>>, %arg24: memref<3x1x256xf32, #tpu.memory_space<vmem>>, %arg25: memref<3x256x256xf32, #tpu.memory_space<vmem>>, %arg26: memref<3x1x256xf32, #tpu.memory_space<vmem>>, %arg27: memref<3x1x256xf32, #tpu.memory_space<vmem>>, %arg28: memref<3x1x256xf32, #tpu.memory_space<vmem>>, %arg29: memref<3x1x256xf32, #tpu.memory_space<vmem>>, %arg30: memref<3x1x256xf32, #tpu.memory_space<vmem>>, %arg31: memref<256x256xf32, #tpu.memory_space<vmem>>, %arg32: memref<1x256xf32, #tpu.memory_space<vmem>>, %arg33: memref<256x256xf32, #tpu.memory_space<vmem>>, %arg34: memref<1x256xf32, #tpu.memory_space<vmem>>, %arg35: memref<256x2xf32, #tpu.memory_space<vmem>>, %arg36: memref<1x2xf32, #tpu.memory_space<vmem>>, %arg37: memref<8x2xf32, #tpu.memory_space<vmem>>, %arg38: memref<8x256xf32, #tpu.memory_space<vmem>>, %arg39: memref<8x128xf32, #tpu.memory_space<vmem>>, %arg40: memref<8x128xf32, #tpu.memory_space<vmem>>, %arg41: memref<8x256xf32, #tpu.memory_space<vmem>>) attributes {dimension_semantics = [], scalar_prefetch = 0 : i64, scratch_operands = 0 : i64, tpu.core_type = #tpu.core_type<tc>} {
    %c0 = arith.constant 0 : index
    %c0_0 = arith.constant 0 : index
    %0 = vector.load %arg1[%c0, %c0_0] : memref<8x8xf32, #tpu.memory_space<vmem>>, vector<8x8xf32>
    %c0_1 = arith.constant 0 : index
    %c0_2 = arith.constant 0 : index
    %1 = vector.load %arg2[%c0_1, %c0_2] : memref<8x16xf32, #tpu.memory_space<vmem>>, vector<8x16xf32>
    %cst = arith.constant dense<0.000000e+00> : vector<8x16xf32>
    %2 = tpu.matmul %0, %1, %cst {dimension_numbers = #tpu.dot_dimension_numbers<[1], [0], [0], [1], [0, 0, 1, 1], [], []>} : vector<8x8xf32>, vector<8x16xf32>, vector<8x16xf32> -> vector<8x16xf32>
    %c0_3 = arith.constant 0 : index
    %c0_4 = arith.constant 0 : index
    %3 = vector.load %arg5[%c0_3, %c0_4] : memref<16x128xf32, #tpu.memory_space<vmem>>, vector<16x128xf32>
    %cst_5 = arith.constant dense<0.000000e+00> : vector<8x128xf32>
    %4 = tpu.matmul %2, %3, %cst_5 {dimension_numbers = #tpu.dot_dimension_numbers<[1], [0], [0], [1], [0, 0, 1, 1], [], []>} : vector<8x16xf32>, vector<16x128xf32>, vector<8x128xf32> -> vector<8x128xf32>
    %c0_6 = arith.constant 0 : index
    %c0_7 = arith.constant 0 : index
    %5 = vector.load %arg6[%c0_6, %c0_7] : memref<1x128xf32, #tpu.memory_space<vmem>>, vector<1x128xf32>
    %6 = vector.broadcast %5 : vector<1x128xf32> to vector<8x128xf32>
    %7 = arith.addf %4, %6 : vector<8x128xf32>
    %cst_8 = arith.constant 0.000000e+00 : f32
    %8 = vector.broadcast %cst_8 : f32 to vector<8x128xf32>
    %9 = arith.maximumf %7, %8 : vector<8x128xf32>
    %c0_9 = arith.constant 0 : index
    %c0_10 = arith.constant 0 : index
    %10 = vector.load %arg3[%c0_9, %c0_10] : memref<8x16xf32, #tpu.memory_space<vmem>>, vector<8x16xf32>
    %c0_11 = arith.constant 0 : index
    %c0_12 = arith.constant 0 : index
    %11 = vector.load %arg7[%c0_11, %c0_12] : memref<16x128xf32, #tpu.memory_space<vmem>>, vector<16x128xf32>
    %cst_13 = arith.constant dense<0.000000e+00> : vector<8x128xf32>
    %12 = tpu.matmul %10, %11, %cst_13 {dimension_numbers = #tpu.dot_dimension_numbers<[1], [0], [0], [1], [0, 0, 1, 1], [], []>} : vector<8x16xf32>, vector<16x128xf32>, vector<8x128xf32> -> vector<8x128xf32>
    %c0_14 = arith.constant 0 : index
    %c0_15 = arith.constant 0 : index
    %13 = vector.load %arg8[%c0_14, %c0_15] : memref<1x128xf32, #tpu.memory_space<vmem>>, vector<1x128xf32>
    %14 = vector.broadcast %13 : vector<1x128xf32> to vector<8x128xf32>
    %15 = arith.addf %12, %14 : vector<8x128xf32>
    %cst_16 = arith.constant 0.000000e+00 : f32
    %16 = vector.broadcast %cst_16 : f32 to vector<8x128xf32>
    %17 = arith.maximumf %15, %16 : vector<8x128xf32>
    %18 = tpu.concatenate %9, %17 in 1 : vector<8x128xf32>, vector<8x128xf32> -> vector<8x256xf32>
    %c0_17 = arith.constant 0 : index
    %c0_18 = arith.constant 0 : index
    %19 = vector.load %arg41[%c0_17, %c0_18] : memref<8x256xf32, #tpu.memory_space<vmem>>, vector<8x256xf32>
    tpu.vector_store %arg41[%c0_17, %c0_18], %18 {strides = array<i32>} : memref<8x256xf32, #tpu.memory_space<vmem>>, vector<8x256xf32>,
    %c0_19 = arith.constant 0 : index
    %c0_20 = arith.constant 0 : index
    %20 = vector.load %arg9[%c0_19, %c0_20] : memref<256x256xf32, #tpu.memory_space<vmem>>, vector<256x256xf32>
    %cst_21 = arith.constant dense<0.000000e+00> : vector<8x256xf32>
    %21 = tpu.matmul %18, %20, %cst_21 {dimension_numbers = #tpu.dot_dimension_numbers<[1], [0], [0], [1], [0, 0, 1, 1], [], []>} : vector<8x256xf32>, vector<256x256xf32>, vector<8x256xf32> -> vector<8x256xf32>
    %c0_22 = arith.constant 0 : index
    %c0_23 = arith.constant 0 : index
    %22 = vector.load %arg10[%c0_22, %c0_23] : memref<1x256xf32, #tpu.memory_space<vmem>>, vector<1x256xf32>
    %23 = vector.broadcast %22 : vector<1x256xf32> to vector<8x256xf32>
    %24 = arith.addf %21, %23 : vector<8x256xf32>
    %cst_24 = arith.constant 0.000000e+00 : f32
    %25 = vector.broadcast %cst_24 : f32 to vector<8x256xf32>
    %26 = arith.maximumf %24, %25 : vector<8x256xf32>
    %c0_25 = arith.constant 0 : index
    %c0_26 = arith.constant 0 : index
    %27 = vector.load %arg11[%c0_25, %c0_26] : memref<256x128xf32, #tpu.memory_space<vmem>>, vector<256x128xf32>
    %cst_27 = arith.constant dense<0.000000e+00> : vector<8x128xf32>
    %28 = tpu.matmul %26, %27, %cst_27 {dimension_numbers = #tpu.dot_dimension_numbers<[1], [0], [0], [1], [0, 0, 1, 1], [], []>} : vector<8x256xf32>, vector<256x128xf32>, vector<8x128xf32> -> vector<8x128xf32>
    %c0_28 = arith.constant 0 : index
    %c0_29 = arith.constant 0 : index
    %29 = vector.load %arg12[%c0_28, %c0_29] : memref<1x128xf32, #tpu.memory_space<vmem>>, vector<1x128xf32>
    %30 = vector.broadcast %29 : vector<1x128xf32> to vector<8x128xf32>
    %31 = arith.addf %28, %30 : vector<8x128xf32>
    %c0_30 = arith.constant 0 : index
    %c0_31 = arith.constant 0 : index
    %32 = vector.load %arg13[%c0_30, %c0_31] : memref<256x128xf32, #tpu.memory_space<vmem>>, vector<256x128xf32>
    %cst_32 = arith.constant dense<0.000000e+00> : vector<8x128xf32>
    %33 = tpu.matmul %26, %32, %cst_32 {dimension_numbers = #tpu.dot_dimension_numbers<[1], [0], [0], [1], [0, 0, 1, 1], [], []>} : vector<8x256xf32>, vector<256x128xf32>, vector<8x128xf32> -> vector<8x128xf32>
    %c0_33 = arith.constant 0 : index
    %c0_34 = arith.constant 0 : index
    %34 = vector.load %arg14[%c0_33, %c0_34] : memref<1x128xf32, #tpu.memory_space<vmem>>, vector<1x128xf32>
    %35 = vector.broadcast %34 : vector<1x128xf32> to vector<8x128xf32>
    %36 = arith.addf %33, %35 : vector<8x128xf32>
    %cst_35 = arith.constant 5.000000e-01 : f32
    %37 = vector.broadcast %cst_35 : f32 to vector<8x128xf32>
    %38 = arith.mulf %37, %36 : vector<8x128xf32>
    %39 = math.exp %38 : vector<8x128xf32>
    %c0_36 = arith.constant 0 : index
    %c0_37 = arith.constant 0 : index
    %40 = vector.load %arg4[%c0_36, %c0_37] : memref<8x128xf32, #tpu.memory_space<vmem>>, vector<8x128xf32>
    %41 = arith.mulf %39, %40 : vector<8x128xf32>
    %42 = arith.addf %31, %41 : vector<8x128xf32>
    %c0_38 = arith.constant 0 : index
    %c0_39 = arith.constant 0 : index
    %43 = vector.load %arg15[%c0_38, %c0_39] : memref<128x256xf32, #tpu.memory_space<vmem>>, vector<128x256xf32>
    %cst_40 = arith.constant dense<0.000000e+00> : vector<8x256xf32>
    %44 = tpu.matmul %42, %43, %cst_40 {dimension_numbers = #tpu.dot_dimension_numbers<[1], [0], [0], [1], [0, 0, 1, 1], [], []>} : vector<8x128xf32>, vector<128x256xf32>, vector<8x256xf32> -> vector<8x256xf32>
    %c0_41 = arith.constant 0 : index
    %c0_42 = arith.constant 0 : index
    %45 = vector.load %arg16[%c0_41, %c0_42] : memref<1x256xf32, #tpu.memory_space<vmem>>, vector<1x256xf32>
    %46 = vector.broadcast %45 : vector<1x256xf32> to vector<8x256xf32>
    %47 = arith.addf %44, %46 : vector<8x256xf32>
    %c0_43 = arith.constant 0 : index
    %c0_44 = arith.constant 0 : index
    %48 = vector.load %arg38[%c0_43, %c0_44] : memref<8x256xf32, #tpu.memory_space<vmem>>, vector<8x256xf32>
    tpu.vector_store %arg38[%c0_43, %c0_44], %47 {strides = array<i32>} : memref<8x256xf32, #tpu.memory_space<vmem>>, vector<8x256xf32>,
    %c0_45 = arith.constant 0 : index
    %c0_46 = arith.constant 0 : index
    %49 = vector.load %arg39[%c0_45, %c0_46] : memref<8x128xf32, #tpu.memory_space<vmem>>, vector<8x128xf32>
    tpu.vector_store %arg39[%c0_45, %c0_46], %31 {strides = array<i32>} : memref<8x128xf32, #tpu.memory_space<vmem>>, vector<8x128xf32>,
    %c0_47 = arith.constant 0 : index
    %c0_48 = arith.constant 0 : index
    %50 = vector.load %arg40[%c0_47, %c0_48] : memref<8x128xf32, #tpu.memory_space<vmem>>, vector<8x128xf32>
    tpu.vector_store %arg40[%c0_47, %c0_48], %36 {strides = array<i32>} : memref<8x128xf32, #tpu.memory_space<vmem>>, vector<8x128xf32>,
    %51 = tpu.concatenate %9, %42 in 1 : vector<8x128xf32>, vector<8x128xf32> -> vector<8x256xf32>
    %52 = tpu.concatenate %17, %42 in 1 : vector<8x128xf32>, vector<8x128xf32> -> vector<8x256xf32>
    %c0_49 = arith.constant 0 : index
    %c0_50 = arith.constant 0 : index
    %c0_51 = arith.constant 0 : index
    %53 = vector.load %arg17[%c0_49, %c0_50, %c0_51] : memref<3x256x256xf32, #tpu.memory_space<vmem>>, vector<1x256x256xf32>
    %54 = vector.shape_cast %53 : vector<1x256x256xf32> to vector<256x256xf32>
    %cst_52 = arith.constant dense<0.000000e+00> : vector<8x256xf32>
    %55 = tpu.matmul %18, %54, %cst_52 {dimension_numbers = #tpu.dot_dimension_numbers<[1], [0], [0], [1], [0, 0, 1, 1], [], []>} : vector<8x256xf32>, vector<256x256xf32>, vector<8x256xf32> -> vector<8x256xf32>
    %c0_53 = arith.constant 0 : index
    %c0_54 = arith.constant 0 : index
    %c0_55 = arith.constant 0 : index
    %56 = vector.load %arg18[%c0_53, %c0_54, %c0_55] : memref<3x1x256xf32, #tpu.memory_space<vmem>>, vector<1x1x256xf32>
    %57 = vector.shape_cast %56 : vector<1x1x256xf32> to vector<1x256xf32>
    %58 = vector.broadcast %57 : vector<1x256xf32> to vector<8x256xf32>
    %59 = arith.addf %55, %58 : vector<8x256xf32>
    %cst_56 = arith.constant dense<0xFF800000> : vector<8xf32>
    %60 = vector.multi_reduction <maximumf>, %59, %cst_56 [1] : vector<8x256xf32> to vector<8xf32>
    %61 = vector.shape_cast %60 : vector<8xf32> to vector<8x1xf32>
    %62 = vector.broadcast %61 : vector<8x1xf32> to vector<8x256xf32>
    %63 = arith.subf %59, %62 : vector<8x256xf32>
    %64 = math.exp %63 : vector<8x256xf32>
    %cst_57 = arith.constant dense<0.000000e+00> : vector<8xf32>
    %65 = vector.multi_reduction <add>, %64, %cst_57 [1] : vector<8x256xf32> to vector<8xf32>
    %66 = vector.shape_cast %65 : vector<8xf32> to vector<8x1xf32>
    %67 = tpu.reciprocal %66 {approx = true} : vector<8x1xf32> -> vector<8x1xf32>
    %68 = vector.broadcast %67 : vector<8x1xf32> to vector<8x256xf32>
    %69 = arith.mulf %64, %68 : vector<8x256xf32>
    %70 = arith.mulf %69, %18 : vector<8x256xf32>
    %c0_58 = arith.constant 0 : index
    %c0_59 = arith.constant 0 : index
    %c0_60 = arith.constant 0 : index
    %71 = vector.load %arg19[%c0_58, %c0_59, %c0_60] : memref<3x256x256xf32, #tpu.memory_space<vmem>>, vector<1x256x256xf32>
    %72 = vector.shape_cast %71 : vector<1x256x256xf32> to vector<256x256xf32>
    %cst_61 = arith.constant dense<0.000000e+00> : vector<8x256xf32>
    %73 = tpu.matmul %70, %72, %cst_61 {dimension_numbers = #tpu.dot_dimension_numbers<[1], [0], [0], [1], [0, 0, 1, 1], [], []>} : vector<8x256xf32>, vector<256x256xf32>, vector<8x256xf32> -> vector<8x256xf32>
    %c0_62 = arith.constant 0 : index
    %c0_63 = arith.constant 0 : index
    %c0_64 = arith.constant 0 : index
    %74 = vector.load %arg20[%c0_62, %c0_63, %c0_64] : memref<3x1x256xf32, #tpu.memory_space<vmem>>, vector<1x1x256xf32>
    %75 = vector.shape_cast %74 : vector<1x1x256xf32> to vector<1x256xf32>
    %76 = vector.broadcast %75 : vector<1x256xf32> to vector<8x256xf32>
    %77 = arith.addf %73, %76 : vector<8x256xf32>
    %c0_65 = arith.constant 0 : index
    %c0_66 = arith.constant 0 : index
    %c0_67 = arith.constant 0 : index
    %78 = vector.load %arg21[%c0_65, %c0_66, %c0_67] : memref<3x256x256xf32, #tpu.memory_space<vmem>>, vector<1x256x256xf32>
    %79 = vector.shape_cast %78 : vector<1x256x256xf32> to vector<256x256xf32>
    %cst_68 = arith.constant dense<0.000000e+00> : vector<8x256xf32>
    %80 = tpu.matmul %77, %79, %cst_68 {dimension_numbers = #tpu.dot_dimension_numbers<[1], [0], [0], [1], [0, 0, 1, 1], [], []>} : vector<8x256xf32>, vector<256x256xf32>, vector<8x256xf32> -> vector<8x256xf32>
    %c0_69 = arith.constant 0 : index
    %c0_70 = arith.constant 0 : index
    %c0_71 = arith.constant 0 : index
    %81 = vector.load %arg22[%c0_69, %c0_70, %c0_71] : memref<3x1x256xf32, #tpu.memory_space<vmem>>, vector<1x1x256xf32>
    %82 = vector.shape_cast %81 : vector<1x1x256xf32> to vector<1x256xf32>
    %83 = vector.broadcast %82 : vector<1x256xf32> to vector<8x256xf32>
    %84 = arith.addf %80, %83 : vector<8x256xf32>
    %85 = arith.addf %70, %84 : vector<8x256xf32>
    %c0_72 = arith.constant 0 : index
    %c0_73 = arith.constant 0 : index
    %c0_74 = arith.constant 0 : index
    %86 = vector.load %arg27[%c0_72, %c0_73, %c0_74] : memref<3x1x256xf32, #tpu.memory_space<vmem>>, vector<1x1x256xf32>
    %87 = vector.shape_cast %86 : vector<1x1x256xf32> to vector<1x256xf32>
    %c0_75 = arith.constant 0 : index
    %c0_76 = arith.constant 0 : index
    %c0_77 = arith.constant 0 : index
    %88 = vector.load %arg28[%c0_75, %c0_76, %c0_77] : memref<3x1x256xf32, #tpu.memory_space<vmem>>, vector<1x1x256xf32>
    %89 = vector.shape_cast %88 : vector<1x1x256xf32> to vector<1x256xf32>
    %cst_78 = arith.constant dense<0.000000e+00> : vector<8xf32>
    %90 = vector.multi_reduction <add>, %85, %cst_78 [1] : vector<8x256xf32> to vector<8xf32>
    %91 = vector.shape_cast %90 : vector<8xf32> to vector<8x1xf32>
    %cst_79 = arith.constant 2.560000e+02 : f32
    %92 = vector.broadcast %cst_79 : f32 to vector<8x1xf32>
    %93 = arith.divf %91, %92 : vector<8x1xf32>
    %94 = vector.broadcast %93 : vector<8x1xf32> to vector<8x256xf32>
    %95 = arith.subf %85, %94 : vector<8x256xf32>
    %96 = arith.mulf %95, %95 : vector<8x256xf32>
    %cst_80 = arith.constant dense<0.000000e+00> : vector<8xf32>
    %97 = vector.multi_reduction <add>, %96, %cst_80 [1] : vector<8x256xf32> to vector<8xf32>
    %98 = vector.shape_cast %97 : vector<8xf32> to vector<8x1xf32>
    %cst_81 = arith.constant 2.560000e+02 : f32
    %99 = vector.broadcast %cst_81 : f32 to vector<8x1xf32>
    %100 = arith.divf %98, %99 : vector<8x1xf32>
    %101 = vector.broadcast %93 : vector<8x1xf32> to vector<8x256xf32>
    %102 = arith.subf %85, %101 : vector<8x256xf32>
    %cst_82 = arith.constant 9.99999974E-6 : f32
    %103 = vector.broadcast %cst_82 : f32 to vector<8x1xf32>
    %104 = arith.addf %100, %103 : vector<8x1xf32>
    %105 = math.rsqrt %104 : vector<8x1xf32>
    %106 = vector.broadcast %105 : vector<8x1xf32> to vector<8x256xf32>
    %107 = arith.mulf %102, %106 : vector<8x256xf32>
    %108 = vector.broadcast %87 : vector<1x256xf32> to vector<8x256xf32>
    %109 = arith.mulf %107, %108 : vector<8x256xf32>
    %110 = vector.broadcast %89 : vector<1x256xf32> to vector<8x256xf32>
    %111 = arith.addf %109, %110 : vector<8x256xf32>
    %c0_83 = arith.constant 0 : index
    %c0_84 = arith.constant 0 : index
    %c0_85 = arith.constant 0 : index
    %112 = vector.load %arg23[%c0_83, %c0_84, %c0_85] : memref<3x256x256xf32, #tpu.memory_space<vmem>>, vector<1x256x256xf32>
    %113 = vector.shape_cast %112 : vector<1x256x256xf32> to vector<256x256xf32>
    %cst_86 = arith.constant dense<0.000000e+00> : vector<8x256xf32>
    %114 = tpu.matmul %111, %113, %cst_86 {dimension_numbers = #tpu.dot_dimension_numbers<[1], [0], [0], [1], [0, 0, 1, 1], [], []>} : vector<8x256xf32>, vector<256x256xf32>, vector<8x256xf32> -> vector<8x256xf32>
    %c0_87 = arith.constant 0 : index
    %c0_88 = arith.constant 0 : index
    %c0_89 = arith.constant 0 : index
    %115 = vector.load %arg24[%c0_87, %c0_88, %c0_89] : memref<3x1x256xf32, #tpu.memory_space<vmem>>, vector<1x1x256xf32>
    %116 = vector.shape_cast %115 : vector<1x1x256xf32> to vector<1x256xf32>
    %117 = vector.broadcast %116 : vector<1x256xf32> to vector<8x256xf32>
    %118 = arith.addf %114, %117 : vector<8x256xf32>
    %cst_90 = arith.constant 0.000000e+00 : f32
    %119 = vector.broadcast %cst_90 : f32 to vector<8x256xf32>
    %120 = arith.maximumf %118, %119 : vector<8x256xf32>
    %c0_91 = arith.constant 0 : index
    %c0_92 = arith.constant 0 : index
    %c0_93 = arith.constant 0 : index
    %121 = vector.load %arg25[%c0_91, %c0_92, %c0_93] : memref<3x256x256xf32, #tpu.memory_space<vmem>>, vector<1x256x256xf32>
    %122 = vector.shape_cast %121 : vector<1x256x256xf32> to vector<256x256xf32>
    %cst_94 = arith.constant dense<0.000000e+00> : vector<8x256xf32>
    %123 = tpu.matmul %120, %122, %cst_94 {dimension_numbers = #tpu.dot_dimension_numbers<[1], [0], [0], [1], [0, 0, 1, 1], [], []>} : vector<8x256xf32>, vector<256x256xf32>, vector<8x256xf32> -> vector<8x256xf32>
    %c0_95 = arith.constant 0 : index
    %c0_96 = arith.constant 0 : index
    %c0_97 = arith.constant 0 : index
    %124 = vector.load %arg26[%c0_95, %c0_96, %c0_97] : memref<3x1x256xf32, #tpu.memory_space<vmem>>, vector<1x1x256xf32>
    %125 = vector.shape_cast %124 : vector<1x1x256xf32> to vector<1x256xf32>
    %126 = vector.broadcast %125 : vector<1x256xf32> to vector<8x256xf32>
    %127 = arith.addf %123, %126 : vector<8x256xf32>
    %128 = arith.addf %111, %127 : vector<8x256xf32>
    %c0_98 = arith.constant 0 : index
    %c0_99 = arith.constant 0 : index
    %c0_100 = arith.constant 0 : index
    %129 = vector.load %arg29[%c0_98, %c0_99, %c0_100] : memref<3x1x256xf32, #tpu.memory_space<vmem>>, vector<1x1x256xf32>
    %130 = vector.shape_cast %129 : vector<1x1x256xf32> to vector<1x256xf32>
    %c0_101 = arith.constant 0 : index
    %c0_102 = arith.constant 0 : index
    %c0_103 = arith.constant 0 : index
    %131 = vector.load %arg30[%c0_101, %c0_102, %c0_103] : memref<3x1x256xf32, #tpu.memory_space<vmem>>, vector<1x1x256xf32>
    %132 = vector.shape_cast %131 : vector<1x1x256xf32> to vector<1x256xf32>
    %cst_104 = arith.constant dense<0.000000e+00> : vector<8xf32>
    %133 = vector.multi_reduction <add>, %128, %cst_104 [1] : vector<8x256xf32> to vector<8xf32>
    %134 = vector.shape_cast %133 : vector<8xf32> to vector<8x1xf32>
    %cst_105 = arith.constant 2.560000e+02 : f32
    %135 = vector.broadcast %cst_105 : f32 to vector<8x1xf32>
    %136 = arith.divf %134, %135 : vector<8x1xf32>
    %137 = vector.broadcast %136 : vector<8x1xf32> to vector<8x256xf32>
    %138 = arith.subf %128, %137 : vector<8x256xf32>
    %139 = arith.mulf %138, %138 : vector<8x256xf32>
    %cst_106 = arith.constant dense<0.000000e+00> : vector<8xf32>
    %140 = vector.multi_reduction <add>, %139, %cst_106 [1] : vector<8x256xf32> to vector<8xf32>
    %141 = vector.shape_cast %140 : vector<8xf32> to vector<8x1xf32>
    %cst_107 = arith.constant 2.560000e+02 : f32
    %142 = vector.broadcast %cst_107 : f32 to vector<8x1xf32>
    %143 = arith.divf %141, %142 : vector<8x1xf32>
    %144 = vector.broadcast %136 : vector<8x1xf32> to vector<8x256xf32>
    %145 = arith.subf %128, %144 : vector<8x256xf32>
    %cst_108 = arith.constant 9.99999974E-6 : f32
    %146 = vector.broadcast %cst_108 : f32 to vector<8x1xf32>
    %147 = arith.addf %143, %146 : vector<8x1xf32>
    %148 = math.rsqrt %147 : vector<8x1xf32>
    %149 = vector.broadcast %148 : vector<8x1xf32> to vector<8x256xf32>
    %150 = arith.mulf %145, %149 : vector<8x256xf32>
    %151 = vector.broadcast %130 : vector<1x256xf32> to vector<8x256xf32>
    %152 = arith.mulf %150, %151 : vector<8x256xf32>
    %153 = vector.broadcast %132 : vector<1x256xf32> to vector<8x256xf32>
    %154 = arith.addf %152, %153 : vector<8x256xf32>
    %c1 = arith.constant 1 : index
    %c0_109 = arith.constant 0 : index
    %c0_110 = arith.constant 0 : index
    %155 = vector.load %arg17[%c1, %c0_109, %c0_110] : memref<3x256x256xf32, #tpu.memory_space<vmem>>, vector<1x256x256xf32>
    %156 = vector.shape_cast %155 : vector<1x256x256xf32> to vector<256x256xf32>
    %cst_111 = arith.constant dense<0.000000e+00> : vector<8x256xf32>
    %157 = tpu.matmul %51, %156, %cst_111 {dimension_numbers = #tpu.dot_dimension_numbers<[1], [0], [0], [1], [0, 0, 1, 1], [], []>} : vector<8x256xf32>, vector<256x256xf32>, vector<8x256xf32> -> vector<8x256xf32>
    %c1_112 = arith.constant 1 : index
    %c0_113 = arith.constant 0 : index
    %c0_114 = arith.constant 0 : index
    %158 = vector.load %arg18[%c1_112, %c0_113, %c0_114] : memref<3x1x256xf32, #tpu.memory_space<vmem>>, vector<1x1x256xf32>
    %159 = vector.shape_cast %158 : vector<1x1x256xf32> to vector<1x256xf32>
    %160 = vector.broadcast %159 : vector<1x256xf32> to vector<8x256xf32>
    %161 = arith.addf %157, %160 : vector<8x256xf32>
    %cst_115 = arith.constant dense<0xFF800000> : vector<8xf32>
    %162 = vector.multi_reduction <maximumf>, %161, %cst_115 [1] : vector<8x256xf32> to vector<8xf32>
    %163 = vector.shape_cast %162 : vector<8xf32> to vector<8x1xf32>
    %164 = vector.broadcast %163 : vector<8x1xf32> to vector<8x256xf32>
    %165 = arith.subf %161, %164 : vector<8x256xf32>
    %166 = math.exp %165 : vector<8x256xf32>
    %cst_116 = arith.constant dense<0.000000e+00> : vector<8xf32>
    %167 = vector.multi_reduction <add>, %166, %cst_116 [1] : vector<8x256xf32> to vector<8xf32>
    %168 = vector.shape_cast %167 : vector<8xf32> to vector<8x1xf32>
    %169 = tpu.reciprocal %168 {approx = true} : vector<8x1xf32> -> vector<8x1xf32>
    %170 = vector.broadcast %169 : vector<8x1xf32> to vector<8x256xf32>
    %171 = arith.mulf %166, %170 : vector<8x256xf32>
    %172 = arith.mulf %171, %51 : vector<8x256xf32>
    %c1_117 = arith.constant 1 : index
    %c0_118 = arith.constant 0 : index
    %c0_119 = arith.constant 0 : index
    %173 = vector.load %arg19[%c1_117, %c0_118, %c0_119] : memref<3x256x256xf32, #tpu.memory_space<vmem>>, vector<1x256x256xf32>
    %174 = vector.shape_cast %173 : vector<1x256x256xf32> to vector<256x256xf32>
    %cst_120 = arith.constant dense<0.000000e+00> : vector<8x256xf32>
    %175 = tpu.matmul %172, %174, %cst_120 {dimension_numbers = #tpu.dot_dimension_numbers<[1], [0], [0], [1], [0, 0, 1, 1], [], []>} : vector<8x256xf32>, vector<256x256xf32>, vector<8x256xf32> -> vector<8x256xf32>
    %c1_121 = arith.constant 1 : index
    %c0_122 = arith.constant 0 : index
    %c0_123 = arith.constant 0 : index
    %176 = vector.load %arg20[%c1_121, %c0_122, %c0_123] : memref<3x1x256xf32, #tpu.memory_space<vmem>>, vector<1x1x256xf32>
    %177 = vector.shape_cast %176 : vector<1x1x256xf32> to vector<1x256xf32>
    %178 = vector.broadcast %177 : vector<1x256xf32> to vector<8x256xf32>
    %179 = arith.addf %175, %178 : vector<8x256xf32>
    %c1_124 = arith.constant 1 : index
    %c0_125 = arith.constant 0 : index
    %c0_126 = arith.constant 0 : index
    %180 = vector.load %arg21[%c1_124, %c0_125, %c0_126] : memref<3x256x256xf32, #tpu.memory_space<vmem>>, vector<1x256x256xf32>
    %181 = vector.shape_cast %180 : vector<1x256x256xf32> to vector<256x256xf32>
    %cst_127 = arith.constant dense<0.000000e+00> : vector<8x256xf32>
    %182 = tpu.matmul %179, %181, %cst_127 {dimension_numbers = #tpu.dot_dimension_numbers<[1], [0], [0], [1], [0, 0, 1, 1], [], []>} : vector<8x256xf32>, vector<256x256xf32>, vector<8x256xf32> -> vector<8x256xf32>
    %c1_128 = arith.constant 1 : index
    %c0_129 = arith.constant 0 : index
    %c0_130 = arith.constant 0 : index
    %183 = vector.load %arg22[%c1_128, %c0_129, %c0_130] : memref<3x1x256xf32, #tpu.memory_space<vmem>>, vector<1x1x256xf32>
    %184 = vector.shape_cast %183 : vector<1x1x256xf32> to vector<1x256xf32>
    %185 = vector.broadcast %184 : vector<1x256xf32> to vector<8x256xf32>
    %186 = arith.addf %182, %185 : vector<8x256xf32>
    %187 = arith.addf %172, %186 : vector<8x256xf32>
    %c1_131 = arith.constant 1 : index
    %c0_132 = arith.constant 0 : index
    %c0_133 = arith.constant 0 : index
    %188 = vector.load %arg27[%c1_131, %c0_132, %c0_133] : memref<3x1x256xf32, #tpu.memory_space<vmem>>, vector<1x1x256xf32>
    %189 = vector.shape_cast %188 : vector<1x1x256xf32> to vector<1x256xf32>
    %c1_134 = arith.constant 1 : index
    %c0_135 = arith.constant 0 : index
    %c0_136 = arith.constant 0 : index
    %190 = vector.load %arg28[%c1_134, %c0_135, %c0_136] : memref<3x1x256xf32, #tpu.memory_space<vmem>>, vector<1x1x256xf32>
    %191 = vector.shape_cast %190 : vector<1x1x256xf32> to vector<1x256xf32>
    %cst_137 = arith.constant dense<0.000000e+00> : vector<8xf32>
    %192 = vector.multi_reduction <add>, %187, %cst_137 [1] : vector<8x256xf32> to vector<8xf32>
    %193 = vector.shape_cast %192 : vector<8xf32> to vector<8x1xf32>
    %cst_138 = arith.constant 2.560000e+02 : f32
    %194 = vector.broadcast %cst_138 : f32 to vector<8x1xf32>
    %195 = arith.divf %193, %194 : vector<8x1xf32>
    %196 = vector.broadcast %195 : vector<8x1xf32> to vector<8x256xf32>
    %197 = arith.subf %187, %196 : vector<8x256xf32>
    %198 = arith.mulf %197, %197 : vector<8x256xf32>
    %cst_139 = arith.constant dense<0.000000e+00> : vector<8xf32>
    %199 = vector.multi_reduction <add>, %198, %cst_139 [1] : vector<8x256xf32> to vector<8xf32>
    %200 = vector.shape_cast %199 : vector<8xf32> to vector<8x1xf32>
    %cst_140 = arith.constant 2.560000e+02 : f32
    %201 = vector.broadcast %cst_140 : f32 to vector<8x1xf32>
    %202 = arith.divf %200, %201 : vector<8x1xf32>
    %203 = vector.broadcast %195 : vector<8x1xf32> to vector<8x256xf32>
    %204 = arith.subf %187, %203 : vector<8x256xf32>
    %cst_141 = arith.constant 9.99999974E-6 : f32
    %205 = vector.broadcast %cst_141 : f32 to vector<8x1xf32>
    %206 = arith.addf %202, %205 : vector<8x1xf32>
    %207 = math.rsqrt %206 : vector<8x1xf32>
    %208 = vector.broadcast %207 : vector<8x1xf32> to vector<8x256xf32>
    %209 = arith.mulf %204, %208 : vector<8x256xf32>
    %210 = vector.broadcast %189 : vector<1x256xf32> to vector<8x256xf32>
    %211 = arith.mulf %209, %210 : vector<8x256xf32>
    %212 = vector.broadcast %191 : vector<1x256xf32> to vector<8x256xf32>
    %213 = arith.addf %211, %212 : vector<8x256xf32>
    %c1_142 = arith.constant 1 : index
    %c0_143 = arith.constant 0 : index
    %c0_144 = arith.constant 0 : index
    %214 = vector.load %arg23[%c1_142, %c0_143, %c0_144] : memref<3x256x256xf32, #tpu.memory_space<vmem>>, vector<1x256x256xf32>
    %215 = vector.shape_cast %214 : vector<1x256x256xf32> to vector<256x256xf32>
    %cst_145 = arith.constant dense<0.000000e+00> : vector<8x256xf32>
    %216 = tpu.matmul %213, %215, %cst_145 {dimension_numbers = #tpu.dot_dimension_numbers<[1], [0], [0], [1], [0, 0, 1, 1], [], []>} : vector<8x256xf32>, vector<256x256xf32>, vector<8x256xf32> -> vector<8x256xf32>
    %c1_146 = arith.constant 1 : index
    %c0_147 = arith.constant 0 : index
    %c0_148 = arith.constant 0 : index
    %217 = vector.load %arg24[%c1_146, %c0_147, %c0_148] : memref<3x1x256xf32, #tpu.memory_space<vmem>>, vector<1x1x256xf32>
    %218 = vector.shape_cast %217 : vector<1x1x256xf32> to vector<1x256xf32>
    %219 = vector.broadcast %218 : vector<1x256xf32> to vector<8x256xf32>
    %220 = arith.addf %216, %219 : vector<8x256xf32>
    %cst_149 = arith.constant 0.000000e+00 : f32
    %221 = vector.broadcast %cst_149 : f32 to vector<8x256xf32>
    %222 = arith.maximumf %220, %221 : vector<8x256xf32>
    %c1_150 = arith.constant 1 : index
    %c0_151 = arith.constant 0 : index
    %c0_152 = arith.constant 0 : index
    %223 = vector.load %arg25[%c1_150, %c0_151, %c0_152] : memref<3x256x256xf32, #tpu.memory_space<vmem>>, vector<1x256x256xf32>
    %224 = vector.shape_cast %223 : vector<1x256x256xf32> to vector<256x256xf32>
    %cst_153 = arith.constant dense<0.000000e+00> : vector<8x256xf32>
    %225 = tpu.matmul %222, %224, %cst_153 {dimension_numbers = #tpu.dot_dimension_numbers<[1], [0], [0], [1], [0, 0, 1, 1], [], []>} : vector<8x256xf32>, vector<256x256xf32>, vector<8x256xf32> -> vector<8x256xf32>
    %c1_154 = arith.constant 1 : index
    %c0_155 = arith.constant 0 : index
    %c0_156 = arith.constant 0 : index
    %226 = vector.load %arg26[%c1_154, %c0_155, %c0_156] : memref<3x1x256xf32, #tpu.memory_space<vmem>>, vector<1x1x256xf32>
    %227 = vector.shape_cast %226 : vector<1x1x256xf32> to vector<1x256xf32>
    %228 = vector.broadcast %227 : vector<1x256xf32> to vector<8x256xf32>
    %229 = arith.addf %225, %228 : vector<8x256xf32>
    %230 = arith.addf %213, %229 : vector<8x256xf32>
    %c1_157 = arith.constant 1 : index
    %c0_158 = arith.constant 0 : index
    %c0_159 = arith.constant 0 : index
    %231 = vector.load %arg29[%c1_157, %c0_158, %c0_159] : memref<3x1x256xf32, #tpu.memory_space<vmem>>, vector<1x1x256xf32>
    %232 = vector.shape_cast %231 : vector<1x1x256xf32> to vector<1x256xf32>
    %c1_160 = arith.constant 1 : index
    %c0_161 = arith.constant 0 : index
    %c0_162 = arith.constant 0 : index
    %233 = vector.load %arg30[%c1_160, %c0_161, %c0_162] : memref<3x1x256xf32, #tpu.memory_space<vmem>>, vector<1x1x256xf32>
    %234 = vector.shape_cast %233 : vector<1x1x256xf32> to vector<1x256xf32>
    %cst_163 = arith.constant dense<0.000000e+00> : vector<8xf32>
    %235 = vector.multi_reduction <add>, %230, %cst_163 [1] : vector<8x256xf32> to vector<8xf32>
    %236 = vector.shape_cast %235 : vector<8xf32> to vector<8x1xf32>
    %cst_164 = arith.constant 2.560000e+02 : f32
    %237 = vector.broadcast %cst_164 : f32 to vector<8x1xf32>
    %238 = arith.divf %236, %237 : vector<8x1xf32>
    %239 = vector.broadcast %238 : vector<8x1xf32> to vector<8x256xf32>
    %240 = arith.subf %230, %239 : vector<8x256xf32>
    %241 = arith.mulf %240, %240 : vector<8x256xf32>
    %cst_165 = arith.constant dense<0.000000e+00> : vector<8xf32>
    %242 = vector.multi_reduction <add>, %241, %cst_165 [1] : vector<8x256xf32> to vector<8xf32>
    %243 = vector.shape_cast %242 : vector<8xf32> to vector<8x1xf32>
    %cst_166 = arith.constant 2.560000e+02 : f32
    %244 = vector.broadcast %cst_166 : f32 to vector<8x1xf32>
    %245 = arith.divf %243, %244 : vector<8x1xf32>
    %246 = vector.broadcast %238 : vector<8x1xf32> to vector<8x256xf32>
    %247 = arith.subf %230, %246 : vector<8x256xf32>
    %cst_167 = arith.constant 9.99999974E-6 : f32
    %248 = vector.broadcast %cst_167 : f32 to vector<8x1xf32>
    %249 = arith.addf %245, %248 : vector<8x1xf32>
    %250 = math.rsqrt %249 : vector<8x1xf32>
    %251 = vector.broadcast %250 : vector<8x1xf32> to vector<8x256xf32>
    %252 = arith.mulf %247, %251 : vector<8x256xf32>
    %253 = vector.broadcast %232 : vector<1x256xf32> to vector<8x256xf32>
    %254 = arith.mulf %252, %253 : vector<8x256xf32>
    %255 = vector.broadcast %234 : vector<1x256xf32> to vector<8x256xf32>
    %256 = arith.addf %254, %255 : vector<8x256xf32>
    %c2 = arith.constant 2 : index
    %c0_168 = arith.constant 0 : index
    %c0_169 = arith.constant 0 : index
    %257 = vector.load %arg17[%c2, %c0_168, %c0_169] : memref<3x256x256xf32, #tpu.memory_space<vmem>>, vector<1x256x256xf32>
    %258 = vector.shape_cast %257 : vector<1x256x256xf32> to vector<256x256xf32>
    %cst_170 = arith.constant dense<0.000000e+00> : vector<8x256xf32>
    %259 = tpu.matmul %52, %258, %cst_170 {dimension_numbers = #tpu.dot_dimension_numbers<[1], [0], [0], [1], [0, 0, 1, 1], [], []>} : vector<8x256xf32>, vector<256x256xf32>, vector<8x256xf32> -> vector<8x256xf32>
    %c2_171 = arith.constant 2 : index
    %c0_172 = arith.constant 0 : index
    %c0_173 = arith.constant 0 : index
    %260 = vector.load %arg18[%c2_171, %c0_172, %c0_173] : memref<3x1x256xf32, #tpu.memory_space<vmem>>, vector<1x1x256xf32>
    %261 = vector.shape_cast %260 : vector<1x1x256xf32> to vector<1x256xf32>
    %262 = vector.broadcast %261 : vector<1x256xf32> to vector<8x256xf32>
    %263 = arith.addf %259, %262 : vector<8x256xf32>
    %cst_174 = arith.constant dense<0xFF800000> : vector<8xf32>
    %264 = vector.multi_reduction <maximumf>, %263, %cst_174 [1] : vector<8x256xf32> to vector<8xf32>
    %265 = vector.shape_cast %264 : vector<8xf32> to vector<8x1xf32>
    %266 = vector.broadcast %265 : vector<8x1xf32> to vector<8x256xf32>
    %267 = arith.subf %263, %266 : vector<8x256xf32>
    %268 = math.exp %267 : vector<8x256xf32>
    %cst_175 = arith.constant dense<0.000000e+00> : vector<8xf32>
    %269 = vector.multi_reduction <add>, %268, %cst_175 [1] : vector<8x256xf32> to vector<8xf32>
    %270 = vector.shape_cast %269 : vector<8xf32> to vector<8x1xf32>
    %271 = tpu.reciprocal %270 {approx = true} : vector<8x1xf32> -> vector<8x1xf32>
    %272 = vector.broadcast %271 : vector<8x1xf32> to vector<8x256xf32>
    %273 = arith.mulf %268, %272 : vector<8x256xf32>
    %274 = arith.mulf %273, %52 : vector<8x256xf32>
    %c2_176 = arith.constant 2 : index
    %c0_177 = arith.constant 0 : index
    %c0_178 = arith.constant 0 : index
    %275 = vector.load %arg19[%c2_176, %c0_177, %c0_178] : memref<3x256x256xf32, #tpu.memory_space<vmem>>, vector<1x256x256xf32>
    %276 = vector.shape_cast %275 : vector<1x256x256xf32> to vector<256x256xf32>
    %cst_179 = arith.constant dense<0.000000e+00> : vector<8x256xf32>
    %277 = tpu.matmul %274, %276, %cst_179 {dimension_numbers = #tpu.dot_dimension_numbers<[1], [0], [0], [1], [0, 0, 1, 1], [], []>} : vector<8x256xf32>, vector<256x256xf32>, vector<8x256xf32> -> vector<8x256xf32>
    %c2_180 = arith.constant 2 : index
    %c0_181 = arith.constant 0 : index
    %c0_182 = arith.constant 0 : index
    %278 = vector.load %arg20[%c2_180, %c0_181, %c0_182] : memref<3x1x256xf32, #tpu.memory_space<vmem>>, vector<1x1x256xf32>
    %279 = vector.shape_cast %278 : vector<1x1x256xf32> to vector<1x256xf32>
    %280 = vector.broadcast %279 : vector<1x256xf32> to vector<8x256xf32>
    %281 = arith.addf %277, %280 : vector<8x256xf32>
    %c2_183 = arith.constant 2 : index
    %c0_184 = arith.constant 0 : index
    %c0_185 = arith.constant 0 : index
    %282 = vector.load %arg21[%c2_183, %c0_184, %c0_185] : memref<3x256x256xf32, #tpu.memory_space<vmem>>, vector<1x256x256xf32>
    %283 = vector.shape_cast %282 : vector<1x256x256xf32> to vector<256x256xf32>
    %cst_186 = arith.constant dense<0.000000e+00> : vector<8x256xf32>
    %284 = tpu.matmul %281, %283, %cst_186 {dimension_numbers = #tpu.dot_dimension_numbers<[1], [0], [0], [1], [0, 0, 1, 1], [], []>} : vector<8x256xf32>, vector<256x256xf32>, vector<8x256xf32> -> vector<8x256xf32>
    %c2_187 = arith.constant 2 : index
    %c0_188 = arith.constant 0 : index
    %c0_189 = arith.constant 0 : index
    %285 = vector.load %arg22[%c2_187, %c0_188, %c0_189] : memref<3x1x256xf32, #tpu.memory_space<vmem>>, vector<1x1x256xf32>
    %286 = vector.shape_cast %285 : vector<1x1x256xf32> to vector<1x256xf32>
    %287 = vector.broadcast %286 : vector<1x256xf32> to vector<8x256xf32>
    %288 = arith.addf %284, %287 : vector<8x256xf32>
    %289 = arith.addf %274, %288 : vector<8x256xf32>
    %c2_190 = arith.constant 2 : index
    %c0_191 = arith.constant 0 : index
    %c0_192 = arith.constant 0 : index
    %290 = vector.load %arg27[%c2_190, %c0_191, %c0_192] : memref<3x1x256xf32, #tpu.memory_space<vmem>>, vector<1x1x256xf32>
    %291 = vector.shape_cast %290 : vector<1x1x256xf32> to vector<1x256xf32>
    %c2_193 = arith.constant 2 : index
    %c0_194 = arith.constant 0 : index
    %c0_195 = arith.constant 0 : index
    %292 = vector.load %arg28[%c2_193, %c0_194, %c0_195] : memref<3x1x256xf32, #tpu.memory_space<vmem>>, vector<1x1x256xf32>
    %293 = vector.shape_cast %292 : vector<1x1x256xf32> to vector<1x256xf32>
    %cst_196 = arith.constant dense<0.000000e+00> : vector<8xf32>
    %294 = vector.multi_reduction <add>, %289, %cst_196 [1] : vector<8x256xf32> to vector<8xf32>
    %295 = vector.shape_cast %294 : vector<8xf32> to vector<8x1xf32>
    %cst_197 = arith.constant 2.560000e+02 : f32
    %296 = vector.broadcast %cst_197 : f32 to vector<8x1xf32>
    %297 = arith.divf %295, %296 : vector<8x1xf32>
    %298 = vector.broadcast %297 : vector<8x1xf32> to vector<8x256xf32>
    %299 = arith.subf %289, %298 : vector<8x256xf32>
    %300 = arith.mulf %299, %299 : vector<8x256xf32>
    %cst_198 = arith.constant dense<0.000000e+00> : vector<8xf32>
    %301 = vector.multi_reduction <add>, %300, %cst_198 [1] : vector<8x256xf32> to vector<8xf32>
    %302 = vector.shape_cast %301 : vector<8xf32> to vector<8x1xf32>
    %cst_199 = arith.constant 2.560000e+02 : f32
    %303 = vector.broadcast %cst_199 : f32 to vector<8x1xf32>
    %304 = arith.divf %302, %303 : vector<8x1xf32>
    %305 = vector.broadcast %297 : vector<8x1xf32> to vector<8x256xf32>
    %306 = arith.subf %289, %305 : vector<8x256xf32>
    %cst_200 = arith.constant 9.99999974E-6 : f32
    %307 = vector.broadcast %cst_200 : f32 to vector<8x1xf32>
    %308 = arith.addf %304, %307 : vector<8x1xf32>
    %309 = math.rsqrt %308 : vector<8x1xf32>
    %310 = vector.broadcast %309 : vector<8x1xf32> to vector<8x256xf32>
    %311 = arith.mulf %306, %310 : vector<8x256xf32>
    %312 = vector.broadcast %291 : vector<1x256xf32> to vector<8x256xf32>
    %313 = arith.mulf %311, %312 : vector<8x256xf32>
    %314 = vector.broadcast %293 : vector<1x256xf32> to vector<8x256xf32>
    %315 = arith.addf %313, %314 : vector<8x256xf32>
    %c2_201 = arith.constant 2 : index
    %c0_202 = arith.constant 0 : index
    %c0_203 = arith.constant 0 : index
    %316 = vector.load %arg23[%c2_201, %c0_202, %c0_203] : memref<3x256x256xf32, #tpu.memory_space<vmem>>, vector<1x256x256xf32>
    %317 = vector.shape_cast %316 : vector<1x256x256xf32> to vector<256x256xf32>
    %cst_204 = arith.constant dense<0.000000e+00> : vector<8x256xf32>
    %318 = tpu.matmul %315, %317, %cst_204 {dimension_numbers = #tpu.dot_dimension_numbers<[1], [0], [0], [1], [0, 0, 1, 1], [], []>} : vector<8x256xf32>, vector<256x256xf32>, vector<8x256xf32> -> vector<8x256xf32>
    %c2_205 = arith.constant 2 : index
    %c0_206 = arith.constant 0 : index
    %c0_207 = arith.constant 0 : index
    %319 = vector.load %arg24[%c2_205, %c0_206, %c0_207] : memref<3x1x256xf32, #tpu.memory_space<vmem>>, vector<1x1x256xf32>
    %320 = vector.shape_cast %319 : vector<1x1x256xf32> to vector<1x256xf32>
    %321 = vector.broadcast %320 : vector<1x256xf32> to vector<8x256xf32>
    %322 = arith.addf %318, %321 : vector<8x256xf32>
    %cst_208 = arith.constant 0.000000e+00 : f32
    %323 = vector.broadcast %cst_208 : f32 to vector<8x256xf32>
    %324 = arith.maximumf %322, %323 : vector<8x256xf32>
    %c2_209 = arith.constant 2 : index
    %c0_210 = arith.constant 0 : index
    %c0_211 = arith.constant 0 : index
    %325 = vector.load %arg25[%c2_209, %c0_210, %c0_211] : memref<3x256x256xf32, #tpu.memory_space<vmem>>, vector<1x256x256xf32>
    %326 = vector.shape_cast %325 : vector<1x256x256xf32> to vector<256x256xf32>
    %cst_212 = arith.constant dense<0.000000e+00> : vector<8x256xf32>
    %327 = tpu.matmul %324, %326, %cst_212 {dimension_numbers = #tpu.dot_dimension_numbers<[1], [0], [0], [1], [0, 0, 1, 1], [], []>} : vector<8x256xf32>, vector<256x256xf32>, vector<8x256xf32> -> vector<8x256xf32>
    %c2_213 = arith.constant 2 : index
    %c0_214 = arith.constant 0 : index
    %c0_215 = arith.constant 0 : index
    %328 = vector.load %arg26[%c2_213, %c0_214, %c0_215] : memref<3x1x256xf32, #tpu.memory_space<vmem>>, vector<1x1x256xf32>
    %329 = vector.shape_cast %328 : vector<1x1x256xf32> to vector<1x256xf32>
    %330 = vector.broadcast %329 : vector<1x256xf32> to vector<8x256xf32>
    %331 = arith.addf %327, %330 : vector<8x256xf32>
    %332 = arith.addf %315, %331 : vector<8x256xf32>
    %c2_216 = arith.constant 2 : index
    %c0_217 = arith.constant 0 : index
    %c0_218 = arith.constant 0 : index
    %333 = vector.load %arg29[%c2_216, %c0_217, %c0_218] : memref<3x1x256xf32, #tpu.memory_space<vmem>>, vector<1x1x256xf32>
    %334 = vector.shape_cast %333 : vector<1x1x256xf32> to vector<1x256xf32>
    %c2_219 = arith.constant 2 : index
    %c0_220 = arith.constant 0 : index
    %c0_221 = arith.constant 0 : index
    %335 = vector.load %arg30[%c2_219, %c0_220, %c0_221] : memref<3x1x256xf32, #tpu.memory_space<vmem>>, vector<1x1x256xf32>
    %336 = vector.shape_cast %335 : vector<1x1x256xf32> to vector<1x256xf32>
    %cst_222 = arith.constant dense<0.000000e+00> : vector<8xf32>
    %337 = vector.multi_reduction <add>, %332, %cst_222 [1] : vector<8x256xf32> to vector<8xf32>
    %338 = vector.shape_cast %337 : vector<8xf32> to vector<8x1xf32>
    %cst_223 = arith.constant 2.560000e+02 : f32
    %339 = vector.broadcast %cst_223 : f32 to vector<8x1xf32>
    %340 = arith.divf %338, %339 : vector<8x1xf32>
    %341 = vector.broadcast %340 : vector<8x1xf32> to vector<8x256xf32>
    %342 = arith.subf %332, %341 : vector<8x256xf32>
    %343 = arith.mulf %342, %342 : vector<8x256xf32>
    %cst_224 = arith.constant dense<0.000000e+00> : vector<8xf32>
    %344 = vector.multi_reduction <add>, %343, %cst_224 [1] : vector<8x256xf32> to vector<8xf32>
    %345 = vector.shape_cast %344 : vector<8xf32> to vector<8x1xf32>
    %cst_225 = arith.constant 2.560000e+02 : f32
    %346 = vector.broadcast %cst_225 : f32 to vector<8x1xf32>
    %347 = arith.divf %345, %346 : vector<8x1xf32>
    %348 = vector.broadcast %340 : vector<8x1xf32> to vector<8x256xf32>
    %349 = arith.subf %332, %348 : vector<8x256xf32>
    %cst_226 = arith.constant 9.99999974E-6 : f32
    %350 = vector.broadcast %cst_226 : f32 to vector<8x1xf32>
    %351 = arith.addf %347, %350 : vector<8x1xf32>
    %352 = math.rsqrt %351 : vector<8x1xf32>
    %353 = vector.broadcast %352 : vector<8x1xf32> to vector<8x256xf32>
    %354 = arith.mulf %349, %353 : vector<8x256xf32>
    %355 = vector.broadcast %334 : vector<1x256xf32> to vector<8x256xf32>
    %356 = arith.mulf %354, %355 : vector<8x256xf32>
    %357 = vector.broadcast %336 : vector<1x256xf32> to vector<8x256xf32>
    %358 = arith.addf %356, %357 : vector<8x256xf32>
    %c0_227 = arith.constant 0 : index
    %359 = memref.load %arg0[%c0_227] : memref<2xf32, #tpu.memory_space<smem>>
    %c1_228 = arith.constant 1 : index
    %360 = memref.load %arg0[%c1_228] : memref<2xf32, #tpu.memory_space<smem>>
    %361 = vector.broadcast %359 : f32 to vector<8x256xf32>
    %362 = arith.mulf %361, %154 : vector<8x256xf32>
    %363 = vector.broadcast %360 : f32 to vector<8x256xf32>
    %364 = arith.mulf %363, %256 : vector<8x256xf32>
    %365 = arith.addf %362, %364 : vector<8x256xf32>
    %cst_229 = arith.constant 1.000000e+00 : f32
    %366 = arith.subf %cst_229, %359 : f32
    %367 = arith.subf %366, %360 : f32
    %368 = vector.broadcast %367 : f32 to vector<8x256xf32>
    %369 = arith.mulf %368, %358 : vector<8x256xf32>
    %370 = arith.addf %365, %369 : vector<8x256xf32>
    %c0_230 = arith.constant 0 : index
    %c0_231 = arith.constant 0 : index
    %371 = vector.load %arg31[%c0_230, %c0_231] : memref<256x256xf32, #tpu.memory_space<vmem>>, vector<256x256xf32>
    %cst_232 = arith.constant dense<0.000000e+00> : vector<8x256xf32>
    %372 = tpu.matmul %370, %371, %cst_232 {dimension_numbers = #tpu.dot_dimension_numbers<[1], [0], [0], [1], [0, 0, 1, 1], [], []>} : vector<8x256xf32>, vector<256x256xf32>, vector<8x256xf32> -> vector<8x256xf32>
    %c0_233 = arith.constant 0 : index
    %c0_234 = arith.constant 0 : index
    %373 = vector.load %arg32[%c0_233, %c0_234] : memref<1x256xf32, #tpu.memory_space<vmem>>, vector<1x256xf32>
    %374 = vector.broadcast %373 : vector<1x256xf32> to vector<8x256xf32>
    %375 = arith.addf %372, %374 : vector<8x256xf32>
    %cst_235 = arith.constant 0.000000e+00 : f32
    %376 = vector.broadcast %cst_235 : f32 to vector<8x256xf32>
    %377 = arith.maximumf %375, %376 : vector<8x256xf32>
    %c0_236 = arith.constant 0 : index
    %c0_237 = arith.constant 0 : index
    %378 = vector.load %arg33[%c0_236, %c0_237] : memref<256x256xf32, #tpu.memory_space<vmem>>, vector<256x256xf32>
    %cst_238 = arith.constant dense<0.000000e+00> : vector<8x256xf32>
    %379 = tpu.matmul %377, %378, %cst_238 {dimension_numbers = #tpu.dot_dimension_numbers<[1], [0], [0], [1], [0, 0, 1, 1], [], []>} : vector<8x256xf32>, vector<256x256xf32>, vector<8x256xf32> -> vector<8x256xf32>
    %c0_239 = arith.constant 0 : index
    %c0_240 = arith.constant 0 : index
    %380 = vector.load %arg34[%c0_239, %c0_240] : memref<1x256xf32, #tpu.memory_space<vmem>>, vector<1x256xf32>
    %381 = vector.broadcast %380 : vector<1x256xf32> to vector<8x256xf32>
    %382 = arith.addf %379, %381 : vector<8x256xf32>
    %cst_241 = arith.constant 0.000000e+00 : f32
    %383 = vector.broadcast %cst_241 : f32 to vector<8x256xf32>
    %384 = arith.maximumf %382, %383 : vector<8x256xf32>
    %c0_242 = arith.constant 0 : index
    %c0_243 = arith.constant 0 : index
    %385 = vector.load %arg35[%c0_242, %c0_243] : memref<256x2xf32, #tpu.memory_space<vmem>>, vector<256x2xf32>
    %cst_244 = arith.constant dense<0.000000e+00> : vector<8x2xf32>
    %386 = tpu.matmul %384, %385, %cst_244 {dimension_numbers = #tpu.dot_dimension_numbers<[1], [0], [0], [1], [0, 0, 1, 1], [], []>} : vector<8x256xf32>, vector<256x2xf32>, vector<8x2xf32> -> vector<8x2xf32>
    %c0_245 = arith.constant 0 : index
    %c0_246 = arith.constant 0 : index
    %387 = vector.load %arg36[%c0_245, %c0_246] : memref<1x2xf32, #tpu.memory_space<vmem>>, vector<1x2xf32>
    %388 = vector.broadcast %387 : vector<1x2xf32> to vector<8x2xf32>
    %389 = arith.addf %386, %388 : vector<8x2xf32>
    %c0_247 = arith.constant 0 : index
    %c0_248 = arith.constant 0 : index
    %390 = vector.load %arg37[%c0_247, %c0_248] : memref<8x2xf32, #tpu.memory_space<vmem>>, vector<8x2xf32>
    tpu.vector_store %arg37[%c0_247, %c0_248], %389 {strides = array<i32>} : memref<8x2xf32, #tpu.memory_space<vmem>>, vector<8x2xf32>,
    return
  }
}

</mosaic_0001>

<llo_original>
// kernel: forward.1
$region0: #{forward.1}
  #allocation0 [shape = 'u32[]', space=smem, size = 0x4, offset = 0x4, fixed_abs, tag = 'smem constant byte address 0x4 - core index']
  #allocation1 [shape = 'u32[144,128]{1,0:T(1,128)}', space=vmem, size = 0x12000, scoped, tag = 'internal scratch']
  %s0 = inlined_call_operand.smem [shape: u32[42], index: -1, kind: input, shape index: {}]
  %s1 = sld [smem:[%s0]]
  %s2 = scalar_lea.smem %s0, 1
  %s3 = sld [smem:[%s2]]
  %s4 = scalar_lea.smem %s0, 2
  %s5 = sld [smem:[%s4]]
  %s6 = scalar_lea.smem %s0, 3
  %s7 = sld [smem:[%s6]]
  %s8 = scalar_lea.smem %s0, 4
  %s9 = sld [smem:[%s8]]
  %s10 = scalar_lea.smem %s0, 5
  %s11 = sld [smem:[%s10]]
  %s12 = scalar_lea.smem %s0, 6
  %s13 = sld [smem:[%s12]]
  %s14 = scalar_lea.smem %s0, 7
  %s15 = sld [smem:[%s14]]
  %s16 = scalar_lea.smem %s0, 8
  %s17 = sld [smem:[%s16]]
  %s18 = scalar_lea.smem %s0, 9
  %s19 = sld [smem:[%s18]]
  %s20 = scalar_lea.smem %s0, 10
  %s21 = sld [smem:[%s20]]
  %s22 = scalar_lea.smem %s0, 11
  %s23 = sld [smem:[%s22]]
  %s24 = scalar_lea.smem %s0, 12
  %s25 = sld [smem:[%s24]]
  %s26 = scalar_lea.smem %s0, 13
  %s27 = sld [smem:[%s26]]
  %s28 = scalar_lea.smem %s0, 14
  %s29 = sld [smem:[%s28]]
  %s30 = scalar_lea.smem %s0, 15
  %s31 = sld [smem:[%s30]]
  %s32 = scalar_lea.smem %s0, 16
  %s33 = sld [smem:[%s32]]
  %s34 = scalar_lea.smem %s0, 17
  %s35 = sld [smem:[%s34]]
  %s36 = scalar_lea.smem %s0, 18
  %s37 = sld [smem:[%s36]]
  %s38 = scalar_lea.smem %s0, 19
  %s39 = sld [smem:[%s38]]
  %s40 = scalar_lea.smem %s0, 20
  %s41 = sld [smem:[%s40]]
  %s42 = scalar_lea.smem %s0, 21
  %s43 = sld [smem:[%s42]]
  %s44 = scalar_lea.smem %s0, 22
  %s45 = sld [smem:[%s44]]
  %s46 = scalar_lea.smem %s0, 23
  %s47 = sld [smem:[%s46]]
  %s48 = scalar_lea.smem %s0, 24
  %s49 = sld [smem:[%s48]]
  %s50 = scalar_lea.smem %s0, 25
  %s51 = sld [smem:[%s50]]
  %s52 = scalar_lea.smem %s0, 26
  %s53 = sld [smem:[%s52]]
  %s54 = scalar_lea.smem %s0, 27
  %s55 = sld [smem:[%s54]]
  %s56 = scalar_lea.smem %s0, 28
  %s57 = sld [smem:[%s56]]
  %s58 = scalar_lea.smem %s0, 29
  %s59 = sld [smem:[%s58]]
  %s60 = scalar_lea.smem %s0, 30
  %s61 = sld [smem:[%s60]]
  %s62 = scalar_lea.smem %s0, 31
  %s63 = sld [smem:[%s62]]
  %s64 = scalar_lea.smem %s0, 32
  %s65 = sld [smem:[%s64]]
  %s66 = scalar_lea.smem %s0, 33
  %s67 = sld [smem:[%s66]]
  %s68 = scalar_lea.smem %s0, 34
  %s69 = sld [smem:[%s68]]
  %s70 = scalar_lea.smem %s0, 35
  %s71 = sld [smem:[%s70]]
  %s72 = scalar_lea.smem %s0, 36
  %s73 = sld [smem:[%s72]]
  %s74 = scalar_lea.smem %s0, 37
  %s75 = sld [smem:[%s74]]
  %s76 = scalar_lea.smem %s0, 38
  %s77 = sld [smem:[%s76]]
  %s78 = scalar_lea.smem %s0, 39
  %s79 = sld [smem:[%s78]]
  %s80 = scalar_lea.smem %s0, 40
  %s81 = sld [smem:[%s80]]
  %s82 = scalar_lea.smem %s0, 41
  %s83 = sld [smem:[%s82]]
  %84 = xla_tuple %s75, %s77, %s79, %s81, %s83
  %s85 = sld [smem:[#allocation0]]
  $region266: #{forward.1} parent=0
    _
  %s87 = ssub.s32 1, %s85
  %s88 = scalar_select 0, %s87, %s85
  $region1: #{forward.1} parent=0
    #allocation2 [shape = 'u8[512]{0}', space=smem, size = 0x200, scoped, tag = 'input window, operand 0, single buffered']
    #allocation3 [shape = 's32[1]{0}', space=sflag, size = 0x4, scoped, tag = 'scoped memory for forward.1']
    #allocation4 [shape = 's32[1]{0}', space=sflag, size = 0x4, scoped, tag = 'scoped memory for forward.1']
    #allocation5 [shape = 's32[1]{0}', space=sflag, size = 0x4, scoped, tag = 'scoped memory for forward.1']
    #allocation6 [shape = 'u8[512]{0}', space=vmem, size = 0x400, scoped, tag = 'input window, operand 6, single buffered']
    #allocation7 [shape = 'u8[512]{0}', space=vmem, size = 0x400, scoped, tag = 'input window, operand 8, single buffered']
    #allocation8 [shape = 's32[1]{0}', space=sflag, size = 0x4, scoped, tag = 'scoped memory for forward.1']
    #allocation9 [shape = 'u8[262144]{0}', space=vmem, size = 0x40000, scoped, tag = 'input window, operand 9, single buffered']
    #allocation10 [shape = 'u8[512]{0}', space=vmem, size = 0x400, scoped, tag = 'input window, operand 12, single buffered']
    #allocation11 [shape = 's32[1]{0}', space=sflag, size = 0x4, scoped, tag = 'scoped memory for forward.1']
    #allocation12 [shape = 'u8[131072]{0}', space=vmem, size = 0x20000, scoped, tag = 'input window, operand 13, single buffered']
    #allocation13 [shape = 'u8[512]{0}', space=vmem, size = 0x400, scoped, tag = 'input window, operand 14, single buffered']
    #allocation14 [shape = 's32[1]{0}', space=sflag, size = 0x4, scoped, tag = 'scoped memory for forward.1']
    #allocation15 [shape = 'u8[131072]{0}', space=vmem, size = 0x20000, scoped, tag = 'input window, operand 15, single buffered']
    #allocation16 [shape = 'u8[1024]{0}', space=vmem, size = 0x400, scoped, tag = 'input window, operand 16, single buffered']
    #allocation17 [shape = 's32[1]{0}', space=sflag, size = 0x4, scoped, tag = 'scoped memory for forward.1']
    #allocation18 [shape = 'u8[786432]{0}', space=vmem, size = 0xc0000, scoped, tag = 'input window, operand 17, single buffered']
    #allocation19 [shape = 'u8[786432]{0}', space=vmem, size = 0xc0000, scoped, tag = 'input window, operand 19, single buffered']
    #allocation20 [shape = 's32[1]{0}', space=sflag, size = 0x4, scoped, tag = 'scoped memory for forward.1']
    #allocation21 [shape = 'u8[786432]{0}', space=vmem, size = 0xc0000, scoped, tag = 'input window, operand 21, single buffered']
    #allocation22 [shape = 'u8[786432]{0}', space=vmem, size = 0xc0000, scoped, tag = 'input window, operand 23, single buffered']
    #allocation23 [shape = 's32[1]{0}', space=sflag, size = 0x4, scoped, tag = 'scoped memory for forward.1']
    #allocation24 [shape = 'u8[786432]{0}', space=vmem, size = 0xc0000, scoped, tag = 'input window, operand 25, single buffered']
    #allocation25 [shape = 'u8[262144]{0}', space=vmem, size = 0x40000, scoped, tag = 'input window, operand 31, single buffered']
    #allocation26 [shape = 's32[1]{0}', space=sflag, size = 0x4, scoped, tag = 'scoped memory for forward.1']
    #allocation27 [shape = 'u8[1024]{0}', space=vmem, size = 0x400, scoped, tag = 'input window, operand 32, single buffered']
    #allocation28 [shape = 'u8[262144]{0}', space=vmem, size = 0x40000, scoped, tag = 'input window, operand 33, single buffered']
    #allocation29 [shape = 's32[1]{0}', space=sflag, size = 0x4, scoped, tag = 'scoped memory for forward.1']
    #allocation30 [shape = 'u8[1024]{0}', space=vmem, size = 0x400, scoped, tag = 'input window, operand 34, single buffered']
    #allocation31 [shape = 'u8[512]{0}', space=vmem, size = 0x400, scoped, tag = 'input window, operand 36, single buffered']
    #allocation32 [shape = 's32[1]{0}', space=sflag, size = 0x4, scoped, tag = 'scoped memory for forward.1']
    #allocation33 [shape = 'u8[8192]{0}', space=vmem, size = 0x2000, scoped, tag = 'output window, operand 1, single buffered']
    #allocation34 [shape = 'u8[4096]{0}', space=vmem, size = 0x1000, scoped, tag = 'output window, operand 2, single buffered']
    #allocation35 [shape = 's32[1]{0}', space=sflag, size = 0x4, scoped, tag = 'scoped memory for forward.1']
    #allocation36 [shape = 'u8[4096]{0}', space=vmem, size = 0x1000, scoped, tag = 'output window, operand 3, single buffered']
    #allocation37 [shape = 'u8[8192]{0}', space=vmem, size = 0x2000, scoped, tag = 'output window, operand 4, single buffered']
    #allocation38 [shape = 's32[1]{0}', space=sflag, size = 0x4, scoped, tag = 'scoped memory for forward.1']
    %89 = vsyncpa [#allocation5], 0
    %90 = vsyncpa [#allocation3], 0
    %91 = vsyncpa [#allocation8], 0
    %92 = vsyncpa [#allocation11], 0
    %93 = vsyncpa [#allocation14], 0
    %94 = vsyncpa [#allocation17], 0
    %95 = vsyncpa [#allocation20], 0
    %96 = vsyncpa [#allocation23], 0
    %97 = vsyncpa [#allocation26], 0
    %98 = vsyncpa [#allocation29], 0
    %99 = vsyncpa [#allocation32], 0
    %100 = vsyncpa [#allocation4], 0
    %101 = vsyncpa [#allocation35], 0
    %102 = vsyncpa [#allocation38], 0
    // Predicated region
    $region2: #{forward.1} parent=1 // pred_check
      _
    $region3: #{forward.1} parent=1 // pred_check_branch
      %104 = sbr.rel (0) target = $region5
    $region4: #{forward.1} parent=1 // pred_region
      %s106 = ssub.s32 16, 16
      %107 = vsyncadd [#allocation5], %s106
      %s109 = sshll.u32 %s1, 4
      %s110 = int_to_ptr.vmem [resolvable:$true] %s109
      %112 = dma.vmem_to_smem %s110, 16, [#allocation2], [#allocation5]
    $region5: #{forward.1} parent=1 // pred_fallthru
      _
    // Predicated region
    $region6: #{forward.1} parent=1 // pred_check
      _
    $region7: #{forward.1} parent=1 // pred_check_branch
      %114 = sbr.rel (0) target = $region9
    $region8: #{forward.1} parent=1 // pred_region
      _
    $region9: #{forward.1} parent=1 // pred_fallthru
      _
    // Predicated region
    $region10: #{forward.1} parent=1 // pred_check
      _
    $region11: #{forward.1} parent=1 // pred_check_branch
      %116 = sbr.rel (0) target = $region13
    $region12: #{forward.1} parent=1 // pred_region
      _
    $region13: #{forward.1} parent=1 // pred_fallthru
      _
    // Predicated region
    $region14: #{forward.1} parent=1 // pred_check
      _
    $region15: #{forward.1} parent=1 // pred_check_branch
      %118 = sbr.rel (0) target = $region17
    $region16: #{forward.1} parent=1 // pred_region
      _
    $region17: #{forward.1} parent=1 // pred_fallthru
      _
    // Predicated region
    $region18: #{forward.1} parent=1 // pred_check
      _
    $region19: #{forward.1} parent=1 // pred_check_branch
      %120 = sbr.rel (0) target = $region21
    $region20: #{forward.1} parent=1 // pred_region
      _
    $region21: #{forward.1} parent=1 // pred_fallthru
      _
    // Predicated region
    $region22: #{forward.1} parent=1 // pred_check
      _
    $region23: #{forward.1} parent=1 // pred_check_branch
      %122 = sbr.rel (0) target = $region25
    $region24: #{forward.1} parent=1 // pred_region
      _
    $region25: #{forward.1} parent=1 // pred_fallthru
      _
    // Predicated region
    $region26: #{forward.1} parent=1 // pred_check
      _
    $region27: #{forward.1} parent=1 // pred_check_branch
      %124 = sbr.rel (0) target = $region29
    $region28: #{forward.1} parent=1 // pred_region
      %s126 = ssub.s32 16, 16
      %127 = vsyncadd [#allocation3], %s126
      %s129 = sshll.u32 [#allocation6], 4
      %s130 = int_to_ptr.vmem [resolvable:$true] %s129
      %132 = dma.hbm_to_vmem [thread:$0]  %s13, 16, %s130, [#allocation3]
    $region29: #{forward.1} parent=1 // pred_fallthru
      _
    // Predicated region
    $region30: #{forward.1} parent=1 // pred_check
      _
    $region31: #{forward.1} parent=1 // pred_check_branch
      %134 = sbr.rel (0) target = $region33
    $region32: #{forward.1} parent=1 // pred_region
      _
    $region33: #{forward.1} parent=1 // pred_fallthru
      _
    // Predicated region
    $region34: #{forward.1} parent=1 // pred_check
      _
    $region35: #{forward.1} parent=1 // pred_check_branch
      %136 = sbr.rel (0) target = $region37
    $region36: #{forward.1} parent=1 // pred_region
      %s138 = ssub.s32 16, 16
      %139 = vsyncadd [#allocation8], %s138
      %s141 = sshll.u32 [#allocation7], 4
      %s142 = int_to_ptr.vmem [resolvable:$true] %s141
      %144 = dma.hbm_to_vmem [thread:$0]  %s17, 16, %s142, [#allocation8]
    $region37: #{forward.1} parent=1 // pred_fallthru
      _
    // Predicated region
    $region38: #{forward.1} parent=1 // pred_check
      _
    $region39: #{forward.1} parent=1 // pred_check_branch
      %146 = sbr.rel (0) target = $region41
    $region40: #{forward.1} parent=1 // pred_region
      %s148 = ssub.s32 8192, 8192
      %149 = vsyncadd [#allocation8], %s148
      %s150 = sshll.u32 [#allocation9], 4
      %s151 = int_to_ptr.vmem [resolvable:$true] %s150
      %156 = dma.hbm_to_vmem [thread:$0]  %s19, 8192, %s151, [#allocation8], 256, 256, 16
    $region41: #{forward.1} parent=1 // pred_fallthru
      _
    // Predicated region
    $region42: #{forward.1} parent=1 // pred_check
      _
    $region43: #{forward.1} parent=1 // pred_check_branch
      %158 = sbr.rel (0) target = $region45
    $region44: #{forward.1} parent=1 // pred_region
      _
    $region45: #{forward.1} parent=1 // pred_fallthru
      _
    // Predicated region
    $region46: #{forward.1} parent=1 // pred_check
      _
    $region47: #{forward.1} parent=1 // pred_check_branch
      %160 = sbr.rel (0) target = $region49
    $region48: #{forward.1} parent=1 // pred_region
      _
    $region49: #{forward.1} parent=1 // pred_fallthru
      _
    // Predicated region
    $region50: #{forward.1} parent=1 // pred_check
      _
    $region51: #{forward.1} parent=1 // pred_check_branch
      %162 = sbr.rel (0) target = $region53
    $region52: #{forward.1} parent=1 // pred_region
      %s164 = ssub.s32 16, 16
      %165 = vsyncadd [#allocation11], %s164
      %s167 = sshll.u32 [#allocation10], 4
      %s168 = int_to_ptr.vmem [resolvable:$true] %s167
      %170 = dma.hbm_to_vmem [thread:$0]  %s25, 16, %s168, [#allocation11]
    $region53: #{forward.1} parent=1 // pred_fallthru
      _
    // Predicated region
    $region54: #{forward.1} parent=1 // pred_check
      _
    $region55: #{forward.1} parent=1 // pred_check_branch
      %172 = sbr.rel (0) target = $region57
    $region56: #{forward.1} parent=1 // pred_region
      %s174 = ssub.s32 4096, 4096
      %175 = vsyncadd [#allocation11], %s174
      %s176 = sshll.u32 [#allocation12], 4
      %s177 = int_to_ptr.vmem [resolvable:$true] %s176
      %182 = dma.hbm_to_vmem [thread:$0]  %s27, 4096, %s177, [#allocation11], 128, 128, 8
    $region57: #{forward.1} parent=1 // pred_fallthru
      _
    // Predicated region
    $region58: #{forward.1} parent=1 // pred_check
      _
    $region59: #{forward.1} parent=1 // pred_check_branch
      %184 = sbr.rel (0) target = $region61
    $region60: #{forward.1} parent=1 // pred_region
      %s186 = ssub.s32 16, 16
      %187 = vsyncadd [#allocation14], %s186
      %s189 = sshll.u32 [#allocation13], 4
      %s190 = int_to_ptr.vmem [resolvable:$true] %s189
      %192 = dma.hbm_to_vmem [thread:$0]  %s29, 16, %s190, [#allocation14]
    $region61: #{forward.1} parent=1 // pred_fallthru
      _
    // Predicated region
    $region62: #{forward.1} parent=1 // pred_check
      _
    $region63: #{forward.1} parent=1 // pred_check_branch
      %194 = sbr.rel (0) target = $region65
    $region64: #{forward.1} parent=1 // pred_region
      %s196 = ssub.s32 4096, 4096
      %197 = vsyncadd [#allocation14], %s196
      %s198 = sshll.u32 [#allocation15], 4
      %s199 = int_to_ptr.vmem [resolvable:$true] %s198
      %204 = dma.hbm_to_vmem [thread:$0]  %s31, 4096, %s199, [#allocation14], 256, 256, 16
    $region65: #{forward.1} parent=1 // pred_fallthru
      _
    // Predicated region
    $region66: #{forward.1} parent=1 // pred_check
      _
    $region67: #{forward.1} parent=1 // pred_check_branch
      %206 = sbr.rel (0) target = $region69
    $region68: #{forward.1} parent=1 // pred_region
      %s208 = ssub.s32 32, 32
      %209 = vsyncadd [#allocation17], %s208
      %s211 = sshll.u32 [#allocation16], 4
      %s212 = int_to_ptr.vmem [resolvable:$true] %s211
      %214 = dma.hbm_to_vmem [thread:$0]  %s33, 32, %s212, [#allocation17]
    $region69: #{forward.1} parent=1 // pred_fallthru
      _
    // Predicated region
    $region70: #{forward.1} parent=1 // pred_check
      _
    $region71: #{forward.1} parent=1 // pred_check_branch
      %216 = sbr.rel (0) target = $region73
    $region72: #{forward.1} parent=1 // pred_region
      %s218 = ssub.s32 24576, 24576
      %219 = vsyncadd [#allocation17], %s218
      %s220 = sshll.u32 [#allocation18], 4
      %s221 = int_to_ptr.vmem [resolvable:$true] %s220
      %226 = dma.hbm_to_vmem [thread:$0]  %s35, 24576, %s221, [#allocation17], 256, 256, 16
    $region73: #{forward.1} parent=1 // pred_fallthru
      _
    // Predicated region
    $region74: #{forward.1} parent=1 // pred_check
      _
    $region75: #{forward.1} parent=1 // pred_check_branch
      %228 = sbr.rel (0) target = $region77
    $region76: #{forward.1} parent=1 // pred_region
      _
    $region77: #{forward.1} parent=1 // pred_fallthru
      _
    // Predicated region
    $region78: #{forward.1} parent=1 // pred_check
      _
    $region79: #{forward.1} parent=1 // pred_check_branch
      %230 = sbr.rel (0) target = $region81
    $region80: #{forward.1} parent=1 // pred_region
      %s232 = ssub.s32 24576, 24576
      %233 = vsyncadd [#allocation20], %s232
      %s234 = sshll.u32 [#allocation19], 4
      %s235 = int_to_ptr.vmem [resolvable:$true] %s234
      %240 = dma.hbm_to_vmem [thread:$0]  %s39, 24576, %s235, [#allocation20], 256, 256, 16
    $region81: #{forward.1} parent=1 // pred_fallthru
      _
    // Predicated region
    $region82: #{forward.1} parent=1 // pred_check
      _
    $region83: #{forward.1} parent=1 // pred_check_branch
      %242 = sbr.rel (0) target = $region85
    $region84: #{forward.1} parent=1 // pred_region
      _
    $region85: #{forward.1} parent=1 // pred_fallthru
      _
    // Predicated region
    $region86: #{forward.1} parent=1 // pred_check
      _
    $region87: #{forward.1} parent=1 // pred_check_branch
      %244 = sbr.rel (0) target = $region89
    $region88: #{forward.1} parent=1 // pred_region
      %s246 = ssub.s32 24576, 24576
      %247 = vsyncadd [#allocation20], %s246
      %s248 = sshll.u32 [#allocation21], 4
      %s249 = int_to_ptr.vmem [resolvable:$true] %s248
      %254 = dma.hbm_to_vmem [thread:$0]  %s43, 24576, %s249, [#allocation20], 256, 256, 16
    $region89: #{forward.1} parent=1 // pred_fallthru
      _
    // Predicated region
    $region90: #{forward.1} parent=1 // pred_check
      _
    $region91: #{forward.1} parent=1 // pred_check_branch
      %256 = sbr.rel (0) target = $region93
    $region92: #{forward.1} parent=1 // pred_region
      _
    $region93: #{forward.1} parent=1 // pred_fallthru
      _
    // Predicated region
    $region94: #{forward.1} parent=1 // pred_check
      _
    $region95: #{forward.1} parent=1 // pred_check_branch
      %258 = sbr.rel (0) target = $region97
    $region96: #{forward.1} parent=1 // pred_region
      %s260 = ssub.s32 24576, 24576
      %261 = vsyncadd [#allocation23], %s260
      %s262 = sshll.u32 [#allocation22], 4
      %s263 = int_to_ptr.vmem [resolvable:$true] %s262
      %268 = dma.hbm_to_vmem [thread:$0]  %s47, 24576, %s263, [#allocation23], 256, 256, 16
    $region97: #{forward.1} parent=1 // pred_fallthru
      _
    // Predicated region
    $region98: #{forward.1} parent=1 // pred_check
      _
    $region99: #{forward.1} parent=1 // pred_check_branch
      %270 = sbr.rel (0) target = $region101
    $region100: #{forward.1} parent=1 // pred_region
      _
    $region101: #{forward.1} parent=1 // pred_fallthru
      _
    // Predicated region
    $region102: #{forward.1} parent=1 // pred_check
      _
    $region103: #{forward.1} parent=1 // pred_check_branch
      %272 = sbr.rel (0) target = $region105
    $region104: #{forward.1} parent=1 // pred_region
      %s274 = ssub.s32 24576, 24576
      %275 = vsyncadd [#allocation23], %s274
      %s276 = sshll.u32 [#allocation24], 4
      %s277 = int_to_ptr.vmem [resolvable:$true] %s276
      %282 = dma.hbm_to_vmem [thread:$0]  %s51, 24576, %s277, [#allocation23], 256, 256, 16
    $region105: #{forward.1} parent=1 // pred_fallthru
      _
    // Predicated region
    $region106: #{forward.1} parent=1 // pred_check
      _
    $region107: #{forward.1} parent=1 // pred_check_branch
      %284 = sbr.rel (0) target = $region109
    $region108: #{forward.1} parent=1 // pred_region
      _
    $region109: #{forward.1} parent=1 // pred_fallthru
      _
    // Predicated region
    $region110: #{forward.1} parent=1 // pred_check
      _
    $region111: #{forward.1} parent=1 // pred_check_branch
      %286 = sbr.rel (0) target = $region113
    $region112: #{forward.1} parent=1 // pred_region
      _
    $region113: #{forward.1} parent=1 // pred_fallthru
      _
    // Predicated region
    $region114: #{forward.1} parent=1 // pred_check
      _
    $region115: #{forward.1} parent=1 // pred_check_branch
      %288 = sbr.rel (0) target = $region117
    $region116: #{forward.1} parent=1 // pred_region
      _
    $region117: #{forward.1} parent=1 // pred_fallthru
      _
    // Predicated region
    $region118: #{forward.1} parent=1 // pred_check
      _
    $region119: #{forward.1} parent=1 // pred_check_branch
      %290 = sbr.rel (0) target = $region121
    $region120: #{forward.1} parent=1 // pred_region
      _
    $region121: #{forward.1} parent=1 // pred_fallthru
      _
    // Predicated region
    $region122: #{forward.1} parent=1 // pred_check
      _
    $region123: #{forward.1} parent=1 // pred_check_branch
      %292 = sbr.rel (0) target = $region125
    $region124: #{forward.1} parent=1 // pred_region
      _
    $region125: #{forward.1} parent=1 // pred_fallthru
      _
    // Predicated region
    $region126: #{forward.1} parent=1 // pred_check
      _
    $region127: #{forward.1} parent=1 // pred_check_branch
      %294 = sbr.rel (0) target = $region129
    $region128: #{forward.1} parent=1 // pred_region
      %s296 = ssub.s32 8192, 8192
      %297 = vsyncadd [#allocation26], %s296
      %s298 = sshll.u32 [#allocation25], 4
      %s299 = int_to_ptr.vmem [resolvable:$true] %s298
      %304 = dma.hbm_to_vmem [thread:$0]  %s63, 8192, %s299, [#allocation26], 256, 256, 16
    $region129: #{forward.1} parent=1 // pred_fallthru
      _
    // Predicated region
    $region130: #{forward.1} parent=1 // pred_check
      _
    $region131: #{forward.1} parent=1 // pred_check_branch
      %306 = sbr.rel (0) target = $region133
    $region132: #{forward.1} parent=1 // pred_region
      %s308 = ssub.s32 32, 32
      %309 = vsyncadd [#allocation26], %s308
      %s311 = sshll.u32 [#allocation27], 4
      %s312 = int_to_ptr.vmem [resolvable:$true] %s311
      %314 = dma.hbm_to_vmem [thread:$0]  %s65, 32, %s312, [#allocation26]
    $region133: #{forward.1} parent=1 // pred_fallthru
      _
    // Predicated region
    $region134: #{forward.1} parent=1 // pred_check
      _
    $region135: #{forward.1} parent=1 // pred_check_branch
      %316 = sbr.rel (0) target = $region137
    $region136: #{forward.1} parent=1 // pred_region
      %s318 = ssub.s32 8192, 8192
      %319 = vsyncadd [#allocation29], %s318
      %s320 = sshll.u32 [#allocation28], 4
      %s321 = int_to_ptr.vmem [resolvable:$true] %s320
      %326 = dma.hbm_to_vmem [thread:$0]  %s67, 8192, %s321, [#allocation29], 256, 256, 16
    $region137: #{forward.1} parent=1 // pred_fallthru
      _
    // Predicated region
    $region138: #{forward.1} parent=1 // pred_check
      _
    $region139: #{forward.1} parent=1 // pred_check_branch
      %328 = sbr.rel (0) target = $region141
    $region140: #{forward.1} parent=1 // pred_region
      %s330 = ssub.s32 32, 32
      %331 = vsyncadd [#allocation29], %s330
      %s333 = sshll.u32 [#allocation30], 4
      %s334 = int_to_ptr.vmem [resolvable:$true] %s333
      %336 = dma.hbm_to_vmem [thread:$0]  %s69, 32, %s334, [#allocation29]
    $region141: #{forward.1} parent=1 // pred_fallthru
      _
    // Predicated region
    $region142: #{forward.1} parent=1 // pred_check
      _
    $region143: #{forward.1} parent=1 // pred_check_branch
      %338 = sbr.rel (0) target = $region145
    $region144: #{forward.1} parent=1 // pred_region
      _
    $region145: #{forward.1} parent=1 // pred_fallthru
      _
    // Predicated region
    $region146: #{forward.1} parent=1 // pred_check
      _
    $region147: #{forward.1} parent=1 // pred_check_branch
      %340 = sbr.rel (0) target = $region149
    $region148: #{forward.1} parent=1 // pred_region
      %s342 = ssub.s32 16, 16
      %343 = vsyncadd [#allocation32], %s342
      %s345 = sshll.u32 [#allocation31], 4
      %s346 = int_to_ptr.vmem [resolvable:$true] %s345
      %348 = dma.hbm_to_vmem [thread:$0]  %s73, 16, %s346, [#allocation32]
    $region149: #{forward.1} parent=1 // pred_fallthru
      _
    // Predicated region
    $region150: #{forward.1} parent=1 // pred_check
      _
    $region151: #{forward.1} parent=1 // pred_check_branch
      %350 = sbr.rel (0) target = $region153
    $region152: #{forward.1} parent=1 // pred_region
      %351 = dma.done [#allocation5], 16
    $region153: #{forward.1} parent=1 // pred_fallthru
      _
    // Predicated region
    $region154: #{forward.1} parent=1 // pred_check
      _
    $region155: #{forward.1} parent=1 // pred_check_branch
      %353 = sbr.rel (0) target = $region157
    $region156: #{forward.1} parent=1 // pred_region
      %354 = dma.done [#allocation3], 16
    $region157: #{forward.1} parent=1 // pred_fallthru
      _
    // Predicated region
    $region158: #{forward.1} parent=1 // pred_check
      _
    $region159: #{forward.1} parent=1 // pred_check_branch
      %356 = sbr.rel (0) target = $region161
    $region160: #{forward.1} parent=1 // pred_region
      %357 = dma.done [#allocation8], 16
    $region161: #{forward.1} parent=1 // pred_fallthru
      _
    // Predicated region
    $region162: #{forward.1} parent=1 // pred_check
      _
    $region163: #{forward.1} parent=1 // pred_check_branch
      %359 = sbr.rel (0) target = $region165
    $region164: #{forward.1} parent=1 // pred_region
      %360 = dma.done [#allocation8], 8192
    $region165: #{forward.1} parent=1 // pred_fallthru
      _
    // Predicated region
    $region166: #{forward.1} parent=1 // pred_check
      _
    $region167: #{forward.1} parent=1 // pred_check_branch
      %362 = sbr.rel (0) target = $region169
    $region168: #{forward.1} parent=1 // pred_region
      %363 = dma.done [#allocation11], 16
    $region169: #{forward.1} parent=1 // pred_fallthru
      _
    // Predicated region
    $region170: #{forward.1} parent=1 // pred_check
      _
    $region171: #{forward.1} parent=1 // pred_check_branch
      %365 = sbr.rel (0) target = $region173
    $region172: #{forward.1} parent=1 // pred_region
      %366 = dma.done [#allocation11], 4096
    $region173: #{forward.1} parent=1 // pred_fallthru
      _
    // Predicated region
    $region174: #{forward.1} parent=1 // pred_check
      _
    $region175: #{forward.1} parent=1 // pred_check_branch
      %368 = sbr.rel (0) target = $region177
    $region176: #{forward.1} parent=1 // pred_region
      %369 = dma.done [#allocation14], 16
    $region177: #{forward.1} parent=1 // pred_fallthru
      _
    // Predicated region
    $region178: #{forward.1} parent=1 // pred_check
      _
    $region179: #{forward.1} parent=1 // pred_check_branch
      %371 = sbr.rel (0) target = $region181
    $region180: #{forward.1} parent=1 // pred_region
      %372 = dma.done [#allocation14], 4096
    $region181: #{forward.1} parent=1 // pred_fallthru
      _
    // Predicated region
    $region182: #{forward.1} parent=1 // pred_check
      _
    $region183: #{forward.1} parent=1 // pred_check_branch
      %374 = sbr.rel (0) target = $region185
    $region184: #{forward.1} parent=1 // pred_region
      %375 = dma.done [#allocation17], 32
    $region185: #{forward.1} parent=1 // pred_fallthru
      _
    // Predicated region
    $region186: #{forward.1} parent=1 // pred_check
      _
    $region187: #{forward.1} parent=1 // pred_check_branch
      %377 = sbr.rel (0) target = $region189
    $region188: #{forward.1} parent=1 // pred_region
      %378 = dma.done [#allocation17], 24576
    $region189: #{forward.1} parent=1 // pred_fallthru
      _
    // Predicated region
    $region190: #{forward.1} parent=1 // pred_check
      _
    $region191: #{forward.1} parent=1 // pred_check_branch
      %380 = sbr.rel (0) target = $region193
    $region192: #{forward.1} parent=1 // pred_region
      %381 = dma.done [#allocation20], 24576
    $region193: #{forward.1} parent=1 // pred_fallthru
      _
    // Predicated region
    $region194: #{forward.1} parent=1 // pred_check
      _
    $region195: #{forward.1} parent=1 // pred_check_branch
      %383 = sbr.rel (0) target = $region197
    $region196: #{forward.1} parent=1 // pred_region
      %384 = dma.done [#allocation20], 24576
    $region197: #{forward.1} parent=1 // pred_fallthru
      _
    // Predicated region
    $region198: #{forward.1} parent=1 // pred_check
      _
    $region199: #{forward.1} parent=1 // pred_check_branch
      %386 = sbr.rel (0) target = $region201
    $region200: #{forward.1} parent=1 // pred_region
      %387 = dma.done [#allocation23], 24576
    $region201: #{forward.1} parent=1 // pred_fallthru
      _
    // Predicated region
    $region202: #{forward.1} parent=1 // pred_check
      _
    $region203: #{forward.1} parent=1 // pred_check_branch
      %389 = sbr.rel (0) target = $region205
    $region204: #{forward.1} parent=1 // pred_region
      %390 = dma.done [#allocation23], 24576
    $region205: #{forward.1} parent=1 // pred_fallthru
      _
    // Predicated region
    $region206: #{forward.1} parent=1 // pred_check
      _
    $region207: #{forward.1} parent=1 // pred_check_branch
      %392 = sbr.rel (0) target = $region209
    $region208: #{forward.1} parent=1 // pred_region
      %393 = dma.done [#allocation26], 8192
    $region209: #{forward.1} parent=1 // pred_fallthru
      _
    // Predicated region
    $region210: #{forward.1} parent=1 // pred_check
      _
    $region211: #{forward.1} parent=1 // pred_check_branch
      %395 = sbr.rel (0) target = $region213
    $region212: #{forward.1} parent=1 // pred_region
      %396 = dma.done [#allocation26], 32
    $region213: #{forward.1} parent=1 // pred_fallthru
      _
    // Predicated region
    $region214: #{forward.1} parent=1 // pred_check
      _
    $region215: #{forward.1} parent=1 // pred_check_branch
      %398 = sbr.rel (0) target = $region217
    $region216: #{forward.1} parent=1 // pred_region
      %399 = dma.done [#allocation29], 8192
    $region217: #{forward.1} parent=1 // pred_fallthru
      _
    // Predicated region
    $region218: #{forward.1} parent=1 // pred_check
      _
    $region219: #{forward.1} parent=1 // pred_check_branch
      %401 = sbr.rel (0) target = $region221
    $region220: #{forward.1} parent=1 // pred_region
      %402 = dma.done [#allocation29], 32
    $region221: #{forward.1} parent=1 // pred_fallthru
      _
    // Predicated region
    $region222: #{forward.1} parent=1 // pred_check
      _
    $region223: #{forward.1} parent=1 // pred_check_branch
      %404 = sbr.rel (0) target = $region225
    $region224: #{forward.1} parent=1 // pred_region
      %405 = dma.done [#allocation32], 16
    $region225: #{forward.1} parent=1 // pred_fallthru
      _
    %406 = sfence
    %v407 = vld [vmem:[%s3] sm:$0xff]
    %v408 = vld [vmem:[%s5] sm:$0xff]
    %vm409 = vcmask 64512
    %v411 = vsel %vm409, %v407, 0
    %413 = vmatprep.subr.mxu0 0.0
    %414 = vmatpush1.msra.mxu0 %v408
    %415 = vmatprep.subr.mxu0 0.0
    %416 = vmatpush1.msra.mxu0 0.0
    %417 = vmatprep.subr.mxu0 0.0
    %418 = vmatpush1.msra.mxu0 0.0
    %419 = vmatprep.subr.mxu0 0.0
    %420 = vmatpush1.msra.mxu0 0.0
    %421 = vmatprep.subr.mxu0 0.0
    %422 = vmatpush1.msra.mxu0 0.0
    %423 = vmatprep.subr.mxu0 0.0
    %424 = vmatpush1.msra.mxu0 0.0
    %425 = vmatprep.subr.mxu0 0.0
    %426 = vmatpush1.msra.mxu0 0.0
    %427 = vmatprep.subr.mxu0 0.0
    %428 = vmatpush1.msra.mxu0 0.0
    %429 = vmatprep.subr.mxu0 0.0
    %430 = vmatpush1.msra.mxu0 0.0
    %431 = vmatprep.subr.mxu0 0.0
    %432 = vmatpush1.msra.mxu0 0.0
    %433 = vmatprep.subr.mxu0 0.0
    %434 = vmatpush1.msra.mxu0 0.0
    %435 = vmatprep.subr.mxu0 0.0
    %436 = vmatpush1.msra.mxu0 0.0
    %437 = vmatprep.subr.mxu0 0.0
    %438 = vmatpush1.msra.mxu0 0.0
    %439 = vmatprep.subr.mxu0 0.0
    %440 = vmatpush1.msra.mxu0 0.0
    %441 = vmatprep.subr.mxu0 0.0
    %442 = vmatpush1.msra.mxu0 0.0
    %443 = vmatprep.subr.mxu0 0.0
    %444 = vmatpush1.msra.mxu0 0.0
    %445 = vmatprep.subr.mxu0 0.0
    %446 = vmatpush1.msra.mxu0 0.0
    %447 = vmatprep.subr.mxu0 0.0
    %448 = vmatpush1.msra.mxu0 0.0
    %449 = vmatprep.subr.mxu0 0.0
    %450 = vmatpush1.msra.mxu0 0.0
    %451 = vmatprep.subr.mxu0 0.0
    %452 = vmatpush1.msra.mxu0 0.0
    %453 = vmatprep.subr.mxu0 0.0
    %454 = vmatpush1.msra.mxu0 0.0
    %455 = vmatprep.subr.mxu0 0.0
    %456 = vmatpush1.msra.mxu0 0.0
    %457 = vmatprep.subr.mxu0 0.0
    %458 = vmatpush1.msra.mxu0 0.0
    %459 = vmatprep.subr.mxu0 0.0
    %460 = vmatpush1.msra.mxu0 0.0
    %461 = vmatprep.subr.mxu0 0.0
    %462 = vmatpush1.msra.mxu0 0.0
    %463 = vmatprep.subr.mxu0 0.0
    %464 = vmatpush1.msra.mxu0 0.0
    %465 = vmatprep.subr.mxu0 0.0
    %466 = vmatpush1.msra.mxu0 0.0
    %467 = vmatprep.subr.mxu0 0.0
    %468 = vmatpush1.msra.mxu0 0.0
    %469 = vmatprep.subr.mxu0 0.0
    %470 = vmatpush1.msra.mxu0 0.0
    %471 = vmatprep.subr.mxu0 0.0
    %472 = vmatpush1.msra.mxu0 0.0
    %473 = vmatprep.subr.mxu0 0.0
    %474 = vmatpush1.msra.mxu0 0.0
    %475 = vmatprep.subr.mxu0 0.0
    %476 = vmatpush1.msra.mxu0 0.0
    %477 = vmatprep.mubr.f32.mxu0 0.0
    %478 = vmatmul.mubr.f32.gmra.mrb[0].mxu0 %v411
    %v479 = vpop.f32.mrb[0].mxu0
    %v480 = vadd.f32 0.0, %v479
    %v481 = vpop.f32.mrb[0].mxu0
    %482 = vdwg.mxu0
    %v483 = vld [vmem:[%s11] sm:$0xff]
    %v484 = vld [vmem:[%s11 + $0x8] sm:$0xff]
    %v485 = vld [vmem:[#allocation6] sm:$0x1]
    %v487 = vlaneseq
    %v488 = vshrl.u32 %v487, 7
    %v489 = vsub.s32 0, %v488
    %v490 = vrot.slane %v485, %v489
    %vm492 = vcmask 130048
    %v494 = vsel %vm492, %v480, 0
    %496 = vmatprep.subr.mxu0 0.0
    %497 = vmatpush1.msra.mxu0 %v483
    %498 = vmatprep.subr.mxu0 0.0
    %499 = vmatpush1.msra.mxu0 %v484
    %500 = vmatprep.subr.mxu0 0.0
    %501 = vmatpush1.msra.mxu0 0.0
    %502 = vmatprep.subr.mxu0 0.0
    %503 = vmatpush1.msra.mxu0 0.0
    %504 = vmatprep.subr.mxu0 0.0
    %505 = vmatpush1.msra.mxu0 0.0
    %506 = vmatprep.subr.mxu0 0.0
    %507 = vmatpush1.msra.mxu0 0.0
    %508 = vmatprep.subr.mxu0 0.0
    %509 = vmatpush1.msra.mxu0 0.0
    %510 = vmatprep.subr.mxu0 0.0
    %511 = vmatpush1.msra.mxu0 0.0
    %512 = vmatprep.subr.mxu0 0.0
    %513 = vmatpush1.msra.mxu0 0.0
    %514 = vmatprep.subr.mxu0 0.0
    %515 = vmatpush1.msra.mxu0 0.0
    %516 = vmatprep.subr.mxu0 0.0
    %517 = vmatpush1.msra.mxu0 0.0
    %518 = vmatprep.subr.mxu0 0.0
    %519 = vmatpush1.msra.mxu0 0.0
    %520 = vmatprep.subr.mxu0 0.0
    %521 = vmatpush1.msra.mxu0 0.0
    %522 = vmatprep.subr.mxu0 0.0
    %523 = vmatpush1.msra.mxu0 0.0
    %524 = vmatprep.subr.mxu0 0.0
    %525 = vmatpush1.msra.mxu0 0.0
    %526 = vmatprep.subr.mxu0 0.0
    %527 = vmatpush1.msra.mxu0 0.0
    %528 = vmatprep.subr.mxu0 0.0
    %529 = vmatpush1.msra.mxu0 0.0
    %530 = vmatprep.subr.mxu0 0.0
    %531 = vmatpush1.msra.mxu0 0.0
    %532 = vmatprep.subr.mxu0 0.0
    %533 = vmatpush1.msra.mxu0 0.0
    %534 = vmatprep.subr.mxu0 0.0
    %535 = vmatpush1.msra.mxu0 0.0
    %536 = vmatprep.subr.mxu0 0.0
    %537 = vmatpush1.msra.mxu0 0.0
    %538 = vmatprep.subr.mxu0 0.0
    %539 = vmatpush1.msra.mxu0 0.0
    %540 = vmatprep.subr.mxu0 0.0
    %541 = vmatpush1.msra.mxu0 0.0
    %542 = vmatprep.subr.mxu0 0.0
    %543 = vmatpush1.msra.mxu0 0.0
    %544 = vmatprep.subr.mxu0 0.0
    %545 = vmatpush1.msra.mxu0 0.0
    %546 = vmatprep.subr.mxu0 0.0
    %547 = vmatpush1.msra.mxu0 0.0
    %548 = vmatprep.subr.mxu0 0.0
    %549 = vmatpush1.msra.mxu0 0.0
    %550 = vmatprep.subr.mxu0 0.0
    %551 = vmatpush1.msra.mxu0 0.0
    %552 = vmatprep.subr.mxu0 0.0
    %553 = vmatpush1.msra.mxu0 0.0
    %554 = vmatprep.subr.mxu0 0.0
    %555 = vmatpush1.msra.mxu0 0.0
    %556 = vmatprep.subr.mxu0 0.0
    %557 = vmatpush1.msra.mxu0 0.0
    %558 = vmatprep.subr.mxu0 0.0
    %559 = vmatpush1.msra.mxu0 0.0
    %560 = vmatprep.mubr.f32.mxu0 0.0
    %561 = vmatmul.mubr.f32.gmra.mrb[0].mxu0 %v494
    %v562 = vpop.f32.mrb[0].mxu0
    %v563 = vadd.f32 %v490, %v562
    %v564 = vpop.f32.mrb[0].mxu0
    %565 = vdwg.mxu0
    %v566 = vmax.f32 %v563, 0.0
    %v567 = vld [vmem:[%s7] sm:$0xff]
    %v568 = vld [vmem:[%s15] sm:$0xff]
    %v569 = vld [vmem:[%s15 + $0x8] sm:$0xff]
    %v570 = vld [vmem:[#allocation7] sm:$0x1]
    %v572 = vlaneseq
    %v573 = vshrl.u32 %v572, 7
    %v574 = vsub.s32 0, %v573
    %v575 = vrot.slane %v570, %v574
    %v578 = vsel %vm492, %v567, 0
    %580 = vmatprep.subr.mxu0 0.0
    %581 = vmatpush1.msra.mxu0 %v568
    %582 = vmatprep.subr.mxu0 0.0
    %583 = vmatpush1.msra.mxu0 %v569
    %584 = vmatprep.subr.mxu0 0.0
    %585 = vmatpush1.msra.mxu0 0.0
    %586 = vmatprep.subr.mxu0 0.0
    %587 = vmatpush1.msra.mxu0 0.0
    %588 = vmatprep.subr.mxu0 0.0
    %589 = vmatpush1.msra.mxu0 0.0
    %590 = vmatprep.subr.mxu0 0.0
    %591 = vmatpush1.msra.mxu0 0.0
    %592 = vmatprep.subr.mxu0 0.0
    %593 = vmatpush1.msra.mxu0 0.0
    %594 = vmatprep.subr.mxu0 0.0
    %595 = vmatpush1.msra.mxu0 0.0
    %596 = vmatprep.subr.mxu0 0.0
    %597 = vmatpush1.msra.mxu0 0.0
    %598 = vmatprep.subr.mxu0 0.0
    %599 = vmatpush1.msra.mxu0 0.0
    %600 = vmatprep.subr.mxu0 0.0
    %601 = vmatpush1.msra.mxu0 0.0
    %602 = vmatprep.subr.mxu0 0.0
    %603 = vmatpush1.msra.mxu0 0.0
    %604 = vmatprep.subr.mxu0 0.0
    %605 = vmatpush1.msra.mxu0 0.0
    %606 = vmatprep.subr.mxu0 0.0
    %607 = vmatpush1.msra.mxu0 0.0
    %608 = vmatprep.subr.mxu0 0.0
    %609 = vmatpush1.msra.mxu0 0.0
    %610 = vmatprep.subr.mxu0 0.0
    %611 = vmatpush1.msra.mxu0 0.0
    %612 = vmatprep.subr.mxu0 0.0
    %613 = vmatpush1.msra.mxu0 0.0
    %614 = vmatprep.subr.mxu0 0.0
    %615 = vmatpush1.msra.mxu0 0.0
    %616 = vmatprep.subr.mxu0 0.0
    %617 = vmatpush1.msra.mxu0 0.0
    %618 = vmatprep.subr.mxu0 0.0
    %619 = vmatpush1.msra.mxu0 0.0
    %620 = vmatprep.subr.mxu0 0.0
    %621 = vmatpush1.msra.mxu0 0.0
    %622 = vmatprep.subr.mxu0 0.0
    %623 = vmatpush1.msra.mxu0 0.0
    %624 = vmatprep.subr.mxu0 0.0
    %625 = vmatpush1.msra.mxu0 0.0
    %626 = vmatprep.subr.mxu0 0.0
    %627 = vmatpush1.msra.mxu0 0.0
    %628 = vmatprep.subr.mxu0 0.0
    %629 = vmatpush1.msra.mxu0 0.0
    %630 = vmatprep.subr.mxu0 0.0
    %631 = vmatpush1.msra.mxu0 0.0
    %632 = vmatprep.subr.mxu0 0.0
    %633 = vmatpush1.msra.mxu0 0.0
    %634 = vmatprep.subr.mxu0 0.0
    %635 = vmatpush1.msra.mxu0 0.0
    %636 = vmatprep.subr.mxu0 0.0
    %637 = vmatpush1.msra.mxu0 0.0
    %638 = vmatprep.subr.mxu0 0.0
    %639 = vmatpush1.msra.mxu0 0.0
    %640 = vmatprep.subr.mxu0 0.0
    %641 = vmatpush1.msra.mxu0 0.0
    %642 = vmatprep.subr.mxu0 0.0
    %643 = vmatpush1.msra.mxu0 0.0
    %644 = vmatprep.mubr.f32.mxu0 0.0
    %645 = vmatmul.mubr.f32.gmra.mrb[0].mxu0 %v578
    %v646 = vpop.f32.mrb[0].mxu0
    %v647 = vadd.f32 %v575, %v646
    %v648 = vpop.f32.mrb[0].mxu0
    %649 = vdwg.mxu0
    %v650 = vmax.f32 %v647, 0.0
    %651 = vst [vmem:[#allocation37] sm:$0xff] %v566
    %652 = vst [vmem:[#allocation37 + $0x8] sm:$0xff] %v650
    %v653 = vld [vmem:[#allocation9] sm:$0xff]
    %v654 = vld [vmem:[#allocation9 + $0x8] sm:$0xff]
    %v655 = vld [vmem:[#allocation9 + $0x10] sm:$0xff]
    %v656 = vld [vmem:[#allocation9 + $0x18] sm:$0xff]
    %v657 = vld [vmem:[#allocation9 + $0x20] sm:$0xff]
    %v658 = vld [vmem:[#allocation9 + $0x28] sm:$0xff]
    %v659 = vld [vmem:[#allocation9 + $0x30] sm:$0xff]
    %v660 = vld [vmem:[#allocation9 + $0x38] sm:$0xff]
    %v661 = vld [vmem:[#allocation9 + $0x40] sm:$0xff]
    %v662 = vld [vmem:[#allocation9 + $0x48] sm:$0xff]
    %v663 = vld [vmem:[#allocation9 + $0x50] sm:$0xff]
    %v664 = vld [vmem:[#allocation9 + $0x58] sm:$0xff]
    %v665 = vld [vmem:[#allocation9 + $0x60] sm:$0xff]
    %v666 = vld [vmem:[#allocation9 + $0x68] sm:$0xff]
    %v667 = vld [vmem:[#allocation9 + $0x70] sm:$0xff]
    %v668 = vld [vmem:[#allocation9 + $0x78] sm:$0xff]
    %v669 = vld [vmem:[#allocation9 + $0x80] sm:$0xff]
    %v670 = vld [vmem:[#allocation9 + $0x88] sm:$0xff]
    %v671 = vld [vmem:[#allocation9 + $0x90] sm:$0xff]
    %v672 = vld [vmem:[#allocation9 + $0x98] sm:$0xff]
    %v673 = vld [vmem:[#allocation9 + $0xa0] sm:$0xff]
    %v674 = vld [vmem:[#allocation9 + $0xa8] sm:$0xff]
    %v675 = vld [vmem:[#allocation9 + $0xb0] sm:$0xff]
    %v676 = vld [vmem:[#allocation9 + $0xb8] sm:$0xff]
    %v677 = vld [vmem:[#allocation9 + $0xc0] sm:$0xff]
    %v678 = vld [vmem:[#allocation9 + $0xc8] sm:$0xff]
    %v679 = vld [vmem:[#allocation9 + $0xd0] sm:$0xff]
    %v680 = vld [vmem:[#allocation9 + $0xd8] sm:$0xff]
    %v681 = vld [vmem:[#allocation9 + $0xe0] sm:$0xff]
    %v682 = vld [vmem:[#allocation9 + $0xe8] sm:$0xff]
    %v683 = vld [vmem:[#allocation9 + $0xf0] sm:$0xff]
    %v684 = vld [vmem:[#allocation9 + $0xf8] sm:$0xff]
    %v685 = vld [vmem:[#allocation9 + $0x100] sm:$0xff]
    %v686 = vld [vmem:[#allocation9 + $0x108] sm:$0xff]
    %v687 = vld [vmem:[#allocation9 + $0x110] sm:$0xff]
    %v688 = vld [vmem:[#allocation9 + $0x118] sm:$0xff]
    %v689 = vld [vmem:[#allocation9 + $0x120] sm:$0xff]
    %v690 = vld [vmem:[#allocation9 + $0x128] sm:$0xff]
    %v691 = vld [vmem:[#allocation9 + $0x130] sm:$0xff]
    %v692 = vld [vmem:[#allocation9 + $0x138] sm:$0xff]
    %v693 = vld [vmem:[#allocation9 + $0x140] sm:$0xff]
    %v694 = vld [vmem:[#allocation9 + $0x148] sm:$0xff]
    %v695 = vld [vmem:[#allocation9 + $0x150] sm:$0xff]
    %v696 = vld [vmem:[#allocation9 + $0x158] sm:$0xff]
    %v697 = vld [vmem:[#allocation9 + $0x160] sm:$0xff]
    %v698 = vld [vmem:[#allocation9 + $0x168] sm:$0xff]
    %v699 = vld [vmem:[#allocation9 + $0x170] sm:$0xff]
    %v700 = vld [vmem:[#allocation9 + $0x178] sm:$0xff]
    %v701 = vld [vmem:[#allocation9 + $0x180] sm:$0xff]
    %v702 = vld [vmem:[#allocation9 + $0x188] sm:$0xff]
    %v703 = vld [vmem:[#allocation9 + $0x190] sm:$0xff]
    %v704 = vld [vmem:[#allocation9 + $0x198] sm:$0xff]
    %v705 = vld [vmem:[#allocation9 + $0x1a0] sm:$0xff]
    %v706 = vld [vmem:[#allocation9 + $0x1a8] sm:$0xff]
    %v707 = vld [vmem:[#allocation9 + $0x1b0] sm:$0xff]
    %v708 = vld [vmem:[#allocation9 + $0x1b8] sm:$0xff]
    %v709 = vld [vmem:[#allocation9 + $0x1c0] sm:$0xff]
    %v710 = vld [vmem:[#allocation9 + $0x1c8] sm:$0xff]
    %v711 = vld [vmem:[#allocation9 + $0x1d0] sm:$0xff]
    %v712 = vld [vmem:[#allocation9 + $0x1d8] sm:$0xff]
    %v713 = vld [vmem:[#allocation9 + $0x1e0] sm:$0xff]
    %v714 = vld [vmem:[#allocation9 + $0x1e8] sm:$0xff]
    %v715 = vld [vmem:[#allocation9 + $0x1f0] sm:$0xff]
    %v716 = vld [vmem:[#allocation9 + $0x1f8] sm:$0xff]
    %v717 = vld [vmem:[%s21] sm:$0x3]
    %v719 = vlaneseq
    %v720 = vshrl.u32 %v719, 7
    %v721 = vsub.s32 0, %v720
    %v722 = vrot.slane %v717, %v721
    %v723 = vlaneseq
    %v724 = vshrl.u32 %v723, 7
    %v725 = vsub.s32 1, %v724
    %v726 = vrot.slane %v717, %v725
    %729 = vmatprep.subr.mxu0 %v654
    %730 = vmatpush1.msra.mxu0 %v653
    %731 = vmatprep.subr.mxu0 %v656
    %732 = vmatpush1.msra.mxu0 %v655
    %733 = vmatprep.subr.mxu0 %v658
    %734 = vmatpush1.msra.mxu0 %v657
    %735 = vmatprep.subr.mxu0 %v660
    %736 = vmatpush1.msra.mxu0 %v659
    %737 = vmatprep.subr.mxu0 %v662
    %738 = vmatpush1.msra.mxu0 %v661
    %739 = vmatprep.subr.mxu0 %v664
    %740 = vmatpush1.msra.mxu0 %v663
    %741 = vmatprep.subr.mxu0 %v666
    %742 = vmatpush1.msra.mxu0 %v665
    %743 = vmatprep.subr.mxu0 %v668
    %744 = vmatpush1.msra.mxu0 %v667
    %745 = vmatprep.subr.mxu0 %v670
    %746 = vmatpush1.msra.mxu0 %v669
    %747 = vmatprep.subr.mxu0 %v672
    %748 = vmatpush1.msra.mxu0 %v671
    %749 = vmatprep.subr.mxu0 %v674
    %750 = vmatpush1.msra.mxu0 %v673
    %751 = vmatprep.subr.mxu0 %v676
    %752 = vmatpush1.msra.mxu0 %v675
    %753 = vmatprep.subr.mxu0 %v678
    %754 = vmatpush1.msra.mxu0 %v677
    %755 = vmatprep.subr.mxu0 %v680
    %756 = vmatpush1.msra.mxu0 %v679
    %757 = vmatprep.subr.mxu0 %v682
    %758 = vmatpush1.msra.mxu0 %v681
    %759 = vmatprep.subr.mxu0 %v684
    %760 = vmatpush1.msra.mxu0 %v683
    %761 = vmatprep.subr.mxu0 %v686
    %762 = vmatpush1.msra.mxu0 %v685
    %763 = vmatprep.subr.mxu0 %v688
    %764 = vmatpush1.msra.mxu0 %v687
    %765 = vmatprep.subr.mxu0 %v690
    %766 = vmatpush1.msra.mxu0 %v689
    %767 = vmatprep.subr.mxu0 %v692
    %768 = vmatpush1.msra.mxu0 %v691
    %769 = vmatprep.subr.mxu0 %v694
    %770 = vmatpush1.msra.mxu0 %v693
    %771 = vmatprep.subr.mxu0 %v696
    %772 = vmatpush1.msra.mxu0 %v695
    %773 = vmatprep.subr.mxu0 %v698
    %774 = vmatpush1.msra.mxu0 %v697
    %775 = vmatprep.subr.mxu0 %v700
    %776 = vmatpush1.msra.mxu0 %v699
    %777 = vmatprep.subr.mxu0 %v702
    %778 = vmatpush1.msra.mxu0 %v701
    %779 = vmatprep.subr.mxu0 %v704
    %780 = vmatpush1.msra.mxu0 %v703
    %781 = vmatprep.subr.mxu0 %v706
    %782 = vmatpush1.msra.mxu0 %v705
    %783 = vmatprep.subr.mxu0 %v708
    %784 = vmatpush1.msra.mxu0 %v707
    %785 = vmatprep.subr.mxu0 %v710
    %786 = vmatpush1.msra.mxu0 %v709
    %787 = vmatprep.subr.mxu0 %v712
    %788 = vmatpush1.msra.mxu0 %v711
    %789 = vmatprep.subr.mxu0 %v714
    %790 = vmatpush1.msra.mxu0 %v713
    %791 = vmatprep.subr.mxu0 %v716
    %792 = vmatpush1.msra.mxu0 %v715
    %793 = vmatprep.mubr.f32.mxu0 %v650
    %794 = vmatmul.mubr.f32.gmra.mrb[0].mxu0 %v566
    %v795 = vpop.f32.mrb[0].mxu0
    %v796 = vadd.f32 %v722, %v795
    %v797 = vpop.f32.mrb[0].mxu0
    %v798 = vadd.f32 %v726, %v797
    %799 = vdwg.mxu0
    %v800 = vmax.f32 %v796, 0.0
    %v801 = vmax.f32 %v798, 0.0
    %v802 = vld [vmem:[%s23] sm:$0xff]
    %v803 = vld [vmem:[%s23 + $0x8] sm:$0xff]
    %v804 = vld [vmem:[%s23 + $0x10] sm:$0xff]
    %v805 = vld [vmem:[%s23 + $0x18] sm:$0xff]
    %v806 = vld [vmem:[%s23 + $0x20] sm:$0xff]
    %v807 = vld [vmem:[%s23 + $0x28] sm:$0xff]
    %v808 = vld [vmem:[%s23 + $0x30] sm:$0xff]
    %v809 = vld [vmem:[%s23 + $0x38] sm:$0xff]
    %v810 = vld [vmem:[%s23 + $0x40] sm:$0xff]
    %v811 = vld [vmem:[%s23 + $0x48] sm:$0xff]
    %v812 = vld [vmem:[%s23 + $0x50] sm:$0xff]
    %v813 = vld [vmem:[%s23 + $0x58] sm:$0xff]
    %v814 = vld [vmem:[%s23 + $0x60] sm:$0xff]
    %v815 = vld [vmem:[%s23 + $0x68] sm:$0xff]
    %v816 = vld [vmem:[%s23 + $0x70] sm:$0xff]
    %v817 = vld [vmem:[%s23 + $0x78] sm:$0xff]
    %v818 = vld [vmem:[%s23 + $0x80] sm:$0xff]
    %v819 = vld [vmem:[%s23 + $0x88] sm:$0xff]
    %v820 = vld [vmem:[%s23 + $0x90] sm:$0xff]
    %v821 = vld [vmem:[%s23 + $0x98] sm:$0xff]
    %v822 = vld [vmem:[%s23 + $0xa0] sm:$0xff]
    %v823 = vld [vmem:[%s23 + $0xa8] sm:$0xff]
    %v824 = vld [vmem:[%s23 + $0xb0] sm:$0xff]
    %v825 = vld [vmem:[%s23 + $0xb8] sm:$0xff]
    %v826 = vld [vmem:[%s23 + $0xc0] sm:$0xff]
    %v827 = vld [vmem:[%s23 + $0xc8] sm:$0xff]
    %v828 = vld [vmem:[%s23 + $0xd0] sm:$0xff]
    %v829 = vld [vmem:[%s23 + $0xd8] sm:$0xff]
    %v830 = vld [vmem:[%s23 + $0xe0] sm:$0xff]
    %v831 = vld [vmem:[%s23 + $0xe8] sm:$0xff]
    %v832 = vld [vmem:[%s23 + $0xf0] sm:$0xff]
    %v833 = vld [vmem:[%s23 + $0xf8] sm:$0xff]
    %v834 = vld [vmem:[#allocation10] sm:$0x1]
    %v836 = vlaneseq
    %v837 = vshrl.u32 %v836, 7
    %v838 = vsub.s32 0, %v837
    %v839 = vrot.slane %v834, %v838
    %841 = vmatprep.subr.mxu0 0.0
    %842 = vmatpush1.msra.mxu0 %v802
    %843 = vmatprep.subr.mxu0 0.0
    %844 = vmatpush1.msra.mxu0 %v803
    %845 = vmatprep.subr.mxu0 0.0
    %846 = vmatpush1.msra.mxu0 %v804
    %847 = vmatprep.subr.mxu0 0.0
    %848 = vmatpush1.msra.mxu0 %v805
    %849 = vmatprep.subr.mxu0 0.0
    %850 = vmatpush1.msra.mxu0 %v806
    %851 = vmatprep.subr.mxu0 0.0
    %852 = vmatpush1.msra.mxu0 %v807
    %853 = vmatprep.subr.mxu0 0.0
    %854 = vmatpush1.msra.mxu0 %v808
    %855 = vmatprep.subr.mxu0 0.0
    %856 = vmatpush1.msra.mxu0 %v809
    %857 = vmatprep.subr.mxu0 0.0
    %858 = vmatpush1.msra.mxu0 %v810
    %859 = vmatprep.subr.mxu0 0.0
    %860 = vmatpush1.msra.mxu0 %v811
    %861 = vmatprep.subr.mxu0 0.0
    %862 = vmatpush1.msra.mxu0 %v812
    %863 = vmatprep.subr.mxu0 0.0
    %864 = vmatpush1.msra.mxu0 %v813
    %865 = vmatprep.subr.mxu0 0.0
    %866 = vmatpush1.msra.mxu0 %v814
    %867 = vmatprep.subr.mxu0 0.0
    %868 = vmatpush1.msra.mxu0 %v815
    %869 = vmatprep.subr.mxu0 0.0
    %870 = vmatpush1.msra.mxu0 %v816
    %871 = vmatprep.subr.mxu0 0.0
    %872 = vmatpush1.msra.mxu0 %v817
    %873 = vmatprep.subr.mxu0 0.0
    %874 = vmatpush1.msra.mxu0 %v818
    %875 = vmatprep.subr.mxu0 0.0
    %876 = vmatpush1.msra.mxu0 %v819
    %877 = vmatprep.subr.mxu0 0.0
    %878 = vmatpush1.msra.mxu0 %v820
    %879 = vmatprep.subr.mxu0 0.0
    %880 = vmatpush1.msra.mxu0 %v821
    %881 = vmatprep.subr.mxu0 0.0
    %882 = vmatpush1.msra.mxu0 %v822
    %883 = vmatprep.subr.mxu0 0.0
    %884 = vmatpush1.msra.mxu0 %v823
    %885 = vmatprep.subr.mxu0 0.0
    %886 = vmatpush1.msra.mxu0 %v824
    %887 = vmatprep.subr.mxu0 0.0
    %888 = vmatpush1.msra.mxu0 %v825
    %889 = vmatprep.subr.mxu0 0.0
    %890 = vmatpush1.msra.mxu0 %v826
    %891 = vmatprep.subr.mxu0 0.0
    %892 = vmatpush1.msra.mxu0 %v827
    %893 = vmatprep.subr.mxu0 0.0
    %894 = vmatpush1.msra.mxu0 %v828
    %895 = vmatprep.subr.mxu0 0.0
    %896 = vmatpush1.msra.mxu0 %v829
    %897 = vmatprep.subr.mxu0 0.0
    %898 = vmatpush1.msra.mxu0 %v830
    %899 = vmatprep.subr.mxu0 0.0
    %900 = vmatpush1.msra.mxu0 %v831
    %901 = vmatprep.subr.mxu0 0.0
    %902 = vmatpush1.msra.mxu0 %v832
    %903 = vmatprep.subr.mxu0 0.0
    %904 = vmatpush1.msra.mxu0 %v833
    %905 = vmatprep.mubr.f32.mxu0 %v801
    %906 = vmatmul.mubr.f32.gmra.mrb[0].mxu0 %v800
    %v907 = vpop.f32.mrb[0].mxu0
    %v908 = vadd.f32 %v839, %v907
    %v909 = vpop.f32.mrb[0].mxu0
    %910 = vdwg.mxu0
    %v911 = vld [vmem:[#allocation12] sm:$0xff]
    %v912 = vld [vmem:[#allocation12 + $0x8] sm:$0xff]
    %v913 = vld [vmem:[#allocation12 + $0x10] sm:$0xff]
    %v914 = vld [vmem:[#allocation12 + $0x18] sm:$0xff]
    %v915 = vld [vmem:[#allocation12 + $0x20] sm:$0xff]
    %v916 = vld [vmem:[#allocation12 + $0x28] sm:$0xff]
    %v917 = vld [vmem:[#allocation12 + $0x30] sm:$0xff]
    %v918 = vld [vmem:[#allocation12 + $0x38] sm:$0xff]
    %v919 = vld [vmem:[#allocation12 + $0x40] sm:$0xff]
    %v920 = vld [vmem:[#allocation12 + $0x48] sm:$0xff]
    %v921 = vld [vmem:[#allocation12 + $0x50] sm:$0xff]
    %v922 = vld [vmem:[#allocation12 + $0x58] sm:$0xff]
    %v923 = vld [vmem:[#allocation12 + $0x60] sm:$0xff]
    %v924 = vld [vmem:[#allocation12 + $0x68] sm:$0xff]
    %v925 = vld [vmem:[#allocation12 + $0x70] sm:$0xff]
    %v926 = vld [vmem:[#allocation12 + $0x78] sm:$0xff]
    %v927 = vld [vmem:[#allocation12 + $0x80] sm:$0xff]
    %v928 = vld [vmem:[#allocation12 + $0x88] sm:$0xff]
    %v929 = vld [vmem:[#allocation12 + $0x90] sm:$0xff]
    %v930 = vld [vmem:[#allocation12 + $0x98] sm:$0xff]
    %v931 = vld [vmem:[#allocation12 + $0xa0] sm:$0xff]
    %v932 = vld [vmem:[#allocation12 + $0xa8] sm:$0xff]
    %v933 = vld [vmem:[#allocation12 + $0xb0] sm:$0xff]
    %v934 = vld [vmem:[#allocation12 + $0xb8] sm:$0xff]
    %v935 = vld [vmem:[#allocation12 + $0xc0] sm:$0xff]
    %v936 = vld [vmem:[#allocation12 + $0xc8] sm:$0xff]
    %v937 = vld [vmem:[#allocation12 + $0xd0] sm:$0xff]
    %v938 = vld [vmem:[#allocation12 + $0xd8] sm:$0xff]
    %v939 = vld [vmem:[#allocation12 + $0xe0] sm:$0xff]
    %v940 = vld [vmem:[#allocation12 + $0xe8] sm:$0xff]
    %v941 = vld [vmem:[#allocation12 + $0xf0] sm:$0xff]
    %v942 = vld [vmem:[#allocation12 + $0xf8] sm:$0xff]
    %v943 = vld [vmem:[#allocation13] sm:$0x1]
    %v945 = vlaneseq
    %v946 = vshrl.u32 %v945, 7
    %v947 = vsub.s32 0, %v946
    %v948 = vrot.slane %v943, %v947
    %950 = vmatprep.subr.mxu0 0.0
    %951 = vmatpush1.msra.mxu0 %v911
    %952 = vmatprep.subr.mxu0 0.0
    %953 = vmatpush1.msra.mxu0 %v912
    %954 = vmatprep.subr.mxu0 0.0
    %955 = vmatpush1.msra.mxu0 %v913
    %956 = vmatprep.subr.mxu0 0.0
    %957 = vmatpush1.msra.mxu0 %v914
    %958 = vmatprep.subr.mxu0 0.0
    %959 = vmatpush1.msra.mxu0 %v915
    %960 = vmatprep.subr.mxu0 0.0
    %961 = vmatpush1.msra.mxu0 %v916
    %962 = vmatprep.subr.mxu0 0.0
    %963 = vmatpush1.msra.mxu0 %v917
    %964 = vmatprep.subr.mxu0 0.0
    %965 = vmatpush1.msra.mxu0 %v918
    %966 = vmatprep.subr.mxu0 0.0
    %967 = vmatpush1.msra.mxu0 %v919
    %968 = vmatprep.subr.mxu0 0.0
    %969 = vmatpush1.msra.mxu0 %v920
    %970 = vmatprep.subr.mxu0 0.0
    %971 = vmatpush1.msra.mxu0 %v921
    %972 = vmatprep.subr.mxu0 0.0
    %973 = vmatpush1.msra.mxu0 %v922
    %974 = vmatprep.subr.mxu0 0.0
    %975 = vmatpush1.msra.mxu0 %v923
    %976 = vmatprep.subr.mxu0 0.0
    %977 = vmatpush1.msra.mxu0 %v924
    %978 = vmatprep.subr.mxu0 0.0
    %979 = vmatpush1.msra.mxu0 %v925
    %980 = vmatprep.subr.mxu0 0.0
    %981 = vmatpush1.msra.mxu0 %v926
    %982 = vmatprep.subr.mxu0 0.0
    %983 = vmatpush1.msra.mxu0 %v927
    %984 = vmatprep.subr.mxu0 0.0
    %985 = vmatpush1.msra.mxu0 %v928
    %986 = vmatprep.subr.mxu0 0.0
    %987 = vmatpush1.msra.mxu0 %v929
    %988 = vmatprep.subr.mxu0 0.0
    %989 = vmatpush1.msra.mxu0 %v930
    %990 = vmatprep.subr.mxu0 0.0
    %991 = vmatpush1.msra.mxu0 %v931
    %992 = vmatprep.subr.mxu0 0.0
    %993 = vmatpush1.msra.mxu0 %v932
    %994 = vmatprep.subr.mxu0 0.0
    %995 = vmatpush1.msra.mxu0 %v933
    %996 = vmatprep.subr.mxu0 0.0
    %997 = vmatpush1.msra.mxu0 %v934
    %998 = vmatprep.subr.mxu0 0.0
    %999 = vmatpush1.msra.mxu0 %v935
    %1000 = vmatprep.subr.mxu0 0.0
    %1001 = vmatpush1.msra.mxu0 %v936
    %1002 = vmatprep.subr.mxu0 0.0
    %1003 = vmatpush1.msra.mxu0 %v937
    %1004 = vmatprep.subr.mxu0 0.0
    %1005 = vmatpush1.msra.mxu0 %v938
    %1006 = vmatprep.subr.mxu0 0.0
    %1007 = vmatpush1.msra.mxu0 %v939
    %1008 = vmatprep.subr.mxu0 0.0
    %1009 = vmatpush1.msra.mxu0 %v940
    %1010 = vmatprep.subr.mxu0 0.0
    %1011 = vmatpush1.msra.mxu0 %v941
    %1012 = vmatprep.subr.mxu0 0.0
    %1013 = vmatpush1.msra.mxu0 %v942
    %1014 = vmatprep.mubr.f32.mxu0 %v801
    %1015 = vmatmul.mubr.f32.gmra.mrb[0].mxu0 %v800
    %v1016 = vpop.f32.mrb[0].mxu0
    %v1017 = vadd.f32 %v948, %v1016
    %v1018 = vpop.f32.mrb[0].mxu0
    %1019 = vdwg.mxu0
    %v1020 = vmul.f32 %v1017, 0.5
    %v1021 = vmul.f32 %v1020, 1.442695
    %v1022 = vpow.pop %v1021
    %v1023 = vld [vmem:[%s9] sm:$0xff]
    %v1024 = vmul.f32 %v1022, %v1023
    %v1025 = vadd.f32 %v908, %v1024
    %v1026 = vld [vmem:[#allocation15] sm:$0xff]
    %v1027 = vld [vmem:[#allocation15 + $0x8] sm:$0xff]
    %v1028 = vld [vmem:[#allocation15 + $0x10] sm:$0xff]
    %v1029 = vld [vmem:[#allocation15 + $0x18] sm:$0xff]
    %v1030 = vld [vmem:[#allocation15 + $0x20] sm:$0xff]
    %v1031 = vld [vmem:[#allocation15 + $0x28] sm:$0xff]
    %v1032 = vld [vmem:[#allocation15 + $0x30] sm:$0xff]
    %v1033 = vld [vmem:[#allocation15 + $0x38] sm:$0xff]
    %v1034 = vld [vmem:[#allocation15 + $0x40] sm:$0xff]
    %v1035 = vld [vmem:[#allocation15 + $0x48] sm:$0xff]
    %v1036 = vld [vmem:[#allocation15 + $0x50] sm:$0xff]
    %v1037 = vld [vmem:[#allocation15 + $0x58] sm:$0xff]
    %v1038 = vld [vmem:[#allocation15 + $0x60] sm:$0xff]
    %v1039 = vld [vmem:[#allocation15 + $0x68] sm:$0xff]
    %v1040 = vld [vmem:[#allocation15 + $0x70] sm:$0xff]
    %v1041 = vld [vmem:[#allocation15 + $0x78] sm:$0xff]
    %v1042 = vld [vmem:[#allocation15 + $0x80] sm:$0xff]
    %v1043 = vld [vmem:[#allocation15 + $0x88] sm:$0xff]
    %v1044 = vld [vmem:[#allocation15 + $0x90] sm:$0xff]
    %v1045 = vld [vmem:[#allocation15 + $0x98] sm:$0xff]
    %v1046 = vld [vmem:[#allocation15 + $0xa0] sm:$0xff]
    %v1047 = vld [vmem:[#allocation15 + $0xa8] sm:$0xff]
    %v1048 = vld [vmem:[#allocation15 + $0xb0] sm:$0xff]
    %v1049 = vld [vmem:[#allocation15 + $0xb8] sm:$0xff]
    %v1050 = vld [vmem:[#allocation15 + $0xc0] sm:$0xff]
    %v1051 = vld [vmem:[#allocation15 + $0xc8] sm:$0xff]
    %v1052 = vld [vmem:[#allocation15 + $0xd0] sm:$0xff]
    %v1053 = vld [vmem:[#allocation15 + $0xd8] sm:$0xff]
    %v1054 = vld [vmem:[#allocation15 + $0xe0] sm:$0xff]
    %v1055 = vld [vmem:[#allocation15 + $0xe8] sm:$0xff]
    %v1056 = vld [vmem:[#allocation15 + $0xf0] sm:$0xff]
    %v1057 = vld [vmem:[#allocation15 + $0xf8] sm:$0xff]
    %v1058 = vld [vmem:[#allocation16] sm:$0x3]
    %v1060 = vlaneseq
    %v1061 = vshrl.u32 %v1060, 7
    %v1062 = vsub.s32 0, %v1061
    %v1063 = vrot.slane %v1058, %v1062
    %v1064 = vlaneseq
    %v1065 = vshrl.u32 %v1064, 7
    %v1066 = vsub.s32 1, %v1065
    %v1067 = vrot.slane %v1058, %v1066
    %1070 = vmatprep.subr.mxu0 %v1027
    %1071 = vmatpush1.msra.mxu0 %v1026
    %1072 = vmatprep.subr.mxu0 %v1029
    %1073 = vmatpush1.msra.mxu0 %v1028
    %1074 = vmatprep.subr.mxu0 %v1031
    %1075 = vmatpush1.msra.mxu0 %v1030
    %1076 = vmatprep.subr.mxu0 %v1033
    %1077 = vmatpush1.msra.mxu0 %v1032
    %1078 = vmatprep.subr.mxu0 %v1035
    %1079 = vmatpush1.msra.mxu0 %v1034
    %1080 = vmatprep.subr.mxu0 %v1037
    %1081 = vmatpush1.msra.mxu0 %v1036
    %1082 = vmatprep.subr.mxu0 %v1039
    %1083 = vmatpush1.msra.mxu0 %v1038
    %1084 = vmatprep.subr.mxu0 %v1041
    %1085 = vmatpush1.msra.mxu0 %v1040
    %1086 = vmatprep.subr.mxu0 %v1043
    %1087 = vmatpush1.msra.mxu0 %v1042
    %1088 = vmatprep.subr.mxu0 %v1045
    %1089 = vmatpush1.msra.mxu0 %v1044
    %1090 = vmatprep.subr.mxu0 %v1047
    %1091 = vmatpush1.msra.mxu0 %v1046
    %1092 = vmatprep.subr.mxu0 %v1049
    %1093 = vmatpush1.msra.mxu0 %v1048
    %1094 = vmatprep.subr.mxu0 %v1051
    %1095 = vmatpush1.msra.mxu0 %v1050
    %1096 = vmatprep.subr.mxu0 %v1053
    %1097 = vmatpush1.msra.mxu0 %v1052
    %1098 = vmatprep.subr.mxu0 %v1055
    %1099 = vmatpush1.msra.mxu0 %v1054
    %1100 = vmatprep.subr.mxu0 %v1057
    %1101 = vmatpush1.msra.mxu0 %v1056
    %1102 = vmatprep.subr.mxu0 0.0
    %1103 = vmatpush1.msra.mxu0 0.0
    %1104 = vmatprep.subr.mxu0 0.0
    %1105 = vmatpush1.msra.mxu0 0.0
    %1106 = vmatprep.subr.mxu0 0.0
    %1107 = vmatpush1.msra.mxu0 0.0
    %1108 = vmatprep.subr.mxu0 0.0
    %1109 = vmatpush1.msra.mxu0 0.0
    %1110 = vmatprep.subr.mxu0 0.0
    %1111 = vmatpush1.msra.mxu0 0.0
    %1112 = vmatprep.subr.mxu0 0.0
    %1113 = vmatpush1.msra.mxu0 0.0
    %1114 = vmatprep.subr.mxu0 0.0
    %1115 = vmatpush1.msra.mxu0 0.0
    %1116 = vmatprep.subr.mxu0 0.0
    %1117 = vmatpush1.msra.mxu0 0.0
    %1118 = vmatprep.subr.mxu0 0.0
    %1119 = vmatpush1.msra.mxu0 0.0
    %1120 = vmatprep.subr.mxu0 0.0
    %1121 = vmatpush1.msra.mxu0 0.0
    %1122 = vmatprep.subr.mxu0 0.0
    %1123 = vmatpush1.msra.mxu0 0.0
    %1124 = vmatprep.subr.mxu0 0.0
    %1125 = vmatpush1.msra.mxu0 0.0
    %1126 = vmatprep.subr.mxu0 0.0
    %1127 = vmatpush1.msra.mxu0 0.0
    %1128 = vmatprep.subr.mxu0 0.0
    %1129 = vmatpush1.msra.mxu0 0.0
    %1130 = vmatprep.subr.mxu0 0.0
    %1131 = vmatpush1.msra.mxu0 0.0
    %1132 = vmatprep.subr.mxu0 0.0
    %1133 = vmatpush1.msra.mxu0 0.0
    %1134 = vmatprep.mubr.f32.mxu0 0.0
    %1135 = vmatmul.mubr.f32.gmra.mrb[0].mxu0 %v1025
    %v1136 = vpop.f32.mrb[0].mxu0
    %v1137 = vadd.f32 %v1063, %v1136
    %v1138 = vpop.f32.mrb[0].mxu0
    %v1139 = vadd.f32 %v1067, %v1138
    %1140 = vdwg.mxu0
    %1141 = vst [vmem:[#allocation33] sm:$0xff] %v1137
    %1142 = vst [vmem:[#allocation33 + $0x8] sm:$0xff] %v1139
    %1143 = vst [vmem:[#allocation34] sm:$0xff] %v908
    %1144 = vst [vmem:[#allocation36] sm:$0xff] %v1017
    %v1145 = vld [vmem:[#allocation18] sm:$0xff]
    %v1146 = vld [vmem:[#allocation18 + $0x8] sm:$0xff]
    %v1147 = vld [vmem:[#allocation18 + $0x10] sm:$0xff]
    %v1148 = vld [vmem:[#allocation18 + $0x18] sm:$0xff]
    %v1149 = vld [vmem:[#allocation18 + $0x20] sm:$0xff]
    %v1150 = vld [vmem:[#allocation18 + $0x28] sm:$0xff]
    %v1151 = vld [vmem:[#allocation18 + $0x30] sm:$0xff]
    %v1152 = vld [vmem:[#allocation18 + $0x38] sm:$0xff]
    %v1153 = vld [vmem:[#allocation18 + $0x40] sm:$0xff]
    %v1154 = vld [vmem:[#allocation18 + $0x48] sm:$0xff]
    %v1155 = vld [vmem:[#allocation18 + $0x50] sm:$0xff]
    %v1156 = vld [vmem:[#allocation18 + $0x58] sm:$0xff]
    %v1157 = vld [vmem:[#allocation18 + $0x60] sm:$0xff]
    %v1158 = vld [vmem:[#allocation18 + $0x68] sm:$0xff]
    %v1159 = vld [vmem:[#allocation18 + $0x70] sm:$0xff]
    %v1160 = vld [vmem:[#allocation18 + $0x78] sm:$0xff]
    %v1161 = vld [vmem:[#allocation18 + $0x80] sm:$0xff]
    %v1162 = vld [vmem:[#allocation18 + $0x88] sm:$0xff]
    %v1163 = vld [vmem:[#allocation18 + $0x90] sm:$0xff]
    %v1164 = vld [vmem:[#allocation18 + $0x98] sm:$0xff]
    %v1165 = vld [vmem:[#allocation18 + $0xa0] sm:$0xff]
    %v1166 = vld [vmem:[#allocation18 + $0xa8] sm:$0xff]
    %v1167 = vld [vmem:[#allocation18 + $0xb0] sm:$0xff]
    %v1168 = vld [vmem:[#allocation18 + $0xb8] sm:$0xff]
    %v1169 = vld [vmem:[#allocation18 + $0xc0] sm:$0xff]
    %v1170 = vld [vmem:[#allocation18 + $0xc8] sm:$0xff]
    %v1171 = vld [vmem:[#allocation18 + $0xd0] sm:$0xff]
    %v1172 = vld [vmem:[#allocation18 + $0xd8] sm:$0xff]
    %v1173 = vld [vmem:[#allocation18 + $0xe0] sm:$0xff]
    %v1174 = vld [vmem:[#allocation18 + $0xe8] sm:$0xff]
    %v1175 = vld [vmem:[#allocation18 + $0xf0] sm:$0xff]
    %v1176 = vld [vmem:[#allocation18 + $0xf8] sm:$0xff]
    %v1177 = vld [vmem:[#allocation18 + $0x100] sm:$0xff]
    %v1178 = vld [vmem:[#allocation18 + $0x108] sm:$0xff]
    %v1179 = vld [vmem:[#allocation18 + $0x110] sm:$0xff]
    %v1180 = vld [vmem:[#allocation18 + $0x118] sm:$0xff]
    %v1181 = vld [vmem:[#allocation18 + $0x120] sm:$0xff]
    %v1182 = vld [vmem:[#allocation18 + $0x128] sm:$0xff]
    %v1183 = vld [vmem:[#allocation18 + $0x130] sm:$0xff]
    %v1184 = vld [vmem:[#allocation18 + $0x138] sm:$0xff]
    %v1185 = vld [vmem:[#allocation18 + $0x140] sm:$0xff]
    %v1186 = vld [vmem:[#allocation18 + $0x148] sm:$0xff]
    %v1187 = vld [vmem:[#allocation18 + $0x150] sm:$0xff]
    %v1188 = vld [vmem:[#allocation18 + $0x158] sm:$0xff]
    %v1189 = vld [vmem:[#allocation18 + $0x160] sm:$0xff]
    %v1190 = vld [vmem:[#allocation18 + $0x168] sm:$0xff]
    %v1191 = vld [vmem:[#allocation18 + $0x170] sm:$0xff]
    %v1192 = vld [vmem:[#allocation18 + $0x178] sm:$0xff]
    %v1193 = vld [vmem:[#allocation18 + $0x180] sm:$0xff]
    %v1194 = vld [vmem:[#allocation18 + $0x188] sm:$0xff]
    %v1195 = vld [vmem:[#allocation18 + $0x190] sm:$0xff]
    %v1196 = vld [vmem:[#allocation18 + $0x198] sm:$0xff]
    %v1197 = vld [vmem:[#allocation18 + $0x1a0] sm:$0xff]
    %v1198 = vld [vmem:[#allocation18 + $0x1a8] sm:$0xff]
    %v1199 = vld [vmem:[#allocation18 + $0x1b0] sm:$0xff]
    %v1200 = vld [vmem:[#allocation18 + $0x1b8] sm:$0xff]
    %v1201 = vld [vmem:[#allocation18 + $0x1c0] sm:$0xff]
    %v1202 = vld [vmem:[#allocation18 + $0x1c8] sm:$0xff]
    %v1203 = vld [vmem:[#allocation18 + $0x1d0] sm:$0xff]
    %v1204 = vld [vmem:[#allocation18 + $0x1d8] sm:$0xff]
    %v1205 = vld [vmem:[#allocation18 + $0x1e0] sm:$0xff]
    %v1206 = vld [vmem:[#allocation18 + $0x1e8] sm:$0xff]
    %v1207 = vld [vmem:[#allocation18 + $0x1f0] sm:$0xff]
    %v1208 = vld [vmem:[#allocation18 + $0x1f8] sm:$0xff]
    %v1209 = vld [vmem:[%s37] sm:$0x3]
    %v1211 = vlaneseq
    %v1212 = vshrl.u32 %v1211, 7
    %v1213 = vsub.s32 0, %v1212
    %v1214 = vrot.slane %v1209, %v1213
    %v1215 = vlaneseq
    %v1216 = vshrl.u32 %v1215, 7
    %v1217 = vsub.s32 1, %v1216
    %v1218 = vrot.slane %v1209, %v1217
    %1221 = vmatprep.subr.mxu0 %v1146
    %1222 = vmatpush1.msra.mxu0 %v1145
    %1223 = vmatprep.subr.mxu0 %v1148
    %1224 = vmatpush1.msra.mxu0 %v1147
    %1225 = vmatprep.subr.mxu0 %v1150
    %1226 = vmatpush1.msra.mxu0 %v1149
    %1227 = vmatprep.subr.mxu0 %v1152
    %1228 = vmatpush1.msra.mxu0 %v1151
    %1229 = vmatprep.subr.mxu0 %v1154
    %1230 = vmatpush1.msra.mxu0 %v1153
    %1231 = vmatprep.subr.mxu0 %v1156
    %1232 = vmatpush1.msra.mxu0 %v1155
    %1233 = vmatprep.subr.mxu0 %v1158
    %1234 = vmatpush1.msra.mxu0 %v1157
    %1235 = vmatprep.subr.mxu0 %v1160
    %1236 = vmatpush1.msra.mxu0 %v1159
    %1237 = vmatprep.subr.mxu0 %v1162
    %1238 = vmatpush1.msra.mxu0 %v1161
    %1239 = vmatprep.subr.mxu0 %v1164
    %1240 = vmatpush1.msra.mxu0 %v1163
    %1241 = vmatprep.subr.mxu0 %v1166
    %1242 = vmatpush1.msra.mxu0 %v1165
    %1243 = vmatprep.subr.mxu0 %v1168
    %1244 = vmatpush1.msra.mxu0 %v1167
    %1245 = vmatprep.subr.mxu0 %v1170
    %1246 = vmatpush1.msra.mxu0 %v1169
    %1247 = vmatprep.subr.mxu0 %v1172
    %1248 = vmatpush1.msra.mxu0 %v1171
    %1249 = vmatprep.subr.mxu0 %v1174
    %1250 = vmatpush1.msra.mxu0 %v1173
    %1251 = vmatprep.subr.mxu0 %v1176
    %1252 = vmatpush1.msra.mxu0 %v1175
    %1253 = vmatprep.subr.mxu0 %v1178
    %1254 = vmatpush1.msra.mxu0 %v1177
    %1255 = vmatprep.subr.mxu0 %v1180
    %1256 = vmatpush1.msra.mxu0 %v1179
    %1257 = vmatprep.subr.mxu0 %v1182
    %1258 = vmatpush1.msra.mxu0 %v1181
    %1259 = vmatprep.subr.mxu0 %v1184
    %1260 = vmatpush1.msra.mxu0 %v1183
    %1261 = vmatprep.subr.mxu0 %v1186
    %1262 = vmatpush1.msra.mxu0 %v1185
    %1263 = vmatprep.subr.mxu0 %v1188
    %1264 = vmatpush1.msra.mxu0 %v1187
    %1265 = vmatprep.subr.mxu0 %v1190
    %1266 = vmatpush1.msra.mxu0 %v1189
    %1267 = vmatprep.subr.mxu0 %v1192
    %1268 = vmatpush1.msra.mxu0 %v1191
    %1269 = vmatprep.subr.mxu0 %v1194
    %1270 = vmatpush1.msra.mxu0 %v1193
    %1271 = vmatprep.subr.mxu0 %v1196
    %1272 = vmatpush1.msra.mxu0 %v1195
    %1273 = vmatprep.subr.mxu0 %v1198
    %1274 = vmatpush1.msra.mxu0 %v1197
    %1275 = vmatprep.subr.mxu0 %v1200
    %1276 = vmatpush1.msra.mxu0 %v1199
    %1277 = vmatprep.subr.mxu0 %v1202
    %1278 = vmatpush1.msra.mxu0 %v1201
    %1279 = vmatprep.subr.mxu0 %v1204
    %1280 = vmatpush1.msra.mxu0 %v1203
    %1281 = vmatprep.subr.mxu0 %v1206
    %1282 = vmatpush1.msra.mxu0 %v1205
    %1283 = vmatprep.subr.mxu0 %v1208
    %1284 = vmatpush1.msra.mxu0 %v1207
    %1285 = vmatprep.mubr.f32.mxu0 %v650
    %1286 = vmatmul.mubr.f32.gmra.mrb[0].mxu0 %v566
    %v1287 = vpop.f32.mrb[0].mxu0
    %v1288 = vadd.f32 %v1214, %v1287
    %v1289 = vpop.f32.mrb[0].mxu0
    %v1290 = vadd.f32 %v1218, %v1289
    %1291 = vdwg.mxu0
    %v1292 = vmax.f32 %v1288, %v1290
    %1293 = vmax.xlane.f32.xlu0 %v1292
    %v1294 = vpop.xlane.xlu0 %1293
    %v1295 = vsub.f32 %v1288, %v1294
    %v1296 = vsub.f32 %v1290, %v1294
    %v1297 = vmul.f32 %v1295, 1.442695
    %v1298 = vpow.pop %v1297
    %v1299 = vmul.f32 %v1296, 1.442695
    %v1300 = vpow.pop %v1299
    %v1301 = vadd.f32 %v1298, %v1300
    %1302 = vadd.xlane.f32.xlu0 %v1301
    %v1303 = vpop.xlane.xlu0 %1302
    %v1304 = vrcp.pop %v1303
    %v1305 = vmul.f32 %v1298, %v1304
    %v1306 = vmul.f32 %v1300, %v1304
    %v1307 = vmul.f32 %v1305, %v566
    %v1308 = vmul.f32 %v1306, %v650
    %v1309 = vld [vmem:[#allocation19] sm:$0xff]
    %v1310 = vld [vmem:[#allocation19 + $0x8] sm:$0xff]
    %v1311 = vld [vmem:[#allocation19 + $0x10] sm:$0xff]
    %v1312 = vld [vmem:[#allocation19 + $0x18] sm:$0xff]
    %v1313 = vld [vmem:[#allocation19 + $0x20] sm:$0xff]
    %v1314 = vld [vmem:[#allocation19 + $0x28] sm:$0xff]
    %v1315 = vld [vmem:[#allocation19 + $0x30] sm:$0xff]
    %v1316 = vld [vmem:[#allocation19 + $0x38] sm:$0xff]
    %v1317 = vld [vmem:[#allocation19 + $0x40] sm:$0xff]
    %v1318 = vld [vmem:[#allocation19 + $0x48] sm:$0xff]
    %v1319 = vld [vmem:[#allocation19 + $0x50] sm:$0xff]
    %v1320 = vld [vmem:[#allocation19 + $0x58] sm:$0xff]
    %v1321 = vld [vmem:[#allocation19 + $0x60] sm:$0xff]
    %v1322 = vld [vmem:[#allocation19 + $0x68] sm:$0xff]
    %v1323 = vld [vmem:[#allocation19 + $0x70] sm:$0xff]
    %v1324 = vld [vmem:[#allocation19 + $0x78] sm:$0xff]
    %v1325 = vld [vmem:[#allocation19 + $0x80] sm:$0xff]
    %v1326 = vld [vmem:[#allocation19 + $0x88] sm:$0xff]
    %v1327 = vld [vmem:[#allocation19 + $0x90] sm:$0xff]
    %v1328 = vld [vmem:[#allocation19 + $0x98] sm:$0xff]
    %v1329 = vld [vmem:[#allocation19 + $0xa0] sm:$0xff]
    %v1330 = vld [vmem:[#allocation19 + $0xa8] sm:$0xff]
    %v1331 = vld [vmem:[#allocation19 + $0xb0] sm:$0xff]
    %v1332 = vld [vmem:[#allocation19 + $0xb8] sm:$0xff]
    %v1333 = vld [vmem:[#allocation19 + $0xc0] sm:$0xff]
    %v1334 = vld [vmem:[#allocation19 + $0xc8] sm:$0xff]
    %v1335 = vld [vmem:[#allocation19 + $0xd0] sm:$0xff]
    %v1336 = vld [vmem:[#allocation19 + $0xd8] sm:$0xff]
    %v1337 = vld [vmem:[#allocation19 + $0xe0] sm:$0xff]
    %v1338 = vld [vmem:[#allocation19 + $0xe8] sm:$0xff]
    %v1339 = vld [vmem:[#allocation19 + $0xf0] sm:$0xff]
    %v1340 = vld [vmem:[#allocation19 + $0xf8] sm:$0xff]
    %v1341 = vld [vmem:[#allocation19 + $0x100] sm:$0xff]
    %v1342 = vld [vmem:[#allocation19 + $0x108] sm:$0xff]
    %v1343 = vld [vmem:[#allocation19 + $0x110] sm:$0xff]
    %v1344 = vld [vmem:[#allocation19 + $0x118] sm:$0xff]
    %v1345 = vld [vmem:[#allocation19 + $0x120] sm:$0xff]
    %v1346 = vld [vmem:[#allocation19 + $0x128] sm:$0xff]
    %v1347 = vld [vmem:[#allocation19 + $0x130] sm:$0xff]
    %v1348 = vld [vmem:[#allocation19 + $0x138] sm:$0xff]
    %v1349 = vld [vmem:[#allocation19 + $0x140] sm:$0xff]
    %v1350 = vld [vmem:[#allocation19 + $0x148] sm:$0xff]
    %v1351 = vld [vmem:[#allocation19 + $0x150] sm:$0xff]
    %v1352 = vld [vmem:[#allocation19 + $0x158] sm:$0xff]
    %v1353 = vld [vmem:[#allocation19 + $0x160] sm:$0xff]
    %v1354 = vld [vmem:[#allocation19 + $0x168] sm:$0xff]
    %v1355 = vld [vmem:[#allocation19 + $0x170] sm:$0xff]
    %v1356 = vld [vmem:[#allocation19 + $0x178] sm:$0xff]
    %v1357 = vld [vmem:[#allocation19 + $0x180] sm:$0xff]
    %v1358 = vld [vmem:[#allocation19 + $0x188] sm:$0xff]
    %v1359 = vld [vmem:[#allocation19 + $0x190] sm:$0xff]
    %v1360 = vld [vmem:[#allocation19 + $0x198] sm:$0xff]
    %v1361 = vld [vmem:[#allocation19 + $0x1a0] sm:$0xff]
    %v1362 = vld [vmem:[#allocation19 + $0x1a8] sm:$0xff]
    %v1363 = vld [vmem:[#allocation19 + $0x1b0] sm:$0xff]
    %v1364 = vld [vmem:[#allocation19 + $0x1b8] sm:$0xff]
    %v1365 = vld [vmem:[#allocation19 + $0x1c0] sm:$0xff]
    %v1366 = vld [vmem:[#allocation19 + $0x1c8] sm:$0xff]
    %v1367 = vld [vmem:[#allocation19 + $0x1d0] sm:$0xff]
    %v1368 = vld [vmem:[#allocation19 + $0x1d8] sm:$0xff]
    %v1369 = vld [vmem:[#allocation19 + $0x1e0] sm:$0xff]
    %v1370 = vld [vmem:[#allocation19 + $0x1e8] sm:$0xff]
    %v1371 = vld [vmem:[#allocation19 + $0x1f0] sm:$0xff]
    %v1372 = vld [vmem:[#allocation19 + $0x1f8] sm:$0xff]
    %v1373 = vld [vmem:[%s41] sm:$0x3]
    %v1375 = vlaneseq
    %v1376 = vshrl.u32 %v1375, 7
    %v1377 = vsub.s32 0, %v1376
    %v1378 = vrot.slane %v1373, %v1377
    %v1379 = vlaneseq
    %v1380 = vshrl.u32 %v1379, 7
    %v1381 = vsub.s32 1, %v1380
    %v1382 = vrot.slane %v1373, %v1381
    %1385 = vmatprep.subr.mxu0 %v1310
    %1386 = vmatpush1.msra.mxu0 %v1309
    %1387 = vmatprep.subr.mxu0 %v1312
    %1388 = vmatpush1.msra.mxu0 %v1311
    %1389 = vmatprep.subr.mxu0 %v1314
    %1390 = vmatpush1.msra.mxu0 %v1313
    %1391 = vmatprep.subr.mxu0 %v1316
    %1392 = vmatpush1.msra.mxu0 %v1315
    %1393 = vmatprep.subr.mxu0 %v1318
    %1394 = vmatpush1.msra.mxu0 %v1317
    %1395 = vmatprep.subr.mxu0 %v1320
    %1396 = vmatpush1.msra.mxu0 %v1319
    %1397 = vmatprep.subr.mxu0 %v1322
    %1398 = vmatpush1.msra.mxu0 %v1321
    %1399 = vmatprep.subr.mxu0 %v1324
    %1400 = vmatpush1.msra.mxu0 %v1323
    %1401 = vmatprep.subr.mxu0 %v1326
    %1402 = vmatpush1.msra.mxu0 %v1325
    %1403 = vmatprep.subr.mxu0 %v1328
    %1404 = vmatpush1.msra.mxu0 %v1327
    %1405 = vmatprep.subr.mxu0 %v1330
    %1406 = vmatpush1.msra.mxu0 %v1329
    %1407 = vmatprep.subr.mxu0 %v1332
    %1408 = vmatpush1.msra.mxu0 %v1331
    %1409 = vmatprep.subr.mxu0 %v1334
    %1410 = vmatpush1.msra.mxu0 %v1333
    %1411 = vmatprep.subr.mxu0 %v1336
    %1412 = vmatpush1.msra.mxu0 %v1335
    %1413 = vmatprep.subr.mxu0 %v1338
    %1414 = vmatpush1.msra.mxu0 %v1337
    %1415 = vmatprep.subr.mxu0 %v1340
    %1416 = vmatpush1.msra.mxu0 %v1339
    %1417 = vmatprep.subr.mxu0 %v1342
    %1418 = vmatpush1.msra.mxu0 %v1341
    %1419 = vmatprep.subr.mxu0 %v1344
    %1420 = vmatpush1.msra.mxu0 %v1343
    %1421 = vmatprep.subr.mxu0 %v1346
    %1422 = vmatpush1.msra.mxu0 %v1345
    %1423 = vmatprep.subr.mxu0 %v1348
    %1424 = vmatpush1.msra.mxu0 %v1347
    %1425 = vmatprep.subr.mxu0 %v1350
    %1426 = vmatpush1.msra.mxu0 %v1349
    %1427 = vmatprep.subr.mxu0 %v1352
    %1428 = vmatpush1.msra.mxu0 %v1351
    %1429 = vmatprep.subr.mxu0 %v1354
    %1430 = vmatpush1.msra.mxu0 %v1353
    %1431 = vmatprep.subr.mxu0 %v1356
    %1432 = vmatpush1.msra.mxu0 %v1355
    %1433 = vmatprep.subr.mxu0 %v1358
    %1434 = vmatpush1.msra.mxu0 %v1357
    %1435 = vmatprep.subr.mxu0 %v1360
    %1436 = vmatpush1.msra.mxu0 %v1359
    %1437 = vmatprep.subr.mxu0 %v1362
    %1438 = vmatpush1.msra.mxu0 %v1361
    %1439 = vmatprep.subr.mxu0 %v1364
    %1440 = vmatpush1.msra.mxu0 %v1363
    %1441 = vmatprep.subr.mxu0 %v1366
    %1442 = vmatpush1.msra.mxu0 %v1365
    %1443 = vmatprep.subr.mxu0 %v1368
    %1444 = vmatpush1.msra.mxu0 %v1367
    %1445 = vmatprep.subr.mxu0 %v1370
    %1446 = vmatpush1.msra.mxu0 %v1369
    %1447 = vmatprep.subr.mxu0 %v1372
    %1448 = vmatpush1.msra.mxu0 %v1371
    %1449 = vmatprep.mubr.f32.mxu0 %v1308
    %1450 = vmatmul.mubr.f32.gmra.mrb[0].mxu0 %v1307
    %v1451 = vpop.f32.mrb[0].mxu0
    %v1452 = vadd.f32 %v1378, %v1451
    %v1453 = vpop.f32.mrb[0].mxu0
    %v1454 = vadd.f32 %v1382, %v1453
    %1455 = vdwg.mxu0
    %v1456 = vld [vmem:[#allocation21] sm:$0xff]
    %v1457 = vld [vmem:[#allocation21 + $0x8] sm:$0xff]
    %v1458 = vld [vmem:[#allocation21 + $0x10] sm:$0xff]
    %v1459 = vld [vmem:[#allocation21 + $0x18] sm:$0xff]
    %v1460 = vld [vmem:[#allocation21 + $0x20] sm:$0xff]
    %v1461 = vld [vmem:[#allocation21 + $0x28] sm:$0xff]
    %v1462 = vld [vmem:[#allocation21 + $0x30] sm:$0xff]
    %v1463 = vld [vmem:[#allocation21 + $0x38] sm:$0xff]
    %v1464 = vld [vmem:[#allocation21 + $0x40] sm:$0xff]
    %v1465 = vld [vmem:[#allocation21 + $0x48] sm:$0xff]
    %v1466 = vld [vmem:[#allocation21 + $0x50] sm:$0xff]
    %v1467 = vld [vmem:[#allocation21 + $0x58] sm:$0xff]
    %v1468 = vld [vmem:[#allocation21 + $0x60] sm:$0xff]
    %v1469 = vld [vmem:[#allocation21 + $0x68] sm:$0xff]
    %v1470 = vld [vmem:[#allocation21 + $0x70] sm:$0xff]
    %v1471 = vld [vmem:[#allocation21 + $0x78] sm:$0xff]
    %v1472 = vld [vmem:[#allocation21 + $0x80] sm:$0xff]
    %v1473 = vld [vmem:[#allocation21 + $0x88] sm:$0xff]
    %v1474 = vld [vmem:[#allocation21 + $0x90] sm:$0xff]
    %v1475 = vld [vmem:[#allocation21 + $0x98] sm:$0xff]
    %v1476 = vld [vmem:[#allocation21 + $0xa0] sm:$0xff]
    %v1477 = vld [vmem:[#allocation21 + $0xa8] sm:$0xff]
    %v1478 = vld [vmem:[#allocation21 + $0xb0] sm:$0xff]
    %v1479 = vld [vmem:[#allocation21 + $0xb8] sm:$0xff]
    %v1480 = vld [vmem:[#allocation21 + $0xc0] sm:$0xff]
    %v1481 = vld [vmem:[#allocation21 + $0xc8] sm:$0xff]
    %v1482 = vld [vmem:[#allocation21 + $0xd0] sm:$0xff]
    %v1483 = vld [vmem:[#allocation21 + $0xd8] sm:$0xff]
    %v1484 = vld [vmem:[#allocation21 + $0xe0] sm:$0xff]
    %v1485 = vld [vmem:[#allocation21 + $0xe8] sm:$0xff]
    %v1486 = vld [vmem:[#allocation21 + $0xf0] sm:$0xff]
    %v1487 = vld [vmem:[#allocation21 + $0xf8] sm:$0xff]
    %v1488 = vld [vmem:[#allocation21 + $0x100] sm:$0xff]
    %v1489 = vld [vmem:[#allocation21 + $0x108] sm:$0xff]
    %v1490 = vld [vmem:[#allocation21 + $0x110] sm:$0xff]
    %v1491 = vld [vmem:[#allocation21 + $0x118] sm:$0xff]
    %v1492 = vld [vmem:[#allocation21 + $0x120] sm:$0xff]
    %v1493 = vld [vmem:[#allocation21 + $0x128] sm:$0xff]
    %v1494 = vld [vmem:[#allocation21 + $0x130] sm:$0xff]
    %v1495 = vld [vmem:[#allocation21 + $0x138] sm:$0xff]
    %v1496 = vld [vmem:[#allocation21 + $0x140] sm:$0xff]
    %v1497 = vld [vmem:[#allocation21 + $0x148] sm:$0xff]
    %v1498 = vld [vmem:[#allocation21 + $0x150] sm:$0xff]
    %v1499 = vld [vmem:[#allocation21 + $0x158] sm:$0xff]
    %v1500 = vld [vmem:[#allocation21 + $0x160] sm:$0xff]
    %v1501 = vld [vmem:[#allocation21 + $0x168] sm:$0xff]
    %v1502 = vld [vmem:[#allocation21 + $0x170] sm:$0xff]
    %v1503 = vld [vmem:[#allocation21 + $0x178] sm:$0xff]
    %v1504 = vld [vmem:[#allocation21 + $0x180] sm:$0xff]
    %v1505 = vld [vmem:[#allocation21 + $0x188] sm:$0xff]
    %v1506 = vld [vmem:[#allocation21 + $0x190] sm:$0xff]
    %v1507 = vld [vmem:[#allocation21 + $0x198] sm:$0xff]
    %v1508 = vld [vmem:[#allocation21 + $0x1a0] sm:$0xff]
    %v1509 = vld [vmem:[#allocation21 + $0x1a8] sm:$0xff]
    %v1510 = vld [vmem:[#allocation21 + $0x1b0] sm:$0xff]
    %v1511 = vld [vmem:[#allocation21 + $0x1b8] sm:$0xff]
    %v1512 = vld [vmem:[#allocation21 + $0x1c0] sm:$0xff]
    %v1513 = vld [vmem:[#allocation21 + $0x1c8] sm:$0xff]
    %v1514 = vld [vmem:[#allocation21 + $0x1d0] sm:$0xff]
    %v1515 = vld [vmem:[#allocation21 + $0x1d8] sm:$0xff]
    %v1516 = vld [vmem:[#allocation21 + $0x1e0] sm:$0xff]
    %v1517 = vld [vmem:[#allocation21 + $0x1e8] sm:$0xff]
    %v1518 = vld [vmem:[#allocation21 + $0x1f0] sm:$0xff]
    %v1519 = vld [vmem:[#allocation21 + $0x1f8] sm:$0xff]
    %v1520 = vld [vmem:[%s45] sm:$0x3]
    %v1522 = vlaneseq
    %v1523 = vshrl.u32 %v1522, 7
    %v1524 = vsub.s32 0, %v1523
    %v1525 = vrot.slane %v1520, %v1524
    %v1526 = vlaneseq
    %v1527 = vshrl.u32 %v1526, 7
    %v1528 = vsub.s32 1, %v1527
    %v1529 = vrot.slane %v1520, %v1528
    %1532 = vmatprep.subr.mxu0 %v1457
    %1533 = vmatpush1.msra.mxu0 %v1456
    %1534 = vmatprep.subr.mxu0 %v1459
    %1535 = vmatpush1.msra.mxu0 %v1458
    %1536 = vmatprep.subr.mxu0 %v1461
    %1537 = vmatpush1.msra.mxu0 %v1460
    %1538 = vmatprep.subr.mxu0 %v1463
    %1539 = vmatpush1.msra.mxu0 %v1462
    %1540 = vmatprep.subr.mxu0 %v1465
    %1541 = vmatpush1.msra.mxu0 %v1464
    %1542 = vmatprep.subr.mxu0 %v1467
    %1543 = vmatpush1.msra.mxu0 %v1466
    %1544 = vmatprep.subr.mxu0 %v1469
    %1545 = vmatpush1.msra.mxu0 %v1468
    %1546 = vmatprep.subr.mxu0 %v1471
    %1547 = vmatpush1.msra.mxu0 %v1470
    %1548 = vmatprep.subr.mxu0 %v1473
    %1549 = vmatpush1.msra.mxu0 %v1472
    %1550 = vmatprep.subr.mxu0 %v1475
    %1551 = vmatpush1.msra.mxu0 %v1474
    %1552 = vmatprep.subr.mxu0 %v1477
    %1553 = vmatpush1.msra.mxu0 %v1476
    %1554 = vmatprep.subr.mxu0 %v1479
    %1555 = vmatpush1.msra.mxu0 %v1478
    %1556 = vmatprep.subr.mxu0 %v1481
    %1557 = vmatpush1.msra.mxu0 %v1480
    %1558 = vmatprep.subr.mxu0 %v1483
    %1559 = vmatpush1.msra.mxu0 %v1482
    %1560 = vmatprep.subr.mxu0 %v1485
    %1561 = vmatpush1.msra.mxu0 %v1484
    %1562 = vmatprep.subr.mxu0 %v1487
    %1563 = vmatpush1.msra.mxu0 %v1486
    %1564 = vmatprep.subr.mxu0 %v1489
    %1565 = vmatpush1.msra.mxu0 %v1488
    %1566 = vmatprep.subr.mxu0 %v1491
    %1567 = vmatpush1.msra.mxu0 %v1490
    %1568 = vmatprep.subr.mxu0 %v1493
    %1569 = vmatpush1.msra.mxu0 %v1492
    %1570 = vmatprep.subr.mxu0 %v1495
    %1571 = vmatpush1.msra.mxu0 %v1494
    %1572 = vmatprep.subr.mxu0 %v1497
    %1573 = vmatpush1.msra.mxu0 %v1496
    %1574 = vmatprep.subr.mxu0 %v1499
    %1575 = vmatpush1.msra.mxu0 %v1498
    %1576 = vmatprep.subr.mxu0 %v1501
    %1577 = vmatpush1.msra.mxu0 %v1500
    %1578 = vmatprep.subr.mxu0 %v1503
    %1579 = vmatpush1.msra.mxu0 %v1502
    %1580 = vmatprep.subr.mxu0 %v1505
    %1581 = vmatpush1.msra.mxu0 %v1504
    %1582 = vmatprep.subr.mxu0 %v1507
    %1583 = vmatpush1.msra.mxu0 %v1506
    %1584 = vmatprep.subr.mxu0 %v1509
    %1585 = vmatpush1.msra.mxu0 %v1508
    %1586 = vmatprep.subr.mxu0 %v1511
    %1587 = vmatpush1.msra.mxu0 %v1510
    %1588 = vmatprep.subr.mxu0 %v1513
    %1589 = vmatpush1.msra.mxu0 %v1512
    %1590 = vmatprep.subr.mxu0 %v1515
    %1591 = vmatpush1.msra.mxu0 %v1514
    %1592 = vmatprep.subr.mxu0 %v1517
    %1593 = vmatpush1.msra.mxu0 %v1516
    %1594 = vmatprep.subr.mxu0 %v1519
    %1595 = vmatpush1.msra.mxu0 %v1518
    %1596 = vmatprep.mubr.f32.mxu0 %v1454
    %1597 = vmatmul.mubr.f32.gmra.mrb[0].mxu0 %v1452
    %v1598 = vpop.f32.mrb[0].mxu0
    %v1599 = vadd.f32 %v1525, %v1598
    %v1600 = vpop.f32.mrb[0].mxu0
    %v1601 = vadd.f32 %v1529, %v1600
    %1602 = vdwg.mxu0
    %v1603 = vadd.f32 %v1307, %v1599
    %v1604 = vadd.f32 %v1308, %v1601
    %v1605 = vld [vmem:[%s55] sm:$0x3]
    %v1606 = vld [vmem:[%s57] sm:$0x3]
    %v1607 = vadd.f32 %v1603, %v1604
    %1608 = vadd.xlane.f32.xlu0 %v1607
    %v1609 = vpop.xlane.xlu0 %1608
    %v1610 = vrcp.pop 256.0
    %v1611 = vmul.f32 %v1609, %v1610
    %v1612 = vsub.f32 %v1603, %v1611
    %v1613 = vsub.f32 %v1604, %v1611
    %v1614 = vmul.f32 %v1612, %v1612
    %v1615 = vmul.f32 %v1613, %v1613
    %v1616 = vadd.f32 %v1614, %v1615
    %1617 = vadd.xlane.f32.xlu0 %v1616
    %v1618 = vpop.xlane.xlu0 %1617
    %v1619 = vmul.f32 %v1618, %v1610
    %v1620 = vadd.f32 %v1619, 1e-05
    %v1621 = vrsqrt.pop %v1620
    %v1622 = vmul.f32 %v1612, %v1621
    %v1623 = vmul.f32 %v1613, %v1621
    %v1625 = vlaneseq
    %v1626 = vshrl.u32 %v1625, 7
    %v1627 = vsub.s32 0, %v1626
    %v1628 = vrot.slane %v1605, %v1627
    %v1629 = vlaneseq
    %v1630 = vshrl.u32 %v1629, 7
    %v1631 = vsub.s32 1, %v1630
    %v1632 = vrot.slane %v1605, %v1631
    %v1635 = vmul.f32 %v1622, %v1628
    %v1636 = vmul.f32 %v1623, %v1632
    %v1638 = vlaneseq
    %v1639 = vshrl.u32 %v1638, 7
    %v1640 = vsub.s32 0, %v1639
    %v1641 = vrot.slane %v1606, %v1640
    %v1642 = vlaneseq
    %v1643 = vshrl.u32 %v1642, 7
    %v1644 = vsub.s32 1, %v1643
    %v1645 = vrot.slane %v1606, %v1644
    %v1648 = vadd.f32 %v1635, %v1641
    %v1649 = vadd.f32 %v1636, %v1645
    %v1650 = vld [vmem:[#allocation22] sm:$0xff]
    %v1651 = vld [vmem:[#allocation22 + $0x8] sm:$0xff]
    %v1652 = vld [vmem:[#allocation22 + $0x10] sm:$0xff]
    %v1653 = vld [vmem:[#allocation22 + $0x18] sm:$0xff]
    %v1654 = vld [vmem:[#allocation22 + $0x20] sm:$0xff]
    %v1655 = vld [vmem:[#allocation22 + $0x28] sm:$0xff]
    %v1656 = vld [vmem:[#allocation22 + $0x30] sm:$0xff]
    %v1657 = vld [vmem:[#allocation22 + $0x38] sm:$0xff]
    %v1658 = vld [vmem:[#allocation22 + $0x40] sm:$0xff]
    %v1659 = vld [vmem:[#allocation22 + $0x48] sm:$0xff]
    %v1660 = vld [vmem:[#allocation22 + $0x50] sm:$0xff]
    %v1661 = vld [vmem:[#allocation22 + $0x58] sm:$0xff]
    %v1662 = vld [vmem:[#allocation22 + $0x60] sm:$0xff]
    %v1663 = vld [vmem:[#allocation22 + $0x68] sm:$0xff]
    %v1664 = vld [vmem:[#allocation22 + $0x70] sm:$0xff]
    %v1665 = vld [vmem:[#allocation22 + $0x78] sm:$0xff]
    %v1666 = vld [vmem:[#allocation22 + $0x80] sm:$0xff]
    %v1667 = vld [vmem:[#allocation22 + $0x88] sm:$0xff]
    %v1668 = vld [vmem:[#allocation22 + $0x90] sm:$0xff]
    %v1669 = vld [vmem:[#allocation22 + $0x98] sm:$0xff]
    %v1670 = vld [vmem:[#allocation22 + $0xa0] sm:$0xff]
    %v1671 = vld [vmem:[#allocation22 + $0xa8] sm:$0xff]
    %v1672 = vld [vmem:[#allocation22 + $0xb0] sm:$0xff]
    %v1673 = vld [vmem:[#allocation22 + $0xb8] sm:$0xff]
    %v1674 = vld [vmem:[#allocation22 + $0xc0] sm:$0xff]
    %v1675 = vld [vmem:[#allocation22 + $0xc8] sm:$0xff]
    %v1676 = vld [vmem:[#allocation22 + $0xd0] sm:$0xff]
    %v1677 = vld [vmem:[#allocation22 + $0xd8] sm:$0xff]
    %v1678 = vld [vmem:[#allocation22 + $0xe0] sm:$0xff]
    %v1679 = vld [vmem:[#allocation22 + $0xe8] sm:$0xff]
    %v1680 = vld [vmem:[#allocation22 + $0xf0] sm:$0xff]
    %v1681 = vld [vmem:[#allocation22 + $0xf8] sm:$0xff]
    %v1682 = vld [vmem:[#allocation22 + $0x100] sm:$0xff]
    %v1683 = vld [vmem:[#allocation22 + $0x108] sm:$0xff]
    %v1684 = vld [vmem:[#allocation22 + $0x110] sm:$0xff]
    %v1685 = vld [vmem:[#allocation22 + $0x118] sm:$0xff]
    %v1686 = vld [vmem:[#allocation22 + $0x120] sm:$0xff]
    %v1687 = vld [vmem:[#allocation22 + $0x128] sm:$0xff]
    %v1688 = vld [vmem:[#allocation22 + $0x130] sm:$0xff]
    %v1689 = vld [vmem:[#allocation22 + $0x138] sm:$0xff]
    %v1690 = vld [vmem:[#allocation22 + $0x140] sm:$0xff]
    %v1691 = vld [vmem:[#allocation22 + $0x148] sm:$0xff]
    %v1692 = vld [vmem:[#allocation22 + $0x150] sm:$0xff]
    %v1693 = vld [vmem:[#allocation22 + $0x158] sm:$0xff]
    %v1694 = vld [vmem:[#allocation22 + $0x160] sm:$0xff]
    %v1695 = vld [vmem:[#allocation22 + $0x168] sm:$0xff]
    %v1696 = vld [vmem:[#allocation22 + $0x170] sm:$0xff]
    %v1697 = vld [vmem:[#allocation22 + $0x178] sm:$0xff]
    %v1698 = vld [vmem:[#allocation22 + $0x180] sm:$0xff]
    %v1699 = vld [vmem:[#allocation22 + $0x188] sm:$0xff]
    %v1700 = vld [vmem:[#allocation22 + $0x190] sm:$0xff]
    %v1701 = vld [vmem:[#allocation22 + $0x198] sm:$0xff]
    %v1702 = vld [vmem:[#allocation22 + $0x1a0] sm:$0xff]
    %v1703 = vld [vmem:[#allocation22 + $0x1a8] sm:$0xff]
    %v1704 = vld [vmem:[#allocation22 + $0x1b0] sm:$0xff]
    %v1705 = vld [vmem:[#allocation22 + $0x1b8] sm:$0xff]
    %v1706 = vld [vmem:[#allocation22 + $0x1c0] sm:$0xff]
    %v1707 = vld [vmem:[#allocation22 + $0x1c8] sm:$0xff]
    %v1708 = vld [vmem:[#allocation22 + $0x1d0] sm:$0xff]
    %v1709 = vld [vmem:[#allocation22 + $0x1d8] sm:$0xff]
    %v1710 = vld [vmem:[#allocation22 + $0x1e0] sm:$0xff]
    %v1711 = vld [vmem:[#allocation22 + $0x1e8] sm:$0xff]
    %v1712 = vld [vmem:[#allocation22 + $0x1f0] sm:$0xff]
    %v1713 = vld [vmem:[#allocation22 + $0x1f8] sm:$0xff]
    %v1714 = vld [vmem:[%s49] sm:$0x3]
    %v1716 = vlaneseq
    %v1717 = vshrl.u32 %v1716, 7
    %v1718 = vsub.s32 0, %v1717
    %v1719 = vrot.slane %v1714, %v1718
    %v1720 = vlaneseq
    %v1721 = vshrl.u32 %v1720, 7
    %v1722 = vsub.s32 1, %v1721
    %v1723 = vrot.slane %v1714, %v1722
    %1726 = vmatprep.subr.mxu0 %v1651
    %1727 = vmatpush1.msra.mxu0 %v1650
    %1728 = vmatprep.subr.mxu0 %v1653
    %1729 = vmatpush1.msra.mxu0 %v1652
    %1730 = vmatprep.subr.mxu0 %v1655
    %1731 = vmatpush1.msra.mxu0 %v1654
    %1732 = vmatprep.subr.mxu0 %v1657
    %1733 = vmatpush1.msra.mxu0 %v1656
    %1734 = vmatprep.subr.mxu0 %v1659
    %1735 = vmatpush1.msra.mxu0 %v1658
    %1736 = vmatprep.subr.mxu0 %v1661
    %1737 = vmatpush1.msra.mxu0 %v1660
    %1738 = vmatprep.subr.mxu0 %v1663
    %1739 = vmatpush1.msra.mxu0 %v1662
    %1740 = vmatprep.subr.mxu0 %v1665
    %1741 = vmatpush1.msra.mxu0 %v1664
    %1742 = vmatprep.subr.mxu0 %v1667
    %1743 = vmatpush1.msra.mxu0 %v1666
    %1744 = vmatprep.subr.mxu0 %v1669
    %1745 = vmatpush1.msra.mxu0 %v1668
    %1746 = vmatprep.subr.mxu0 %v1671
    %1747 = vmatpush1.msra.mxu0 %v1670
    %1748 = vmatprep.subr.mxu0 %v1673
    %1749 = vmatpush1.msra.mxu0 %v1672
    %1750 = vmatprep.subr.mxu0 %v1675
    %1751 = vmatpush1.msra.mxu0 %v1674
    %1752 = vmatprep.subr.mxu0 %v1677
    %1753 = vmatpush1.msra.mxu0 %v1676
    %1754 = vmatprep.subr.mxu0 %v1679
    %1755 = vmatpush1.msra.mxu0 %v1678
    %1756 = vmatprep.subr.mxu0 %v1681
    %1757 = vmatpush1.msra.mxu0 %v1680
    %1758 = vmatprep.subr.mxu0 %v1683
    %1759 = vmatpush1.msra.mxu0 %v1682
    %1760 = vmatprep.subr.mxu0 %v1685
    %1761 = vmatpush1.msra.mxu0 %v1684
    %1762 = vmatprep.subr.mxu0 %v1687
    %1763 = vmatpush1.msra.mxu0 %v1686
    %1764 = vmatprep.subr.mxu0 %v1689
    %1765 = vmatpush1.msra.mxu0 %v1688
    %1766 = vmatprep.subr.mxu0 %v1691
    %1767 = vmatpush1.msra.mxu0 %v1690
    %1768 = vmatprep.subr.mxu0 %v1693
    %1769 = vmatpush1.msra.mxu0 %v1692
    %1770 = vmatprep.subr.mxu0 %v1695
    %1771 = vmatpush1.msra.mxu0 %v1694
    %1772 = vmatprep.subr.mxu0 %v1697
    %1773 = vmatpush1.msra.mxu0 %v1696
    %1774 = vmatprep.subr.mxu0 %v1699
    %1775 = vmatpush1.msra.mxu0 %v1698
    %1776 = vmatprep.subr.mxu0 %v1701
    %1777 = vmatpush1.msra.mxu0 %v1700
    %1778 = vmatprep.subr.mxu0 %v1703
    %1779 = vmatpush1.msra.mxu0 %v1702
    %1780 = vmatprep.subr.mxu0 %v1705
    %1781 = vmatpush1.msra.mxu0 %v1704
    %1782 = vmatprep.subr.mxu0 %v1707
    %1783 = vmatpush1.msra.mxu0 %v1706
    %1784 = vmatprep.subr.mxu0 %v1709
    %1785 = vmatpush1.msra.mxu0 %v1708
    %1786 = vmatprep.subr.mxu0 %v1711
    %1787 = vmatpush1.msra.mxu0 %v1710
    %1788 = vmatprep.subr.mxu0 %v1713
    %1789 = vmatpush1.msra.mxu0 %v1712
    %1790 = vmatprep.mubr.f32.mxu0 %v1649
    %1791 = vmatmul.mubr.f32.gmra.mrb[0].mxu0 %v1648
    %v1792 = vpop.f32.mrb[0].mxu0
    %v1793 = vadd.f32 %v1719, %v1792
    %v1794 = vpop.f32.mrb[0].mxu0
    %v1795 = vadd.f32 %v1723, %v1794
    %1796 = vdwg.mxu0
    %v1797 = vmax.f32 %v1793, 0.0
    %v1798 = vmax.f32 %v1795, 0.0
    %v1799 = vld [vmem:[#allocation24] sm:$0xff]
    %v1800 = vld [vmem:[#allocation24 + $0x8] sm:$0xff]
    %v1801 = vld [vmem:[#allocation24 + $0x10] sm:$0xff]
    %v1802 = vld [vmem:[#allocation24 + $0x18] sm:$0xff]
    %v1803 = vld [vmem:[#allocation24 + $0x20] sm:$0xff]
    %v1804 = vld [vmem:[#allocation24 + $0x28] sm:$0xff]
    %v1805 = vld [vmem:[#allocation24 + $0x30] sm:$0xff]
    %v1806 = vld [vmem:[#allocation24 + $0x38] sm:$0xff]
    %v1807 = vld [vmem:[#allocation24 + $0x40] sm:$0xff]
    %v1808 = vld [vmem:[#allocation24 + $0x48] sm:$0xff]
    %v1809 = vld [vmem:[#allocation24 + $0x50] sm:$0xff]
    %v1810 = vld [vmem:[#allocation24 + $0x58] sm:$0xff]
    %v1811 = vld [vmem:[#allocation24 + $0x60] sm:$0xff]
    %v1812 = vld [vmem:[#allocation24 + $0x68] sm:$0xff]
    %v1813 = vld [vmem:[#allocation24 + $0x70] sm:$0xff]
    %v1814 = vld [vmem:[#allocation24 + $0x78] sm:$0xff]
    %v1815 = vld [vmem:[#allocation24 + $0x80] sm:$0xff]
    %v1816 = vld [vmem:[#allocation24 + $0x88] sm:$0xff]
    %v1817 = vld [vmem:[#allocation24 + $0x90] sm:$0xff]
    %v1818 = vld [vmem:[#allocation24 + $0x98] sm:$0xff]
    %v1819 = vld [vmem:[#allocation24 + $0xa0] sm:$0xff]
    %v1820 = vld [vmem:[#allocation24 + $0xa8] sm:$0xff]
    %v1821 = vld [vmem:[#allocation24 + $0xb0] sm:$0xff]
    %v1822 = vld [vmem:[#allocation24 + $0xb8] sm:$0xff]
    %v1823 = vld [vmem:[#allocation24 + $0xc0] sm:$0xff]
    %v1824 = vld [vmem:[#allocation24 + $0xc8] sm:$0xff]
    %v1825 = vld [vmem:[#allocation24 + $0xd0] sm:$0xff]
    %v1826 = vld [vmem:[#allocation24 + $0xd8] sm:$0xff]
    %v1827 = vld [vmem:[#allocation24 + $0xe0] sm:$0xff]
    %v1828 = vld [vmem:[#allocation24 + $0xe8] sm:$0xff]
    %v1829 = vld [vmem:[#allocation24 + $0xf0] sm:$0xff]
    %v1830 = vld [vmem:[#allocation24 + $0xf8] sm:$0xff]
    %v1831 = vld [vmem:[#allocation24 + $0x100] sm:$0xff]
    %v1832 = vld [vmem:[#allocation24 + $0x108] sm:$0xff]
    %v1833 = vld [vmem:[#allocation24 + $0x110] sm:$0xff]
    %v1834 = vld [vmem:[#allocation24 + $0x118] sm:$0xff]
    %v1835 = vld [vmem:[#allocation24 + $0x120] sm:$0xff]
    %v1836 = vld [vmem:[#allocation24 + $0x128] sm:$0xff]
    %v1837 = vld [vmem:[#allocation24 + $0x130] sm:$0xff]
    %v1838 = vld [vmem:[#allocation24 + $0x138] sm:$0xff]
    %v1839 = vld [vmem:[#allocation24 + $0x140] sm:$0xff]
    %v1840 = vld [vmem:[#allocation24 + $0x148] sm:$0xff]
    %v1841 = vld [vmem:[#allocation24 + $0x150] sm:$0xff]
    %v1842 = vld [vmem:[#allocation24 + $0x158] sm:$0xff]
    %v1843 = vld [vmem:[#allocation24 + $0x160] sm:$0xff]
    %v1844 = vld [vmem:[#allocation24 + $0x168] sm:$0xff]
    %v1845 = vld [vmem:[#allocation24 + $0x170] sm:$0xff]
    %v1846 = vld [vmem:[#allocation24 + $0x178] sm:$0xff]
    %v1847 = vld [vmem:[#allocation24 + $0x180] sm:$0xff]
    %v1848 = vld [vmem:[#allocation24 + $0x188] sm:$0xff]
    %v1849 = vld [vmem:[#allocation24 + $0x190] sm:$0xff]
    %v1850 = vld [vmem:[#allocation24 + $0x198] sm:$0xff]
    %v1851 = vld [vmem:[#allocation24 + $0x1a0] sm:$0xff]
    %v1852 = vld [vmem:[#allocation24 + $0x1a8] sm:$0xff]
    %v1853 = vld [vmem:[#allocation24 + $0x1b0] sm:$0xff]
    %v1854 = vld [vmem:[#allocation24 + $0x1b8] sm:$0xff]
    %v1855 = vld [vmem:[#allocation24 + $0x1c0] sm:$0xff]
    %v1856 = vld [vmem:[#allocation24 + $0x1c8] sm:$0xff]
    %v1857 = vld [vmem:[#allocation24 + $0x1d0] sm:$0xff]
    %v1858 = vld [vmem:[#allocation24 + $0x1d8] sm:$0xff]
    %v1859 = vld [vmem:[#allocation24 + $0x1e0] sm:$0xff]
    %v1860 = vld [vmem:[#allocation24 + $0x1e8] sm:$0xff]
    %v1861 = vld [vmem:[#allocation24 + $0x1f0] sm:$0xff]
    %v1862 = vld [vmem:[#allocation24 + $0x1f8] sm:$0xff]
    %v1863 = vld [vmem:[%s53] sm:$0x3]
    %v1865 = vlaneseq
    %v1866 = vshrl.u32 %v1865, 7
    %v1867 = vsub.s32 0, %v1866
    %v1868 = vrot.slane %v1863, %v1867
    %v1869 = vlaneseq
    %v1870 = vshrl.u32 %v1869, 7
    %v1871 = vsub.s32 1, %v1870
    %v1872 = vrot.slane %v1863, %v1871
    %1875 = vmatprep.subr.mxu0 %v1800
    %1876 = vmatpush1.msra.mxu0 %v1799
    %1877 = vmatprep.subr.mxu0 %v1802
    %1878 = vmatpush1.msra.mxu0 %v1801
    %1879 = vmatprep.subr.mxu0 %v1804
    %1880 = vmatpush1.msra.mxu0 %v1803
    %1881 = vmatprep.subr.mxu0 %v1806
    %1882 = vmatpush1.msra.mxu0 %v1805
    %1883 = vmatprep.subr.mxu0 %v1808
    %1884 = vmatpush1.msra.mxu0 %v1807
    %1885 = vmatprep.subr.mxu0 %v1810
    %1886 = vmatpush1.msra.mxu0 %v1809
    %1887 = vmatprep.subr.mxu0 %v1812
    %1888 = vmatpush1.msra.mxu0 %v1811
    %1889 = vmatprep.subr.mxu0 %v1814
    %1890 = vmatpush1.msra.mxu0 %v1813
    %1891 = vmatprep.subr.mxu0 %v1816
    %1892 = vmatpush1.msra.mxu0 %v1815
    %1893 = vmatprep.subr.mxu0 %v1818
    %1894 = vmatpush1.msra.mxu0 %v1817
    %1895 = vmatprep.subr.mxu0 %v1820
    %1896 = vmatpush1.msra.mxu0 %v1819
    %1897 = vmatprep.subr.mxu0 %v1822
    %1898 = vmatpush1.msra.mxu0 %v1821
    %1899 = vmatprep.subr.mxu0 %v1824
    %1900 = vmatpush1.msra.mxu0 %v1823
    %1901 = vmatprep.subr.mxu0 %v1826
    %1902 = vmatpush1.msra.mxu0 %v1825
    %1903 = vmatprep.subr.mxu0 %v1828
    %1904 = vmatpush1.msra.mxu0 %v1827
    %1905 = vmatprep.subr.mxu0 %v1830
    %1906 = vmatpush1.msra.mxu0 %v1829
    %1907 = vmatprep.subr.mxu0 %v1832
    %1908 = vmatpush1.msra.mxu0 %v1831
    %1909 = vmatprep.subr.mxu0 %v1834
    %1910 = vmatpush1.msra.mxu0 %v1833
    %1911 = vmatprep.subr.mxu0 %v1836
    %1912 = vmatpush1.msra.mxu0 %v1835
    %1913 = vmatprep.subr.mxu0 %v1838
    %1914 = vmatpush1.msra.mxu0 %v1837
    %1915 = vmatprep.subr.mxu0 %v1840
    %1916 = vmatpush1.msra.mxu0 %v1839
    %1917 = vmatprep.subr.mxu0 %v1842
    %1918 = vmatpush1.msra.mxu0 %v1841
    %1919 = vmatprep.subr.mxu0 %v1844
    %1920 = vmatpush1.msra.mxu0 %v1843
    %1921 = vmatprep.subr.mxu0 %v1846
    %1922 = vmatpush1.msra.mxu0 %v1845
    %1923 = vmatprep.subr.mxu0 %v1848
    %1924 = vmatpush1.msra.mxu0 %v1847
    %1925 = vmatprep.subr.mxu0 %v1850
    %1926 = vmatpush1.msra.mxu0 %v1849
    %1927 = vmatprep.subr.mxu0 %v1852
    %1928 = vmatpush1.msra.mxu0 %v1851
    %1929 = vmatprep.subr.mxu0 %v1854
    %1930 = vmatpush1.msra.mxu0 %v1853
    %1931 = vmatprep.subr.mxu0 %v1856
    %1932 = vmatpush1.msra.mxu0 %v1855
    %1933 = vmatprep.subr.mxu0 %v1858
    %1934 = vmatpush1.msra.mxu0 %v1857
    %1935 = vmatprep.subr.mxu0 %v1860
    %1936 = vmatpush1.msra.mxu0 %v1859
    %1937 = vmatprep.subr.mxu0 %v1862
    %1938 = vmatpush1.msra.mxu0 %v1861
    %1939 = vmatprep.mubr.f32.mxu0 %v1798
    %1940 = vmatmul.mubr.f32.gmra.mrb[0].mxu0 %v1797
    %v1941 = vpop.f32.mrb[0].mxu0
    %v1942 = vadd.f32 %v1868, %v1941
    %v1943 = vpop.f32.mrb[0].mxu0
    %v1944 = vadd.f32 %v1872, %v1943
    %1945 = vdwg.mxu0
    %v1946 = vadd.f32 %v1648, %v1942
    %v1947 = vadd.f32 %v1649, %v1944
    %v1948 = vld [vmem:[%s59] sm:$0x3]
    %v1949 = vld [vmem:[%s61] sm:$0x3]
    %v1950 = vadd.f32 %v1946, %v1947
    %1951 = vadd.xlane.f32.xlu0 %v1950
    %v1952 = vpop.xlane.xlu0 %1951
    %v1953 = vmul.f32 %v1952, %v1610
    %v1954 = vsub.f32 %v1946, %v1953
    %v1955 = vsub.f32 %v1947, %v1953
    %v1956 = vmul.f32 %v1954, %v1954
    %v1957 = vmul.f32 %v1955, %v1955
    %v1958 = vadd.f32 %v1956, %v1957
    %1959 = vadd.xlane.f32.xlu0 %v1958
    %v1960 = vpop.xlane.xlu0 %1959
    %v1961 = vmul.f32 %v1960, %v1610
    %v1962 = vadd.f32 %v1961, 1e-05
    %v1963 = vrsqrt.pop %v1962
    %v1964 = vmul.f32 %v1954, %v1963
    %v1965 = vmul.f32 %v1955, %v1963
    %v1967 = vlaneseq
    %v1968 = vshrl.u32 %v1967, 7
    %v1969 = vsub.s32 0, %v1968
    %v1970 = vrot.slane %v1948, %v1969
    %v1971 = vlaneseq
    %v1972 = vshrl.u32 %v1971, 7
    %v1973 = vsub.s32 1, %v1972
    %v1974 = vrot.slane %v1948, %v1973
    %v1977 = vmul.f32 %v1964, %v1970
    %v1978 = vmul.f32 %v1965, %v1974
    %v1980 = vlaneseq
    %v1981 = vshrl.u32 %v1980, 7
    %v1982 = vsub.s32 0, %v1981
    %v1983 = vrot.slane %v1949, %v1982
    %v1984 = vlaneseq
    %v1985 = vshrl.u32 %v1984, 7
    %v1986 = vsub.s32 1, %v1985
    %v1987 = vrot.slane %v1949, %v1986
    %v1990 = vadd.f32 %v1977, %v1983
    %v1991 = vadd.f32 %v1978, %v1987
    %s1992 = scalar_lea.vmem [#allocation18], 512
    %v1993 = vld [vmem:[%s1992] sm:$0xff]
    %v1994 = vld [vmem:[%s1992 + $0x8] sm:$0xff]
    %v1995 = vld [vmem:[%s1992 + $0x10] sm:$0xff]
    %v1996 = vld [vmem:[%s1992 + $0x18] sm:$0xff]
    %v1997 = vld [vmem:[%s1992 + $0x20] sm:$0xff]
    %v1998 = vld [vmem:[%s1992 + $0x28] sm:$0xff]
    %v1999 = vld [vmem:[%s1992 + $0x30] sm:$0xff]
    %v2000 = vld [vmem:[%s1992 + $0x38] sm:$0xff]
    %v2001 = vld [vmem:[%s1992 + $0x40] sm:$0xff]
    %v2002 = vld [vmem:[%s1992 + $0x48] sm:$0xff]
    %v2003 = vld [vmem:[%s1992 + $0x50] sm:$0xff]
    %v2004 = vld [vmem:[%s1992 + $0x58] sm:$0xff]
    %v2005 = vld [vmem:[%s1992 + $0x60] sm:$0xff]
    %v2006 = vld [vmem:[%s1992 + $0x68] sm:$0xff]
    %v2007 = vld [vmem:[%s1992 + $0x70] sm:$0xff]
    %v2008 = vld [vmem:[%s1992 + $0x78] sm:$0xff]
    %v2009 = vld [vmem:[%s1992 + $0x80] sm:$0xff]
    %v2010 = vld [vmem:[%s1992 + $0x88] sm:$0xff]
    %v2011 = vld [vmem:[%s1992 + $0x90] sm:$0xff]
    %v2012 = vld [vmem:[%s1992 + $0x98] sm:$0xff]
    %v2013 = vld [vmem:[%s1992 + $0xa0] sm:$0xff]
    %v2014 = vld [vmem:[%s1992 + $0xa8] sm:$0xff]
    %v2015 = vld [vmem:[%s1992 + $0xb0] sm:$0xff]
    %v2016 = vld [vmem:[%s1992 + $0xb8] sm:$0xff]
    %v2017 = vld [vmem:[%s1992 + $0xc0] sm:$0xff]
    %v2018 = vld [vmem:[%s1992 + $0xc8] sm:$0xff]
    %v2019 = vld [vmem:[%s1992 + $0xd0] sm:$0xff]
    %v2020 = vld [vmem:[%s1992 + $0xd8] sm:$0xff]
    %v2021 = vld [vmem:[%s1992 + $0xe0] sm:$0xff]
    %v2022 = vld [vmem:[%s1992 + $0xe8] sm:$0xff]
    %v2023 = vld [vmem:[%s1992 + $0xf0] sm:$0xff]
    %v2024 = vld [vmem:[%s1992 + $0xf8] sm:$0xff]
    %v2025 = vld [vmem:[%s1992 + $0x100] sm:$0xff]
    %v2026 = vld [vmem:[%s1992 + $0x108] sm:$0xff]
    %v2027 = vld [vmem:[%s1992 + $0x110] sm:$0xff]
    %v2028 = vld [vmem:[%s1992 + $0x118] sm:$0xff]
    %v2029 = vld [vmem:[%s1992 + $0x120] sm:$0xff]
    %v2030 = vld [vmem:[%s1992 + $0x128] sm:$0xff]
    %v2031 = vld [vmem:[%s1992 + $0x130] sm:$0xff]
    %v2032 = vld [vmem:[%s1992 + $0x138] sm:$0xff]
    %v2033 = vld [vmem:[%s1992 + $0x140] sm:$0xff]
    %v2034 = vld [vmem:[%s1992 + $0x148] sm:$0xff]
    %v2035 = vld [vmem:[%s1992 + $0x150] sm:$0xff]
    %v2036 = vld [vmem:[%s1992 + $0x158] sm:$0xff]
    %v2037 = vld [vmem:[%s1992 + $0x160] sm:$0xff]
    %v2038 = vld [vmem:[%s1992 + $0x168] sm:$0xff]
    %v2039 = vld [vmem:[%s1992 + $0x170] sm:$0xff]
    %v2040 = vld [vmem:[%s1992 + $0x178] sm:$0xff]
    %v2041 = vld [vmem:[%s1992 + $0x180] sm:$0xff]
    %v2042 = vld [vmem:[%s1992 + $0x188] sm:$0xff]
    %v2043 = vld [vmem:[%s1992 + $0x190] sm:$0xff]
    %v2044 = vld [vmem:[%s1992 + $0x198] sm:$0xff]
    %v2045 = vld [vmem:[%s1992 + $0x1a0] sm:$0xff]
    %v2046 = vld [vmem:[%s1992 + $0x1a8] sm:$0xff]
    %v2047 = vld [vmem:[%s1992 + $0x1b0] sm:$0xff]
    %v2048 = vld [vmem:[%s1992 + $0x1b8] sm:$0xff]
    %v2049 = vld [vmem:[%s1992 + $0x1c0] sm:$0xff]
    %v2050 = vld [vmem:[%s1992 + $0x1c8] sm:$0xff]
    %v2051 = vld [vmem:[%s1992 + $0x1d0] sm:$0xff]
    %v2052 = vld [vmem:[%s1992 + $0x1d8] sm:$0xff]
    %v2053 = vld [vmem:[%s1992 + $0x1e0] sm:$0xff]
    %v2054 = vld [vmem:[%s1992 + $0x1e8] sm:$0xff]
    %v2055 = vld [vmem:[%s1992 + $0x1f0] sm:$0xff]
    %v2056 = vld [vmem:[%s1992 + $0x1f8] sm:$0xff]
    %s2057 = scalar_lea.vmem %s37, 2
    %v2058 = vld [vmem:[%s2057] sm:$0x3]
    %v2060 = vlaneseq
    %v2061 = vshrl.u32 %v2060, 7
    %v2062 = vsub.s32 0, %v2061
    %v2063 = vrot.slane %v2058, %v2062
    %v2064 = vlaneseq
    %v2065 = vshrl.u32 %v2064, 7
    %v2066 = vsub.s32 1, %v2065
    %v2067 = vrot.slane %v2058, %v2066
    %2070 = vmatprep.subr.mxu0 %v1994
    %2071 = vmatpush1.msra.mxu0 %v1993
    %2072 = vmatprep.subr.mxu0 %v1996
    %2073 = vmatpush1.msra.mxu0 %v1995
    %2074 = vmatprep.subr.mxu0 %v1998
    %2075 = vmatpush1.msra.mxu0 %v1997
    %2076 = vmatprep.subr.mxu0 %v2000
    %2077 = vmatpush1.msra.mxu0 %v1999
    %2078 = vmatprep.subr.mxu0 %v2002
    %2079 = vmatpush1.msra.mxu0 %v2001
    %2080 = vmatprep.subr.mxu0 %v2004
    %2081 = vmatpush1.msra.mxu0 %v2003
    %2082 = vmatprep.subr.mxu0 %v2006
    %2083 = vmatpush1.msra.mxu0 %v2005
    %2084 = vmatprep.subr.mxu0 %v2008
    %2085 = vmatpush1.msra.mxu0 %v2007
    %2086 = vmatprep.subr.mxu0 %v2010
    %2087 = vmatpush1.msra.mxu0 %v2009
    %2088 = vmatprep.subr.mxu0 %v2012
    %2089 = vmatpush1.msra.mxu0 %v2011
    %2090 = vmatprep.subr.mxu0 %v2014
    %2091 = vmatpush1.msra.mxu0 %v2013
    %2092 = vmatprep.subr.mxu0 %v2016
    %2093 = vmatpush1.msra.mxu0 %v2015
    %2094 = vmatprep.subr.mxu0 %v2018
    %2095 = vmatpush1.msra.mxu0 %v2017
    %2096 = vmatprep.subr.mxu0 %v2020
    %2097 = vmatpush1.msra.mxu0 %v2019
    %2098 = vmatprep.subr.mxu0 %v2022
    %2099 = vmatpush1.msra.mxu0 %v2021
    %2100 = vmatprep.subr.mxu0 %v2024
    %2101 = vmatpush1.msra.mxu0 %v2023
    %2102 = vmatprep.subr.mxu0 %v2026
    %2103 = vmatpush1.msra.mxu0 %v2025
    %2104 = vmatprep.subr.mxu0 %v2028
    %2105 = vmatpush1.msra.mxu0 %v2027
    %2106 = vmatprep.subr.mxu0 %v2030
    %2107 = vmatpush1.msra.mxu0 %v2029
    %2108 = vmatprep.subr.mxu0 %v2032
    %2109 = vmatpush1.msra.mxu0 %v2031
    %2110 = vmatprep.subr.mxu0 %v2034
    %2111 = vmatpush1.msra.mxu0 %v2033
    %2112 = vmatprep.subr.mxu0 %v2036
    %2113 = vmatpush1.msra.mxu0 %v2035
    %2114 = vmatprep.subr.mxu0 %v2038
    %2115 = vmatpush1.msra.mxu0 %v2037
    %2116 = vmatprep.subr.mxu0 %v2040
    %2117 = vmatpush1.msra.mxu0 %v2039
    %2118 = vmatprep.subr.mxu0 %v2042
    %2119 = vmatpush1.msra.mxu0 %v2041
    %2120 = vmatprep.subr.mxu0 %v2044
    %2121 = vmatpush1.msra.mxu0 %v2043
    %2122 = vmatprep.subr.mxu0 %v2046
    %2123 = vmatpush1.msra.mxu0 %v2045
    %2124 = vmatprep.subr.mxu0 %v2048
    %2125 = vmatpush1.msra.mxu0 %v2047
    %2126 = vmatprep.subr.mxu0 %v2050
    %2127 = vmatpush1.msra.mxu0 %v2049
    %2128 = vmatprep.subr.mxu0 %v2052
    %2129 = vmatpush1.msra.mxu0 %v2051
    %2130 = vmatprep.subr.mxu0 %v2054
    %2131 = vmatpush1.msra.mxu0 %v2053
    %2132 = vmatprep.subr.mxu0 %v2056
    %2133 = vmatpush1.msra.mxu0 %v2055
    %2134 = vmatprep.mubr.f32.mxu0 %v1025
    %2135 = vmatmul.mubr.f32.gmra.mrb[0].mxu0 %v566
    %v2136 = vpop.f32.mrb[0].mxu0
    %v2137 = vadd.f32 %v2063, %v2136
    %v2138 = vpop.f32.mrb[0].mxu0
    %v2139 = vadd.f32 %v2067, %v2138
    %2140 = vdwg.mxu0
    %v2141 = vmax.f32 %v2137, %v2139
    %2142 = vmax.xlane.f32.xlu0 %v2141
    %v2143 = vpop.xlane.xlu0 %2142
    %v2144 = vsub.f32 %v2137, %v2143
    %v2145 = vsub.f32 %v2139, %v2143
    %v2146 = vmul.f32 %v2144, 1.442695
    %v2147 = vpow.pop %v2146
    %v2148 = vmul.f32 %v2145, 1.442695
    %v2149 = vpow.pop %v2148
    %v2150 = vadd.f32 %v2147, %v2149
    %2151 = vadd.xlane.f32.xlu0 %v2150
    %v2152 = vpop.xlane.xlu0 %2151
    %v2153 = vrcp.pop %v2152
    %v2154 = vmul.f32 %v2147, %v2153
    %v2155 = vmul.f32 %v2149, %v2153
    %v2156 = vmul.f32 %v2154, %v566
    %v2157 = vmul.f32 %v2155, %v1025
    %s2158 = scalar_lea.vmem [#allocation19], 512
    %v2159 = vld [vmem:[%s2158] sm:$0xff]
    %v2160 = vld [vmem:[%s2158 + $0x8] sm:$0xff]
    %v2161 = vld [vmem:[%s2158 + $0x10] sm:$0xff]
    %v2162 = vld [vmem:[%s2158 + $0x18] sm:$0xff]
    %v2163 = vld [vmem:[%s2158 + $0x20] sm:$0xff]
    %v2164 = vld [vmem:[%s2158 + $0x28] sm:$0xff]
    %v2165 = vld [vmem:[%s2158 + $0x30] sm:$0xff]
    %v2166 = vld [vmem:[%s2158 + $0x38] sm:$0xff]
    %v2167 = vld [vmem:[%s2158 + $0x40] sm:$0xff]
    %v2168 = vld [vmem:[%s2158 + $0x48] sm:$0xff]
    %v2169 = vld [vmem:[%s2158 + $0x50] sm:$0xff]
    %v2170 = vld [vmem:[%s2158 + $0x58] sm:$0xff]
    %v2171 = vld [vmem:[%s2158 + $0x60] sm:$0xff]
    %v2172 = vld [vmem:[%s2158 + $0x68] sm:$0xff]
    %v2173 = vld [vmem:[%s2158 + $0x70] sm:$0xff]
    %v2174 = vld [vmem:[%s2158 + $0x78] sm:$0xff]
    %v2175 = vld [vmem:[%s2158 + $0x80] sm:$0xff]
    %v2176 = vld [vmem:[%s2158 + $0x88] sm:$0xff]
    %v2177 = vld [vmem:[%s2158 + $0x90] sm:$0xff]
    %v2178 = vld [vmem:[%s2158 + $0x98] sm:$0xff]
    %v2179 = vld [vmem:[%s2158 + $0xa0] sm:$0xff]
    %v2180 = vld [vmem:[%s2158 + $0xa8] sm:$0xff]
    %v2181 = vld [vmem:[%s2158 + $0xb0] sm:$0xff]
    %v2182 = vld [vmem:[%s2158 + $0xb8] sm:$0xff]
    %v2183 = vld [vmem:[%s2158 + $0xc0] sm:$0xff]
    %v2184 = vld [vmem:[%s2158 + $0xc8] sm:$0xff]
    %v2185 = vld [vmem:[%s2158 + $0xd0] sm:$0xff]
    %v2186 = vld [vmem:[%s2158 + $0xd8] sm:$0xff]
    %v2187 = vld [vmem:[%s2158 + $0xe0] sm:$0xff]
    %v2188 = vld [vmem:[%s2158 + $0xe8] sm:$0xff]
    %v2189 = vld [vmem:[%s2158 + $0xf0] sm:$0xff]
    %v2190 = vld [vmem:[%s2158 + $0xf8] sm:$0xff]
    %v2191 = vld [vmem:[%s2158 + $0x100] sm:$0xff]
    %v2192 = vld [vmem:[%s2158 + $0x108] sm:$0xff]
    %v2193 = vld [vmem:[%s2158 + $0x110] sm:$0xff]
    %v2194 = vld [vmem:[%s2158 + $0x118] sm:$0xff]
    %v2195 = vld [vmem:[%s2158 + $0x120] sm:$0xff]
    %v2196 = vld [vmem:[%s2158 + $0x128] sm:$0xff]
    %v2197 = vld [vmem:[%s2158 + $0x130] sm:$0xff]
    %v2198 = vld [vmem:[%s2158 + $0x138] sm:$0xff]
    %v2199 = vld [vmem:[%s2158 + $0x140] sm:$0xff]
    %v2200 = vld [vmem:[%s2158 + $0x148] sm:$0xff]
    %v2201 = vld [vmem:[%s2158 + $0x150] sm:$0xff]
    %v2202 = vld [vmem:[%s2158 + $0x158] sm:$0xff]
    %v2203 = vld [vmem:[%s2158 + $0x160] sm:$0xff]
    %v2204 = vld [vmem:[%s2158 + $0x168] sm:$0xff]
    %v2205 = vld [vmem:[%s2158 + $0x170] sm:$0xff]
    %v2206 = vld [vmem:[%s2158 + $0x178] sm:$0xff]
    %v2207 = vld [vmem:[%s2158 + $0x180] sm:$0xff]
    %v2208 = vld [vmem:[%s2158 + $0x188] sm:$0xff]
    %v2209 = vld [vmem:[%s2158 + $0x190] sm:$0xff]
    %v2210 = vld [vmem:[%s2158 + $0x198] sm:$0xff]
    %v2211 = vld [vmem:[%s2158 + $0x1a0] sm:$0xff]
    %v2212 = vld [vmem:[%s2158 + $0x1a8] sm:$0xff]
    %v2213 = vld [vmem:[%s2158 + $0x1b0] sm:$0xff]
    %v2214 = vld [vmem:[%s2158 + $0x1b8] sm:$0xff]
    %v2215 = vld [vmem:[%s2158 + $0x1c0] sm:$0xff]
    %v2216 = vld [vmem:[%s2158 + $0x1c8] sm:$0xff]
    %v2217 = vld [vmem:[%s2158 + $0x1d0] sm:$0xff]
    %v2218 = vld [vmem:[%s2158 + $0x1d8] sm:$0xff]
    %v2219 = vld [vmem:[%s2158 + $0x1e0] sm:$0xff]
    %v2220 = vld [vmem:[%s2158 + $0x1e8] sm:$0xff]
    %v2221 = vld [vmem:[%s2158 + $0x1f0] sm:$0xff]
    %v2222 = vld [vmem:[%s2158 + $0x1f8] sm:$0xff]
    %s2223 = scalar_lea.vmem %s41, 2
    %v2224 = vld [vmem:[%s2223] sm:$0x3]
    %v2226 = vlaneseq
    %v2227 = vshrl.u32 %v2226, 7
    %v2228 = vsub.s32 0, %v2227
    %v2229 = vrot.slane %v2224, %v2228
    %v2230 = vlaneseq
    %v2231 = vshrl.u32 %v2230, 7
    %v2232 = vsub.s32 1, %v2231
    %v2233 = vrot.slane %v2224, %v2232
    %2236 = vmatprep.subr.mxu0 %v2160
    %2237 = vmatpush1.msra.mxu0 %v2159
    %2238 = vmatprep.subr.mxu0 %v2162
    %2239 = vmatpush1.msra.mxu0 %v2161
    %2240 = vmatprep.subr.mxu0 %v2164
    %2241 = vmatpush1.msra.mxu0 %v2163
    %2242 = vmatprep.subr.mxu0 %v2166
    %2243 = vmatpush1.msra.mxu0 %v2165
    %2244 = vmatprep.subr.mxu0 %v2168
    %2245 = vmatpush1.msra.mxu0 %v2167
    %2246 = vmatprep.subr.mxu0 %v2170
    %2247 = vmatpush1.msra.mxu0 %v2169
    %2248 = vmatprep.subr.mxu0 %v2172
    %2249 = vmatpush1.msra.mxu0 %v2171
    %2250 = vmatprep.subr.mxu0 %v2174
    %2251 = vmatpush1.msra.mxu0 %v2173
    %2252 = vmatprep.subr.mxu0 %v2176
    %2253 = vmatpush1.msra.mxu0 %v2175
    %2254 = vmatprep.subr.mxu0 %v2178
    %2255 = vmatpush1.msra.mxu0 %v2177
    %2256 = vmatprep.subr.mxu0 %v2180
    %2257 = vmatpush1.msra.mxu0 %v2179
    %2258 = vmatprep.subr.mxu0 %v2182
    %2259 = vmatpush1.msra.mxu0 %v2181
    %2260 = vmatprep.subr.mxu0 %v2184
    %2261 = vmatpush1.msra.mxu0 %v2183
    %2262 = vmatprep.subr.mxu0 %v2186
    %2263 = vmatpush1.msra.mxu0 %v2185
    %2264 = vmatprep.subr.mxu0 %v2188
    %2265 = vmatpush1.msra.mxu0 %v2187
    %2266 = vmatprep.subr.mxu0 %v2190
    %2267 = vmatpush1.msra.mxu0 %v2189
    %2268 = vmatprep.subr.mxu0 %v2192
    %2269 = vmatpush1.msra.mxu0 %v2191
    %2270 = vmatprep.subr.mxu0 %v2194
    %2271 = vmatpush1.msra.mxu0 %v2193
    %2272 = vmatprep.subr.mxu0 %v2196
    %2273 = vmatpush1.msra.mxu0 %v2195
    %2274 = vmatprep.subr.mxu0 %v2198
    %2275 = vmatpush1.msra.mxu0 %v2197
    %2276 = vmatprep.subr.mxu0 %v2200
    %2277 = vmatpush1.msra.mxu0 %v2199
    %2278 = vmatprep.subr.mxu0 %v2202
    %2279 = vmatpush1.msra.mxu0 %v2201
    %2280 = vmatprep.subr.mxu0 %v2204
    %2281 = vmatpush1.msra.mxu0 %v2203
    %2282 = vmatprep.subr.mxu0 %v2206
    %2283 = vmatpush1.msra.mxu0 %v2205
    %2284 = vmatprep.subr.mxu0 %v2208
    %2285 = vmatpush1.msra.mxu0 %v2207
    %2286 = vmatprep.subr.mxu0 %v2210
    %2287 = vmatpush1.msra.mxu0 %v2209
    %2288 = vmatprep.subr.mxu0 %v2212
    %2289 = vmatpush1.msra.mxu0 %v2211
    %2290 = vmatprep.subr.mxu0 %v2214
    %2291 = vmatpush1.msra.mxu0 %v2213
    %2292 = vmatprep.subr.mxu0 %v2216
    %2293 = vmatpush1.msra.mxu0 %v2215
    %2294 = vmatprep.subr.mxu0 %v2218
    %2295 = vmatpush1.msra.mxu0 %v2217
    %2296 = vmatprep.subr.mxu0 %v2220
    %2297 = vmatpush1.msra.mxu0 %v2219
    %2298 = vmatprep.subr.mxu0 %v2222
    %2299 = vmatpush1.msra.mxu0 %v2221
    %2300 = vmatprep.mubr.f32.mxu0 %v2157
    %2301 = vmatmul.mubr.f32.gmra.mrb[0].mxu0 %v2156
    %v2302 = vpop.f32.mrb[0].mxu0
    %v2303 = vadd.f32 %v2229, %v2302
    %v2304 = vpop.f32.mrb[0].mxu0
    %v2305 = vadd.f32 %v2233, %v2304
    %2306 = vdwg.mxu0
    %s2307 = scalar_lea.vmem [#allocation21], 512
    %v2308 = vld [vmem:[%s2307] sm:$0xff]
    %v2309 = vld [vmem:[%s2307 + $0x8] sm:$0xff]
    %v2310 = vld [vmem:[%s2307 + $0x10] sm:$0xff]
    %v2311 = vld [vmem:[%s2307 + $0x18] sm:$0xff]
    %v2312 = vld [vmem:[%s2307 + $0x20] sm:$0xff]
    %v2313 = vld [vmem:[%s2307 + $0x28] sm:$0xff]
    %v2314 = vld [vmem:[%s2307 + $0x30] sm:$0xff]
    %v2315 = vld [vmem:[%s2307 + $0x38] sm:$0xff]
    %v2316 = vld [vmem:[%s2307 + $0x40] sm:$0xff]
    %v2317 = vld [vmem:[%s2307 + $0x48] sm:$0xff]
    %v2318 = vld [vmem:[%s2307 + $0x50] sm:$0xff]
    %v2319 = vld [vmem:[%s2307 + $0x58] sm:$0xff]
    %v2320 = vld [vmem:[%s2307 + $0x60] sm:$0xff]
    %v2321 = vld [vmem:[%s2307 + $0x68] sm:$0xff]
    %v2322 = vld [vmem:[%s2307 + $0x70] sm:$0xff]
    %v2323 = vld [vmem:[%s2307 + $0x78] sm:$0xff]
    %v2324 = vld [vmem:[%s2307 + $0x80] sm:$0xff]
    %v2325 = vld [vmem:[%s2307 + $0x88] sm:$0xff]
    %v2326 = vld [vmem:[%s2307 + $0x90] sm:$0xff]
    %v2327 = vld [vmem:[%s2307 + $0x98] sm:$0xff]
    %v2328 = vld [vmem:[%s2307 + $0xa0] sm:$0xff]
    %v2329 = vld [vmem:[%s2307 + $0xa8] sm:$0xff]
    %v2330 = vld [vmem:[%s2307 + $0xb0] sm:$0xff]
    %v2331 = vld [vmem:[%s2307 + $0xb8] sm:$0xff]
    %v2332 = vld [vmem:[%s2307 + $0xc0] sm:$0xff]
    %v2333 = vld [vmem:[%s2307 + $0xc8] sm:$0xff]
    %v2334 = vld [vmem:[%s2307 + $0xd0] sm:$0xff]
    %v2335 = vld [vmem:[%s2307 + $0xd8] sm:$0xff]
    %v2336 = vld [vmem:[%s2307 + $0xe0] sm:$0xff]
    %v2337 = vld [vmem:[%s2307 + $0xe8] sm:$0xff]
    %v2338 = vld [vmem:[%s2307 + $0xf0] sm:$0xff]
    %v2339 = vld [vmem:[%s2307 + $0xf8] sm:$0xff]
    %v2340 = vld [vmem:[%s2307 + $0x100] sm:$0xff]
    %v2341 = vld [vmem:[%s2307 + $0x108] sm:$0xff]
    %v2342 = vld [vmem:[%s2307 + $0x110] sm:$0xff]
    %v2343 = vld [vmem:[%s2307 + $0x118] sm:$0xff]
    %v2344 = vld [vmem:[%s2307 + $0x120] sm:$0xff]
    %v2345 = vld [vmem:[%s2307 + $0x128] sm:$0xff]
    %v2346 = vld [vmem:[%s2307 + $0x130] sm:$0xff]
    %v2347 = vld [vmem:[%s2307 + $0x138] sm:$0xff]
    %v2348 = vld [vmem:[%s2307 + $0x140] sm:$0xff]
    %v2349 = vld [vmem:[%s2307 + $0x148] sm:$0xff]
    %v2350 = vld [vmem:[%s2307 + $0x150] sm:$0xff]
    %v2351 = vld [vmem:[%s2307 + $0x158] sm:$0xff]
    %v2352 = vld [vmem:[%s2307 + $0x160] sm:$0xff]
    %v2353 = vld [vmem:[%s2307 + $0x168] sm:$0xff]
    %v2354 = vld [vmem:[%s2307 + $0x170] sm:$0xff]
    %v2355 = vld [vmem:[%s2307 + $0x178] sm:$0xff]
    %v2356 = vld [vmem:[%s2307 + $0x180] sm:$0xff]
    %v2357 = vld [vmem:[%s2307 + $0x188] sm:$0xff]
    %v2358 = vld [vmem:[%s2307 + $0x190] sm:$0xff]
    %v2359 = vld [vmem:[%s2307 + $0x198] sm:$0xff]
    %v2360 = vld [vmem:[%s2307 + $0x1a0] sm:$0xff]
    %v2361 = vld [vmem:[%s2307 + $0x1a8] sm:$0xff]
    %v2362 = vld [vmem:[%s2307 + $0x1b0] sm:$0xff]
    %v2363 = vld [vmem:[%s2307 + $0x1b8] sm:$0xff]
    %v2364 = vld [vmem:[%s2307 + $0x1c0] sm:$0xff]
    %v2365 = vld [vmem:[%s2307 + $0x1c8] sm:$0xff]
    %v2366 = vld [vmem:[%s2307 + $0x1d0] sm:$0xff]
    %v2367 = vld [vmem:[%s2307 + $0x1d8] sm:$0xff]
    %v2368 = vld [vmem:[%s2307 + $0x1e0] sm:$0xff]
    %v2369 = vld [vmem:[%s2307 + $0x1e8] sm:$0xff]
    %v2370 = vld [vmem:[%s2307 + $0x1f0] sm:$0xff]
    %v2371 = vld [vmem:[%s2307 + $0x1f8] sm:$0xff]
    %s2372 = scalar_lea.vmem %s45, 2
    %v2373 = vld [vmem:[%s2372] sm:$0x3]
    %v2375 = vlaneseq
    %v2376 = vshrl.u32 %v2375, 7
    %v2377 = vsub.s32 0, %v2376
    %v2378 = vrot.slane %v2373, %v2377
    %v2379 = vlaneseq
    %v2380 = vshrl.u32 %v2379, 7
    %v2381 = vsub.s32 1, %v2380
    %v2382 = vrot.slane %v2373, %v2381
    %2385 = vmatprep.subr.mxu0 %v2309
    %2386 = vmatpush1.msra.mxu0 %v2308
    %2387 = vmatprep.subr.mxu0 %v2311
    %2388 = vmatpush1.msra.mxu0 %v2310
    %2389 = vmatprep.subr.mxu0 %v2313
    %2390 = vmatpush1.msra.mxu0 %v2312
    %2391 = vmatprep.subr.mxu0 %v2315
    %2392 = vmatpush1.msra.mxu0 %v2314
    %2393 = vmatprep.subr.mxu0 %v2317
    %2394 = vmatpush1.msra.mxu0 %v2316
    %2395 = vmatprep.subr.mxu0 %v2319
    %2396 = vmatpush1.msra.mxu0 %v2318
    %2397 = vmatprep.subr.mxu0 %v2321
    %2398 = vmatpush1.msra.mxu0 %v2320
    %2399 = vmatprep.subr.mxu0 %v2323
    %2400 = vmatpush1.msra.mxu0 %v2322
    %2401 = vmatprep.subr.mxu0 %v2325
    %2402 = vmatpush1.msra.mxu0 %v2324
    %2403 = vmatprep.subr.mxu0 %v2327
    %2404 = vmatpush1.msra.mxu0 %v2326
    %2405 = vmatprep.subr.mxu0 %v2329
    %2406 = vmatpush1.msra.mxu0 %v2328
    %2407 = vmatprep.subr.mxu0 %v2331
    %2408 = vmatpush1.msra.mxu0 %v2330
    %2409 = vmatprep.subr.mxu0 %v2333
    %2410 = vmatpush1.msra.mxu0 %v2332
    %2411 = vmatprep.subr.mxu0 %v2335
    %2412 = vmatpush1.msra.mxu0 %v2334
    %2413 = vmatprep.subr.mxu0 %v2337
    %2414 = vmatpush1.msra.mxu0 %v2336
    %2415 = vmatprep.subr.mxu0 %v2339
    %2416 = vmatpush1.msra.mxu0 %v2338
    %2417 = vmatprep.subr.mxu0 %v2341
    %2418 = vmatpush1.msra.mxu0 %v2340
    %2419 = vmatprep.subr.mxu0 %v2343
    %2420 = vmatpush1.msra.mxu0 %v2342
    %2421 = vmatprep.subr.mxu0 %v2345
    %2422 = vmatpush1.msra.mxu0 %v2344
    %2423 = vmatprep.subr.mxu0 %v2347
    %2424 = vmatpush1.msra.mxu0 %v2346
    %2425 = vmatprep.subr.mxu0 %v2349
    %2426 = vmatpush1.msra.mxu0 %v2348
    %2427 = vmatprep.subr.mxu0 %v2351
    %2428 = vmatpush1.msra.mxu0 %v2350
    %2429 = vmatprep.subr.mxu0 %v2353
    %2430 = vmatpush1.msra.mxu0 %v2352
    %2431 = vmatprep.subr.mxu0 %v2355
    %2432 = vmatpush1.msra.mxu0 %v2354
    %2433 = vmatprep.subr.mxu0 %v2357
    %2434 = vmatpush1.msra.mxu0 %v2356
    %2435 = vmatprep.subr.mxu0 %v2359
    %2436 = vmatpush1.msra.mxu0 %v2358
    %2437 = vmatprep.subr.mxu0 %v2361
    %2438 = vmatpush1.msra.mxu0 %v2360
    %2439 = vmatprep.subr.mxu0 %v2363
    %2440 = vmatpush1.msra.mxu0 %v2362
    %2441 = vmatprep.subr.mxu0 %v2365
    %2442 = vmatpush1.msra.mxu0 %v2364
    %2443 = vmatprep.subr.mxu0 %v2367
    %2444 = vmatpush1.msra.mxu0 %v2366
    %2445 = vmatprep.subr.mxu0 %v2369
    %2446 = vmatpush1.msra.mxu0 %v2368
    %2447 = vmatprep.subr.mxu0 %v2371
    %2448 = vmatpush1.msra.mxu0 %v2370
    %2449 = vmatprep.mubr.f32.mxu0 %v2305
    %2450 = vmatmul.mubr.f32.gmra.mrb[0].mxu0 %v2303
    %v2451 = vpop.f32.mrb[0].mxu0
    %v2452 = vadd.f32 %v2378, %v2451
    %v2453 = vpop.f32.mrb[0].mxu0
    %v2454 = vadd.f32 %v2382, %v2453
    %2455 = vdwg.mxu0
    %v2456 = vadd.f32 %v2156, %v2452
    %v2457 = vadd.f32 %v2157, %v2454
    %s2458 = scalar_lea.vmem %s55, 2
    %v2459 = vld [vmem:[%s2458] sm:$0x3]
    %s2460 = scalar_lea.vmem %s57, 2
    %v2461 = vld [vmem:[%s2460] sm:$0x3]
    %v2462 = vadd.f32 %v2456, %v2457
    %2463 = vadd.xlane.f32.xlu0 %v2462
    %v2464 = vpop.xlane.xlu0 %2463
    %v2465 = vmul.f32 %v2464, %v1610
    %v2466 = vsub.f32 %v2456, %v2465
    %v2467 = vsub.f32 %v2457, %v2465
    %v2468 = vmul.f32 %v2466, %v2466
    %v2469 = vmul.f32 %v2467, %v2467
    %v2470 = vadd.f32 %v2468, %v2469
    %2471 = vadd.xlane.f32.xlu0 %v2470
    %v2472 = vpop.xlane.xlu0 %2471
    %v2473 = vmul.f32 %v2472, %v1610
    %v2474 = vadd.f32 %v2473, 1e-05
    %v2475 = vrsqrt.pop %v2474
    %v2476 = vmul.f32 %v2466, %v2475
    %v2477 = vmul.f32 %v2467, %v2475
    %v2479 = vlaneseq
    %v2480 = vshrl.u32 %v2479, 7
    %v2481 = vsub.s32 0, %v2480
    %v2482 = vrot.slane %v2459, %v2481
    %v2483 = vlaneseq
    %v2484 = vshrl.u32 %v2483, 7
    %v2485 = vsub.s32 1, %v2484
    %v2486 = vrot.slane %v2459, %v2485
    %v2489 = vmul.f32 %v2476, %v2482
    %v2490 = vmul.f32 %v2477, %v2486
    %v2492 = vlaneseq
    %v2493 = vshrl.u32 %v2492, 7
    %v2494 = vsub.s32 0, %v2493
    %v2495 = vrot.slane %v2461, %v2494
    %v2496 = vlaneseq
    %v2497 = vshrl.u32 %v2496, 7
    %v2498 = vsub.s32 1, %v2497
    %v2499 = vrot.slane %v2461, %v2498
    %v2502 = vadd.f32 %v2489, %v2495
    %v2503 = vadd.f32 %v2490, %v2499
    %s2504 = scalar_lea.vmem [#allocation22], 512
    %v2505 = vld [vmem:[%s2504] sm:$0xff]
    %v2506 = vld [vmem:[%s2504 + $0x8] sm:$0xff]
    %v2507 = vld [vmem:[%s2504 + $0x10] sm:$0xff]
    %v2508 = vld [vmem:[%s2504 + $0x18] sm:$0xff]
    %v2509 = vld [vmem:[%s2504 + $0x20] sm:$0xff]
    %v2510 = vld [vmem:[%s2504 + $0x28] sm:$0xff]
    %v2511 = vld [vmem:[%s2504 + $0x30] sm:$0xff]
    %v2512 = vld [vmem:[%s2504 + $0x38] sm:$0xff]
    %v2513 = vld [vmem:[%s2504 + $0x40] sm:$0xff]
    %v2514 = vld [vmem:[%s2504 + $0x48] sm:$0xff]
    %v2515 = vld [vmem:[%s2504 + $0x50] sm:$0xff]
    %v2516 = vld [vmem:[%s2504 + $0x58] sm:$0xff]
    %v2517 = vld [vmem:[%s2504 + $0x60] sm:$0xff]
    %v2518 = vld [vmem:[%s2504 + $0x68] sm:$0xff]
    %v2519 = vld [vmem:[%s2504 + $0x70] sm:$0xff]
    %v2520 = vld [vmem:[%s2504 + $0x78] sm:$0xff]
    %v2521 = vld [vmem:[%s2504 + $0x80] sm:$0xff]
    %v2522 = vld [vmem:[%s2504 + $0x88] sm:$0xff]
    %v2523 = vld [vmem:[%s2504 + $0x90] sm:$0xff]
    %v2524 = vld [vmem:[%s2504 + $0x98] sm:$0xff]
    %v2525 = vld [vmem:[%s2504 + $0xa0] sm:$0xff]
    %v2526 = vld [vmem:[%s2504 + $0xa8] sm:$0xff]
    %v2527 = vld [vmem:[%s2504 + $0xb0] sm:$0xff]
    %v2528 = vld [vmem:[%s2504 + $0xb8] sm:$0xff]
    %v2529 = vld [vmem:[%s2504 + $0xc0] sm:$0xff]
    %v2530 = vld [vmem:[%s2504 + $0xc8] sm:$0xff]
    %v2531 = vld [vmem:[%s2504 + $0xd0] sm:$0xff]
    %v2532 = vld [vmem:[%s2504 + $0xd8] sm:$0xff]
    %v2533 = vld [vmem:[%s2504 + $0xe0] sm:$0xff]
    %v2534 = vld [vmem:[%s2504 + $0xe8] sm:$0xff]
    %v2535 = vld [vmem:[%s2504 + $0xf0] sm:$0xff]
    %v2536 = vld [vmem:[%s2504 + $0xf8] sm:$0xff]
    %v2537 = vld [vmem:[%s2504 + $0x100] sm:$0xff]
    %v2538 = vld [vmem:[%s2504 + $0x108] sm:$0xff]
    %v2539 = vld [vmem:[%s2504 + $0x110] sm:$0xff]
    %v2540 = vld [vmem:[%s2504 + $0x118] sm:$0xff]
    %v2541 = vld [vmem:[%s2504 + $0x120] sm:$0xff]
    %v2542 = vld [vmem:[%s2504 + $0x128] sm:$0xff]
    %v2543 = vld [vmem:[%s2504 + $0x130] sm:$0xff]
    %v2544 = vld [vmem:[%s2504 + $0x138] sm:$0xff]
    %v2545 = vld [vmem:[%s2504 + $0x140] sm:$0xff]
    %v2546 = vld [vmem:[%s2504 + $0x148] sm:$0xff]
    %v2547 = vld [vmem:[%s2504 + $0x150] sm:$0xff]
    %v2548 = vld [vmem:[%s2504 + $0x158] sm:$0xff]
    %v2549 = vld [vmem:[%s2504 + $0x160] sm:$0xff]
    %v2550 = vld [vmem:[%s2504 + $0x168] sm:$0xff]
    %v2551 = vld [vmem:[%s2504 + $0x170] sm:$0xff]
    %v2552 = vld [vmem:[%s2504 + $0x178] sm:$0xff]
    %v2553 = vld [vmem:[%s2504 + $0x180] sm:$0xff]
    %v2554 = vld [vmem:[%s2504 + $0x188] sm:$0xff]
    %v2555 = vld [vmem:[%s2504 + $0x190] sm:$0xff]
    %v2556 = vld [vmem:[%s2504 + $0x198] sm:$0xff]
    %v2557 = vld [vmem:[%s2504 + $0x1a0] sm:$0xff]
    %v2558 = vld [vmem:[%s2504 + $0x1a8] sm:$0xff]
    %v2559 = vld [vmem:[%s2504 + $0x1b0] sm:$0xff]
    %v2560 = vld [vmem:[%s2504 + $0x1b8] sm:$0xff]
    %v2561 = vld [vmem:[%s2504 + $0x1c0] sm:$0xff]
    %v2562 = vld [vmem:[%s2504 + $0x1c8] sm:$0xff]
    %v2563 = vld [vmem:[%s2504 + $0x1d0] sm:$0xff]
    %v2564 = vld [vmem:[%s2504 + $0x1d8] sm:$0xff]
    %v2565 = vld [vmem:[%s2504 + $0x1e0] sm:$0xff]
    %v2566 = vld [vmem:[%s2504 + $0x1e8] sm:$0xff]
    %v2567 = vld [vmem:[%s2504 + $0x1f0] sm:$0xff]
    %v2568 = vld [vmem:[%s2504 + $0x1f8] sm:$0xff]
    %s2569 = scalar_lea.vmem %s49, 2
    %v2570 = vld [vmem:[%s2569] sm:$0x3]
    %v2572 = vlaneseq
    %v2573 = vshrl.u32 %v2572, 7
    %v2574 = vsub.s32 0, %v2573
    %v2575 = vrot.slane %v2570, %v2574
    %v2576 = vlaneseq
    %v2577 = vshrl.u32 %v2576, 7
    %v2578 = vsub.s32 1, %v2577
    %v2579 = vrot.slane %v2570, %v2578
    %2582 = vmatprep.subr.mxu0 %v2506
    %2583 = vmatpush1.msra.mxu0 %v2505
    %2584 = vmatprep.subr.mxu0 %v2508
    %2585 = vmatpush1.msra.mxu0 %v2507
    %2586 = vmatprep.subr.mxu0 %v2510
    %2587 = vmatpush1.msra.mxu0 %v2509
    %2588 = vmatprep.subr.mxu0 %v2512
    %2589 = vmatpush1.msra.mxu0 %v2511
    %2590 = vmatprep.subr.mxu0 %v2514
    %2591 = vmatpush1.msra.mxu0 %v2513
    %2592 = vmatprep.subr.mxu0 %v2516
    %2593 = vmatpush1.msra.mxu0 %v2515
    %2594 = vmatprep.subr.mxu0 %v2518
    %2595 = vmatpush1.msra.mxu0 %v2517
    %2596 = vmatprep.subr.mxu0 %v2520
    %2597 = vmatpush1.msra.mxu0 %v2519
    %2598 = vmatprep.subr.mxu0 %v2522
    %2599 = vmatpush1.msra.mxu0 %v2521
    %2600 = vmatprep.subr.mxu0 %v2524
    %2601 = vmatpush1.msra.mxu0 %v2523
    %2602 = vmatprep.subr.mxu0 %v2526
    %2603 = vmatpush1.msra.mxu0 %v2525
    %2604 = vmatprep.subr.mxu0 %v2528
    %2605 = vmatpush1.msra.mxu0 %v2527
    %2606 = vmatprep.subr.mxu0 %v2530
    %2607 = vmatpush1.msra.mxu0 %v2529
    %2608 = vmatprep.subr.mxu0 %v2532
    %2609 = vmatpush1.msra.mxu0 %v2531
    %2610 = vmatprep.subr.mxu0 %v2534
    %2611 = vmatpush1.msra.mxu0 %v2533
    %2612 = vmatprep.subr.mxu0 %v2536
    %2613 = vmatpush1.msra.mxu0 %v2535
    %2614 = vmatprep.subr.mxu0 %v2538
    %2615 = vmatpush1.msra.mxu0 %v2537
    %2616 = vmatprep.subr.mxu0 %v2540
    %2617 = vmatpush1.msra.mxu0 %v2539
    %2618 = vmatprep.subr.mxu0 %v2542
    %2619 = vmatpush1.msra.mxu0 %v2541
    %2620 = vmatprep.subr.mxu0 %v2544
    %2621 = vmatpush1.msra.mxu0 %v2543
    %2622 = vmatprep.subr.mxu0 %v2546
    %2623 = vmatpush1.msra.mxu0 %v2545
    %2624 = vmatprep.subr.mxu0 %v2548
    %2625 = vmatpush1.msra.mxu0 %v2547
    %2626 = vmatprep.subr.mxu0 %v2550
    %2627 = vmatpush1.msra.mxu0 %v2549
    %2628 = vmatprep.subr.mxu0 %v2552
    %2629 = vmatpush1.msra.mxu0 %v2551
    %2630 = vmatprep.subr.mxu0 %v2554
    %2631 = vmatpush1.msra.mxu0 %v2553
    %2632 = vmatprep.subr.mxu0 %v2556
    %2633 = vmatpush1.msra.mxu0 %v2555
    %2634 = vmatprep.subr.mxu0 %v2558
    %2635 = vmatpush1.msra.mxu0 %v2557
    %2636 = vmatprep.subr.mxu0 %v2560
    %2637 = vmatpush1.msra.mxu0 %v2559
    %2638 = vmatprep.subr.mxu0 %v2562
    %2639 = vmatpush1.msra.mxu0 %v2561
    %2640 = vmatprep.subr.mxu0 %v2564
    %2641 = vmatpush1.msra.mxu0 %v2563
    %2642 = vmatprep.subr.mxu0 %v2566
    %2643 = vmatpush1.msra.mxu0 %v2565
    %2644 = vmatprep.subr.mxu0 %v2568
    %2645 = vmatpush1.msra.mxu0 %v2567
    %2646 = vmatprep.mubr.f32.mxu0 %v2503
    %2647 = vmatmul.mubr.f32.gmra.mrb[0].mxu0 %v2502
    %v2648 = vpop.f32.mrb[0].mxu0
    %v2649 = vadd.f32 %v2575, %v2648
    %v2650 = vpop.f32.mrb[0].mxu0
    %v2651 = vadd.f32 %v2579, %v2650
    %2652 = vdwg.mxu0
    %v2653 = vmax.f32 %v2649, 0.0
    %v2654 = vmax.f32 %v2651, 0.0
    %s2655 = scalar_lea.vmem [#allocation24], 512
    %v2656 = vld [vmem:[%s2655] sm:$0xff]
    %v2657 = vld [vmem:[%s2655 + $0x8] sm:$0xff]
    %v2658 = vld [vmem:[%s2655 + $0x10] sm:$0xff]
    %v2659 = vld [vmem:[%s2655 + $0x18] sm:$0xff]
    %v2660 = vld [vmem:[%s2655 + $0x20] sm:$0xff]
    %v2661 = vld [vmem:[%s2655 + $0x28] sm:$0xff]
    %v2662 = vld [vmem:[%s2655 + $0x30] sm:$0xff]
    %v2663 = vld [vmem:[%s2655 + $0x38] sm:$0xff]
    %v2664 = vld [vmem:[%s2655 + $0x40] sm:$0xff]
    %v2665 = vld [vmem:[%s2655 + $0x48] sm:$0xff]
    %v2666 = vld [vmem:[%s2655 + $0x50] sm:$0xff]
    %v2667 = vld [vmem:[%s2655 + $0x58] sm:$0xff]
    %v2668 = vld [vmem:[%s2655 + $0x60] sm:$0xff]
    %v2669 = vld [vmem:[%s2655 + $0x68] sm:$0xff]
    %v2670 = vld [vmem:[%s2655 + $0x70] sm:$0xff]
    %v2671 = vld [vmem:[%s2655 + $0x78] sm:$0xff]
    %v2672 = vld [vmem:[%s2655 + $0x80] sm:$0xff]
    %v2673 = vld [vmem:[%s2655 + $0x88] sm:$0xff]
    %v2674 = vld [vmem:[%s2655 + $0x90] sm:$0xff]
    %v2675 = vld [vmem:[%s2655 + $0x98] sm:$0xff]
    %v2676 = vld [vmem:[%s2655 + $0xa0] sm:$0xff]
    %v2677 = vld [vmem:[%s2655 + $0xa8] sm:$0xff]
    %v2678 = vld [vmem:[%s2655 + $0xb0] sm:$0xff]
    %v2679 = vld [vmem:[%s2655 + $0xb8] sm:$0xff]
    %v2680 = vld [vmem:[%s2655 + $0xc0] sm:$0xff]
    %v2681 = vld [vmem:[%s2655 + $0xc8] sm:$0xff]
    %v2682 = vld [vmem:[%s2655 + $0xd0] sm:$0xff]
    %v2683 = vld [vmem:[%s2655 + $0xd8] sm:$0xff]
    %v2684 = vld [vmem:[%s2655 + $0xe0] sm:$0xff]
    %v2685 = vld [vmem:[%s2655 + $0xe8] sm:$0xff]
    %v2686 = vld [vmem:[%s2655 + $0xf0] sm:$0xff]
    %v2687 = vld [vmem:[%s2655 + $0xf8] sm:$0xff]
    %v2688 = vld [vmem:[%s2655 + $0x100] sm:$0xff]
    %v2689 = vld [vmem:[%s2655 + $0x108] sm:$0xff]
    %v2690 = vld [vmem:[%s2655 + $0x110] sm:$0xff]
    %v2691 = vld [vmem:[%s2655 + $0x118] sm:$0xff]
    %v2692 = vld [vmem:[%s2655 + $0x120] sm:$0xff]
    %v2693 = vld [vmem:[%s2655 + $0x128] sm:$0xff]
    %v2694 = vld [vmem:[%s2655 + $0x130] sm:$0xff]
    %v2695 = vld [vmem:[%s2655 + $0x138] sm:$0xff]
    %v2696 = vld [vmem:[%s2655 + $0x140] sm:$0xff]
    %v2697 = vld [vmem:[%s2655 + $0x148] sm:$0xff]
    %v2698 = vld [vmem:[%s2655 + $0x150] sm:$0xff]
    %v2699 = vld [vmem:[%s2655 + $0x158] sm:$0xff]
    %v2700 = vld [vmem:[%s2655 + $0x160] sm:$0xff]
    %v2701 = vld [vmem:[%s2655 + $0x168] sm:$0xff]
    %v2702 = vld [vmem:[%s2655 + $0x170] sm:$0xff]
    %v2703 = vld [vmem:[%s2655 + $0x178] sm:$0xff]
    %v2704 = vld [vmem:[%s2655 + $0x180] sm:$0xff]
    %v2705 = vld [vmem:[%s2655 + $0x188] sm:$0xff]
    %v2706 = vld [vmem:[%s2655 + $0x190] sm:$0xff]
    %v2707 = vld [vmem:[%s2655 + $0x198] sm:$0xff]
    %v2708 = vld [vmem:[%s2655 + $0x1a0] sm:$0xff]
    %v2709 = vld [vmem:[%s2655 + $0x1a8] sm:$0xff]
    %v2710 = vld [vmem:[%s2655 + $0x1b0] sm:$0xff]
    %v2711 = vld [vmem:[%s2655 + $0x1b8] sm:$0xff]
    %v2712 = vld [vmem:[%s2655 + $0x1c0] sm:$0xff]
    %v2713 = vld [vmem:[%s2655 + $0x1c8] sm:$0xff]
    %v2714 = vld [vmem:[%s2655 + $0x1d0] sm:$0xff]
    %v2715 = vld [vmem:[%s2655 + $0x1d8] sm:$0xff]
    %v2716 = vld [vmem:[%s2655 + $0x1e0] sm:$0xff]
    %v2717 = vld [vmem:[%s2655 + $0x1e8] sm:$0xff]
    %v2718 = vld [vmem:[%s2655 + $0x1f0] sm:$0xff]
    %v2719 = vld [vmem:[%s2655 + $0x1f8] sm:$0xff]
    %s2720 = scalar_lea.vmem %s53, 2
    %v2721 = vld [vmem:[%s2720] sm:$0x3]
    %v2723 = vlaneseq
    %v2724 = vshrl.u32 %v2723, 7
    %v2725 = vsub.s32 0, %v2724
    %v2726 = vrot.slane %v2721, %v2725
    %v2727 = vlaneseq
    %v2728 = vshrl.u32 %v2727, 7
    %v2729 = vsub.s32 1, %v2728
    %v2730 = vrot.slane %v2721, %v2729
    %2733 = vmatprep.subr.mxu0 %v2657
    %2734 = vmatpush1.msra.mxu0 %v2656
    %2735 = vmatprep.subr.mxu0 %v2659
    %2736 = vmatpush1.msra.mxu0 %v2658
    %2737 = vmatprep.subr.mxu0 %v2661
    %2738 = vmatpush1.msra.mxu0 %v2660
    %2739 = vmatprep.subr.mxu0 %v2663
    %2740 = vmatpush1.msra.mxu0 %v2662
    %2741 = vmatprep.subr.mxu0 %v2665
    %2742 = vmatpush1.msra.mxu0 %v2664
    %2743 = vmatprep.subr.mxu0 %v2667
    %2744 = vmatpush1.msra.mxu0 %v2666
    %2745 = vmatprep.subr.mxu0 %v2669
    %2746 = vmatpush1.msra.mxu0 %v2668
    %2747 = vmatprep.subr.mxu0 %v2671
    %2748 = vmatpush1.msra.mxu0 %v2670
    %2749 = vmatprep.subr.mxu0 %v2673
    %2750 = vmatpush1.msra.mxu0 %v2672
    %2751 = vmatprep.subr.mxu0 %v2675
    %2752 = vmatpush1.msra.mxu0 %v2674
    %2753 = vmatprep.subr.mxu0 %v2677
    %2754 = vmatpush1.msra.mxu0 %v2676
    %2755 = vmatprep.subr.mxu0 %v2679
    %2756 = vmatpush1.msra.mxu0 %v2678
    %2757 = vmatprep.subr.mxu0 %v2681
    %2758 = vmatpush1.msra.mxu0 %v2680
    %2759 = vmatprep.subr.mxu0 %v2683
    %2760 = vmatpush1.msra.mxu0 %v2682
    %2761 = vmatprep.subr.mxu0 %v2685
    %2762 = vmatpush1.msra.mxu0 %v2684
    %2763 = vmatprep.subr.mxu0 %v2687
    %2764 = vmatpush1.msra.mxu0 %v2686
    %2765 = vmatprep.subr.mxu0 %v2689
    %2766 = vmatpush1.msra.mxu0 %v2688
    %2767 = vmatprep.subr.mxu0 %v2691
    %2768 = vmatpush1.msra.mxu0 %v2690
    %2769 = vmatprep.subr.mxu0 %v2693
    %2770 = vmatpush1.msra.mxu0 %v2692
    %2771 = vmatprep.subr.mxu0 %v2695
    %2772 = vmatpush1.msra.mxu0 %v2694
    %2773 = vmatprep.subr.mxu0 %v2697
    %2774 = vmatpush1.msra.mxu0 %v2696
    %2775 = vmatprep.subr.mxu0 %v2699
    %2776 = vmatpush1.msra.mxu0 %v2698
    %2777 = vmatprep.subr.mxu0 %v2701
    %2778 = vmatpush1.msra.mxu0 %v2700
    %2779 = vmatprep.subr.mxu0 %v2703
    %2780 = vmatpush1.msra.mxu0 %v2702
    %2781 = vmatprep.subr.mxu0 %v2705
    %2782 = vmatpush1.msra.mxu0 %v2704
    %2783 = vmatprep.subr.mxu0 %v2707
    %2784 = vmatpush1.msra.mxu0 %v2706
    %2785 = vmatprep.subr.mxu0 %v2709
    %2786 = vmatpush1.msra.mxu0 %v2708
    %2787 = vmatprep.subr.mxu0 %v2711
    %2788 = vmatpush1.msra.mxu0 %v2710
    %2789 = vmatprep.subr.mxu0 %v2713
    %2790 = vmatpush1.msra.mxu0 %v2712
    %2791 = vmatprep.subr.mxu0 %v2715
    %2792 = vmatpush1.msra.mxu0 %v2714
    %2793 = vmatprep.subr.mxu0 %v2717
    %2794 = vmatpush1.msra.mxu0 %v2716
    %2795 = vmatprep.subr.mxu0 %v2719
    %2796 = vmatpush1.msra.mxu0 %v2718
    %2797 = vmatprep.mubr.f32.mxu0 %v2654
    %2798 = vmatmul.mubr.f32.gmra.mrb[0].mxu0 %v2653
    %v2799 = vpop.f32.mrb[0].mxu0
    %v2800 = vadd.f32 %v2726, %v2799
    %v2801 = vpop.f32.mrb[0].mxu0
    %v2802 = vadd.f32 %v2730, %v2801
    %2803 = vdwg.mxu0
    %v2804 = vadd.f32 %v2502, %v2800
    %v2805 = vadd.f32 %v2503, %v2802
    %s2806 = scalar_lea.vmem %s59, 2
    %v2807 = vld [vmem:[%s2806] sm:$0x3]
    %s2808 = scalar_lea.vmem %s61, 2
    %v2809 = vld [vmem:[%s2808] sm:$0x3]
    %v2810 = vadd.f32 %v2804, %v2805
    %2811 = vadd.xlane.f32.xlu0 %v2810
    %v2812 = vpop.xlane.xlu0 %2811
    %v2813 = vmul.f32 %v2812, %v1610
    %v2814 = vsub.f32 %v2804, %v2813
    %v2815 = vsub.f32 %v2805, %v2813
    %v2816 = vmul.f32 %v2814, %v2814
    %v2817 = vmul.f32 %v2815, %v2815
    %v2818 = vadd.f32 %v2816, %v2817
    %2819 = vadd.xlane.f32.xlu0 %v2818
    %v2820 = vpop.xlane.xlu0 %2819
    %v2821 = vmul.f32 %v2820, %v1610
    %v2822 = vadd.f32 %v2821, 1e-05
    %v2823 = vrsqrt.pop %v2822
    %v2824 = vmul.f32 %v2814, %v2823
    %v2825 = vmul.f32 %v2815, %v2823
    %v2827 = vlaneseq
    %v2828 = vshrl.u32 %v2827, 7
    %v2829 = vsub.s32 0, %v2828
    %v2830 = vrot.slane %v2807, %v2829
    %v2831 = vlaneseq
    %v2832 = vshrl.u32 %v2831, 7
    %v2833 = vsub.s32 1, %v2832
    %v2834 = vrot.slane %v2807, %v2833
    %v2837 = vmul.f32 %v2824, %v2830
    %v2838 = vmul.f32 %v2825, %v2834
    %v2840 = vlaneseq
    %v2841 = vshrl.u32 %v2840, 7
    %v2842 = vsub.s32 0, %v2841
    %v2843 = vrot.slane %v2809, %v2842
    %v2844 = vlaneseq
    %v2845 = vshrl.u32 %v2844, 7
    %v2846 = vsub.s32 1, %v2845
    %v2847 = vrot.slane %v2809, %v2846
    %v2850 = vadd.f32 %v2837, %v2843
    %v2851 = vadd.f32 %v2838, %v2847
    %s2852 = scalar_lea.vmem [#allocation18], 1024
    %v2853 = vld [vmem:[%s2852] sm:$0xff]
    %v2854 = vld [vmem:[%s2852 + $0x8] sm:$0xff]
    %v2855 = vld [vmem:[%s2852 + $0x10] sm:$0xff]
    %v2856 = vld [vmem:[%s2852 + $0x18] sm:$0xff]
    %v2857 = vld [vmem:[%s2852 + $0x20] sm:$0xff]
    %v2858 = vld [vmem:[%s2852 + $0x28] sm:$0xff]
    %v2859 = vld [vmem:[%s2852 + $0x30] sm:$0xff]
    %v2860 = vld [vmem:[%s2852 + $0x38] sm:$0xff]
    %v2861 = vld [vmem:[%s2852 + $0x40] sm:$0xff]
    %v2862 = vld [vmem:[%s2852 + $0x48] sm:$0xff]
    %v2863 = vld [vmem:[%s2852 + $0x50] sm:$0xff]
    %v2864 = vld [vmem:[%s2852 + $0x58] sm:$0xff]
    %v2865 = vld [vmem:[%s2852 + $0x60] sm:$0xff]
    %v2866 = vld [vmem:[%s2852 + $0x68] sm:$0xff]
    %v2867 = vld [vmem:[%s2852 + $0x70] sm:$0xff]
    %v2868 = vld [vmem:[%s2852 + $0x78] sm:$0xff]
    %v2869 = vld [vmem:[%s2852 + $0x80] sm:$0xff]
    %v2870 = vld [vmem:[%s2852 + $0x88] sm:$0xff]
    %v2871 = vld [vmem:[%s2852 + $0x90] sm:$0xff]
    %v2872 = vld [vmem:[%s2852 + $0x98] sm:$0xff]
    %v2873 = vld [vmem:[%s2852 + $0xa0] sm:$0xff]
    %v2874 = vld [vmem:[%s2852 + $0xa8] sm:$0xff]
    %v2875 = vld [vmem:[%s2852 + $0xb0] sm:$0xff]
    %v2876 = vld [vmem:[%s2852 + $0xb8] sm:$0xff]
    %v2877 = vld [vmem:[%s2852 + $0xc0] sm:$0xff]
    %v2878 = vld [vmem:[%s2852 + $0xc8] sm:$0xff]
    %v2879 = vld [vmem:[%s2852 + $0xd0] sm:$0xff]
    %v2880 = vld [vmem:[%s2852 + $0xd8] sm:$0xff]
    %v2881 = vld [vmem:[%s2852 + $0xe0] sm:$0xff]
    %v2882 = vld [vmem:[%s2852 + $0xe8] sm:$0xff]
    %v2883 = vld [vmem:[%s2852 + $0xf0] sm:$0xff]
    %v2884 = vld [vmem:[%s2852 + $0xf8] sm:$0xff]
    %v2885 = vld [vmem:[%s2852 + $0x100] sm:$0xff]
    %v2886 = vld [vmem:[%s2852 + $0x108] sm:$0xff]
    %v2887 = vld [vmem:[%s2852 + $0x110] sm:$0xff]
    %v2888 = vld [vmem:[%s2852 + $0x118] sm:$0xff]
    %v2889 = vld [vmem:[%s2852 + $0x120] sm:$0xff]
    %v2890 = vld [vmem:[%s2852 + $0x128] sm:$0xff]
    %v2891 = vld [vmem:[%s2852 + $0x130] sm:$0xff]
    %v2892 = vld [vmem:[%s2852 + $0x138] sm:$0xff]
    %v2893 = vld [vmem:[%s2852 + $0x140] sm:$0xff]
    %v2894 = vld [vmem:[%s2852 + $0x148] sm:$0xff]
    %v2895 = vld [vmem:[%s2852 + $0x150] sm:$0xff]
    %v2896 = vld [vmem:[%s2852 + $0x158] sm:$0xff]
    %v2897 = vld [vmem:[%s2852 + $0x160] sm:$0xff]
    %v2898 = vld [vmem:[%s2852 + $0x168] sm:$0xff]
    %v2899 = vld [vmem:[%s2852 + $0x170] sm:$0xff]
    %v2900 = vld [vmem:[%s2852 + $0x178] sm:$0xff]
    %v2901 = vld [vmem:[%s2852 + $0x180] sm:$0xff]
    %v2902 = vld [vmem:[%s2852 + $0x188] sm:$0xff]
    %v2903 = vld [vmem:[%s2852 + $0x190] sm:$0xff]
    %v2904 = vld [vmem:[%s2852 + $0x198] sm:$0xff]
    %v2905 = vld [vmem:[%s2852 + $0x1a0] sm:$0xff]
    %v2906 = vld [vmem:[%s2852 + $0x1a8] sm:$0xff]
    %v2907 = vld [vmem:[%s2852 + $0x1b0] sm:$0xff]
    %v2908 = vld [vmem:[%s2852 + $0x1b8] sm:$0xff]
    %v2909 = vld [vmem:[%s2852 + $0x1c0] sm:$0xff]
    %v2910 = vld [vmem:[%s2852 + $0x1c8] sm:$0xff]
    %v2911 = vld [vmem:[%s2852 + $0x1d0] sm:$0xff]
    %v2912 = vld [vmem:[%s2852 + $0x1d8] sm:$0xff]
    %v2913 = vld [vmem:[%s2852 + $0x1e0] sm:$0xff]
    %v2914 = vld [vmem:[%s2852 + $0x1e8] sm:$0xff]
    %v2915 = vld [vmem:[%s2852 + $0x1f0] sm:$0xff]
    %v2916 = vld [vmem:[%s2852 + $0x1f8] sm:$0xff]
    %s2917 = scalar_lea.vmem %s37, 4
    %v2918 = vld [vmem:[%s2917] sm:$0x3]
    %v2920 = vlaneseq
    %v2921 = vshrl.u32 %v2920, 7
    %v2922 = vsub.s32 0, %v2921
    %v2923 = vrot.slane %v2918, %v2922
    %v2924 = vlaneseq
    %v2925 = vshrl.u32 %v2924, 7
    %v2926 = vsub.s32 1, %v2925
    %v2927 = vrot.slane %v2918, %v2926
    %2930 = vmatprep.subr.mxu0 %v2854
    %2931 = vmatpush1.msra.mxu0 %v2853
    %2932 = vmatprep.subr.mxu0 %v2856
    %2933 = vmatpush1.msra.mxu0 %v2855
    %2934 = vmatprep.subr.mxu0 %v2858
    %2935 = vmatpush1.msra.mxu0 %v2857
    %2936 = vmatprep.subr.mxu0 %v2860
    %2937 = vmatpush1.msra.mxu0 %v2859
    %2938 = vmatprep.subr.mxu0 %v2862
    %2939 = vmatpush1.msra.mxu0 %v2861
    %2940 = vmatprep.subr.mxu0 %v2864
    %2941 = vmatpush1.msra.mxu0 %v2863
    %2942 = vmatprep.subr.mxu0 %v2866
    %2943 = vmatpush1.msra.mxu0 %v2865
    %2944 = vmatprep.subr.mxu0 %v2868
    %2945 = vmatpush1.msra.mxu0 %v2867
    %2946 = vmatprep.subr.mxu0 %v2870
    %2947 = vmatpush1.msra.mxu0 %v2869
    %2948 = vmatprep.subr.mxu0 %v2872
    %2949 = vmatpush1.msra.mxu0 %v2871
    %2950 = vmatprep.subr.mxu0 %v2874
    %2951 = vmatpush1.msra.mxu0 %v2873
    %2952 = vmatprep.subr.mxu0 %v2876
    %2953 = vmatpush1.msra.mxu0 %v2875
    %2954 = vmatprep.subr.mxu0 %v2878
    %2955 = vmatpush1.msra.mxu0 %v2877
    %2956 = vmatprep.subr.mxu0 %v2880
    %2957 = vmatpush1.msra.mxu0 %v2879
    %2958 = vmatprep.subr.mxu0 %v2882
    %2959 = vmatpush1.msra.mxu0 %v2881
    %2960 = vmatprep.subr.mxu0 %v2884
    %2961 = vmatpush1.msra.mxu0 %v2883
    %2962 = vmatprep.subr.mxu0 %v2886
    %2963 = vmatpush1.msra.mxu0 %v2885
    %2964 = vmatprep.subr.mxu0 %v2888
    %2965 = vmatpush1.msra.mxu0 %v2887
    %2966 = vmatprep.subr.mxu0 %v2890
    %2967 = vmatpush1.msra.mxu0 %v2889
    %2968 = vmatprep.subr.mxu0 %v2892
    %2969 = vmatpush1.msra.mxu0 %v2891
    %2970 = vmatprep.subr.mxu0 %v2894
    %2971 = vmatpush1.msra.mxu0 %v2893
    %2972 = vmatprep.subr.mxu0 %v2896
    %2973 = vmatpush1.msra.mxu0 %v2895
    %2974 = vmatprep.subr.mxu0 %v2898
    %2975 = vmatpush1.msra.mxu0 %v2897
    %2976 = vmatprep.subr.mxu0 %v2900
    %2977 = vmatpush1.msra.mxu0 %v2899
    %2978 = vmatprep.subr.mxu0 %v2902
    %2979 = vmatpush1.msra.mxu0 %v2901
    %2980 = vmatprep.subr.mxu0 %v2904
    %2981 = vmatpush1.msra.mxu0 %v2903
    %2982 = vmatprep.subr.mxu0 %v2906
    %2983 = vmatpush1.msra.mxu0 %v2905
    %2984 = vmatprep.subr.mxu0 %v2908
    %2985 = vmatpush1.msra.mxu0 %v2907
    %2986 = vmatprep.subr.mxu0 %v2910
    %2987 = vmatpush1.msra.mxu0 %v2909
    %2988 = vmatprep.subr.mxu0 %v2912
    %2989 = vmatpush1.msra.mxu0 %v2911
    %2990 = vmatprep.subr.mxu0 %v2914
    %2991 = vmatpush1.msra.mxu0 %v2913
    %2992 = vmatprep.subr.mxu0 %v2916
    %2993 = vmatpush1.msra.mxu0 %v2915
    %2994 = vmatprep.mubr.f32.mxu0 %v1025
    %2995 = vmatmul.mubr.f32.gmra.mrb[0].mxu0 %v650
    %v2996 = vpop.f32.mrb[0].mxu0
    %v2997 = vadd.f32 %v2923, %v2996
    %v2998 = vpop.f32.mrb[0].mxu0
    %v2999 = vadd.f32 %v2927, %v2998
    %3000 = vdwg.mxu0
    %v3001 = vmax.f32 %v2997, %v2999
    %3002 = vmax.xlane.f32.xlu0 %v3001
    %v3003 = vpop.xlane.xlu0 %3002
    %v3004 = vsub.f32 %v2997, %v3003
    %v3005 = vsub.f32 %v2999, %v3003
    %v3006 = vmul.f32 %v3004, 1.442695
    %v3007 = vpow.pop %v3006
    %v3008 = vmul.f32 %v3005, 1.442695
    %v3009 = vpow.pop %v3008
    %v3010 = vadd.f32 %v3007, %v3009
    %3011 = vadd.xlane.f32.xlu0 %v3010
    %v3012 = vpop.xlane.xlu0 %3011
    %v3013 = vrcp.pop %v3012
    %v3014 = vmul.f32 %v3007, %v3013
    %v3015 = vmul.f32 %v3009, %v3013
    %v3016 = vmul.f32 %v3014, %v650
    %v3017 = vmul.f32 %v3015, %v1025
    %s3018 = scalar_lea.vmem [#allocation19], 1024
    %v3019 = vld [vmem:[%s3018] sm:$0xff]
    %v3020 = vld [vmem:[%s3018 + $0x8] sm:$0xff]
    %v3021 = vld [vmem:[%s3018 + $0x10] sm:$0xff]
    %v3022 = vld [vmem:[%s3018 + $0x18] sm:$0xff]
    %v3023 = vld [vmem:[%s3018 + $0x20] sm:$0xff]
    %v3024 = vld [vmem:[%s3018 + $0x28] sm:$0xff]
    %v3025 = vld [vmem:[%s3018 + $0x30] sm:$0xff]
    %v3026 = vld [vmem:[%s3018 + $0x38] sm:$0xff]
    %v3027 = vld [vmem:[%s3018 + $0x40] sm:$0xff]
    %v3028 = vld [vmem:[%s3018 + $0x48] sm:$0xff]
    %v3029 = vld [vmem:[%s3018 + $0x50] sm:$0xff]
    %v3030 = vld [vmem:[%s3018 + $0x58] sm:$0xff]
    %v3031 = vld [vmem:[%s3018 + $0x60] sm:$0xff]
    %v3032 = vld [vmem:[%s3018 + $0x68] sm:$0xff]
    %v3033 = vld [vmem:[%s3018 + $0x70] sm:$0xff]
    %v3034 = vld [vmem:[%s3018 + $0x78] sm:$0xff]
    %v3035 = vld [vmem:[%s3018 + $0x80] sm:$0xff]
    %v3036 = vld [vmem:[%s3018 + $0x88] sm:$0xff]
    %v3037 = vld [vmem:[%s3018 + $0x90] sm:$0xff]
    %v3038 = vld [vmem:[%s3018 + $0x98] sm:$0xff]
    %v3039 = vld [vmem:[%s3018 + $0xa0] sm:$0xff]
    %v3040 = vld [vmem:[%s3018 + $0xa8] sm:$0xff]
    %v3041 = vld [vmem:[%s3018 + $0xb0] sm:$0xff]
    %v3042 = vld [vmem:[%s3018 + $0xb8] sm:$0xff]
    %v3043 = vld [vmem:[%s3018 + $0xc0] sm:$0xff]
    %v3044 = vld [vmem:[%s3018 + $0xc8] sm:$0xff]
    %v3045 = vld [vmem:[%s3018 + $0xd0] sm:$0xff]
    %v3046 = vld [vmem:[%s3018 + $0xd8] sm:$0xff]
    %v3047 = vld [vmem:[%s3018 + $0xe0] sm:$0xff]
    %v3048 = vld [vmem:[%s3018 + $0xe8] sm:$0xff]
    %v3049 = vld [vmem:[%s3018 + $0xf0] sm:$0xff]
    %v3050 = vld [vmem:[%s3018 + $0xf8] sm:$0xff]
    %v3051 = vld [vmem:[%s3018 + $0x100] sm:$0xff]
    %v3052 = vld [vmem:[%s3018 + $0x108] sm:$0xff]
    %v3053 = vld [vmem:[%s3018 + $0x110] sm:$0xff]
    %v3054 = vld [vmem:[%s3018 + $0x118] sm:$0xff]
    %v3055 = vld [vmem:[%s3018 + $0x120] sm:$0xff]
    %v3056 = vld [vmem:[%s3018 + $0x128] sm:$0xff]
    %v3057 = vld [vmem:[%s3018 + $0x130] sm:$0xff]
    %v3058 = vld [vmem:[%s3018 + $0x138] sm:$0xff]
    %v3059 = vld [vmem:[%s3018 + $0x140] sm:$0xff]
    %v3060 = vld [vmem:[%s3018 + $0x148] sm:$0xff]
    %v3061 = vld [vmem:[%s3018 + $0x150] sm:$0xff]
    %v3062 = vld [vmem:[%s3018 + $0x158] sm:$0xff]
    %v3063 = vld [vmem:[%s3018 + $0x160] sm:$0xff]
    %v3064 = vld [vmem:[%s3018 + $0x168] sm:$0xff]
    %v3065 = vld [vmem:[%s3018 + $0x170] sm:$0xff]
    %v3066 = vld [vmem:[%s3018 + $0x178] sm:$0xff]
    %v3067 = vld [vmem:[%s3018 + $0x180] sm:$0xff]
    %v3068 = vld [vmem:[%s3018 + $0x188] sm:$0xff]
    %v3069 = vld [vmem:[%s3018 + $0x190] sm:$0xff]
    %v3070 = vld [vmem:[%s3018 + $0x198] sm:$0xff]
    %v3071 = vld [vmem:[%s3018 + $0x1a0] sm:$0xff]
    %v3072 = vld [vmem:[%s3018 + $0x1a8] sm:$0xff]
    %v3073 = vld [vmem:[%s3018 + $0x1b0] sm:$0xff]
    %v3074 = vld [vmem:[%s3018 + $0x1b8] sm:$0xff]
    %v3075 = vld [vmem:[%s3018 + $0x1c0] sm:$0xff]
    %v3076 = vld [vmem:[%s3018 + $0x1c8] sm:$0xff]
    %v3077 = vld [vmem:[%s3018 + $0x1d0] sm:$0xff]
    %v3078 = vld [vmem:[%s3018 + $0x1d8] sm:$0xff]
    %v3079 = vld [vmem:[%s3018 + $0x1e0] sm:$0xff]
    %v3080 = vld [vmem:[%s3018 + $0x1e8] sm:$0xff]
    %v3081 = vld [vmem:[%s3018 + $0x1f0] sm:$0xff]
    %v3082 = vld [vmem:[%s3018 + $0x1f8] sm:$0xff]
    %s3083 = scalar_lea.vmem %s41, 4
    %v3084 = vld [vmem:[%s3083] sm:$0x3]
    %v3086 = vlaneseq
    %v3087 = vshrl.u32 %v3086, 7
    %v3088 = vsub.s32 0, %v3087
    %v3089 = vrot.slane %v3084, %v3088
    %v3090 = vlaneseq
    %v3091 = vshrl.u32 %v3090, 7
    %v3092 = vsub.s32 1, %v3091
    %v3093 = vrot.slane %v3084, %v3092
    %3096 = vmatprep.subr.mxu0 %v3020
    %3097 = vmatpush1.msra.mxu0 %v3019
    %3098 = vmatprep.subr.mxu0 %v3022
    %3099 = vmatpush1.msra.mxu0 %v3021
    %3100 = vmatprep.subr.mxu0 %v3024
    %3101 = vmatpush1.msra.mxu0 %v3023
    %3102 = vmatprep.subr.mxu0 %v3026
    %3103 = vmatpush1.msra.mxu0 %v3025
    %3104 = vmatprep.subr.mxu0 %v3028
    %3105 = vmatpush1.msra.mxu0 %v3027
    %3106 = vmatprep.subr.mxu0 %v3030
    %3107 = vmatpush1.msra.mxu0 %v3029
    %3108 = vmatprep.subr.mxu0 %v3032
    %3109 = vmatpush1.msra.mxu0 %v3031
    %3110 = vmatprep.subr.mxu0 %v3034
    %3111 = vmatpush1.msra.mxu0 %v3033
    %3112 = vmatprep.subr.mxu0 %v3036
    %3113 = vmatpush1.msra.mxu0 %v3035
    %3114 = vmatprep.subr.mxu0 %v3038
    %3115 = vmatpush1.msra.mxu0 %v3037
    %3116 = vmatprep.subr.mxu0 %v3040
    %3117 = vmatpush1.msra.mxu0 %v3039
    %3118 = vmatprep.subr.mxu0 %v3042
    %3119 = vmatpush1.msra.mxu0 %v3041
    %3120 = vmatprep.subr.mxu0 %v3044
    %3121 = vmatpush1.msra.mxu0 %v3043
    %3122 = vmatprep.subr.mxu0 %v3046
    %3123 = vmatpush1.msra.mxu0 %v3045
    %3124 = vmatprep.subr.mxu0 %v3048
    %3125 = vmatpush1.msra.mxu0 %v3047
    %3126 = vmatprep.subr.mxu0 %v3050
    %3127 = vmatpush1.msra.mxu0 %v3049
    %3128 = vmatprep.subr.mxu0 %v3052
    %3129 = vmatpush1.msra.mxu0 %v3051
    %3130 = vmatprep.subr.mxu0 %v3054
    %3131 = vmatpush1.msra.mxu0 %v3053
    %3132 = vmatprep.subr.mxu0 %v3056
    %3133 = vmatpush1.msra.mxu0 %v3055
    %3134 = vmatprep.subr.mxu0 %v3058
    %3135 = vmatpush1.msra.mxu0 %v3057
    %3136 = vmatprep.subr.mxu0 %v3060
    %3137 = vmatpush1.msra.mxu0 %v3059
    %3138 = vmatprep.subr.mxu0 %v3062
    %3139 = vmatpush1.msra.mxu0 %v3061
    %3140 = vmatprep.subr.mxu0 %v3064
    %3141 = vmatpush1.msra.mxu0 %v3063
    %3142 = vmatprep.subr.mxu0 %v3066
    %3143 = vmatpush1.msra.mxu0 %v3065
    %3144 = vmatprep.subr.mxu0 %v3068
    %3145 = vmatpush1.msra.mxu0 %v3067
    %3146 = vmatprep.subr.mxu0 %v3070
    %3147 = vmatpush1.msra.mxu0 %v3069
    %3148 = vmatprep.subr.mxu0 %v3072
    %3149 = vmatpush1.msra.mxu0 %v3071
    %3150 = vmatprep.subr.mxu0 %v3074
    %3151 = vmatpush1.msra.mxu0 %v3073
    %3152 = vmatprep.subr.mxu0 %v3076
    %3153 = vmatpush1.msra.mxu0 %v3075
    %3154 = vmatprep.subr.mxu0 %v3078
    %3155 = vmatpush1.msra.mxu0 %v3077
    %3156 = vmatprep.subr.mxu0 %v3080
    %3157 = vmatpush1.msra.mxu0 %v3079
    %3158 = vmatprep.subr.mxu0 %v3082
    %3159 = vmatpush1.msra.mxu0 %v3081
    %3160 = vmatprep.mubr.f32.mxu0 %v3017
    %3161 = vmatmul.mubr.f32.gmra.mrb[0].mxu0 %v3016
    %v3162 = vpop.f32.mrb[0].mxu0
    %v3163 = vadd.f32 %v3089, %v3162
    %v3164 = vpop.f32.mrb[0].mxu0
    %v3165 = vadd.f32 %v3093, %v3164
    %3166 = vdwg.mxu0
    %s3167 = scalar_lea.vmem [#allocation21], 1024
    %v3168 = vld [vmem:[%s3167] sm:$0xff]
    %v3169 = vld [vmem:[%s3167 + $0x8] sm:$0xff]
    %v3170 = vld [vmem:[%s3167 + $0x10] sm:$0xff]
    %v3171 = vld [vmem:[%s3167 + $0x18] sm:$0xff]
    %v3172 = vld [vmem:[%s3167 + $0x20] sm:$0xff]
    %v3173 = vld [vmem:[%s3167 + $0x28] sm:$0xff]
    %v3174 = vld [vmem:[%s3167 + $0x30] sm:$0xff]
    %v3175 = vld [vmem:[%s3167 + $0x38] sm:$0xff]
    %v3176 = vld [vmem:[%s3167 + $0x40] sm:$0xff]
    %v3177 = vld [vmem:[%s3167 + $0x48] sm:$0xff]
    %v3178 = vld [vmem:[%s3167 + $0x50] sm:$0xff]
    %v3179 = vld [vmem:[%s3167 + $0x58] sm:$0xff]
    %v3180 = vld [vmem:[%s3167 + $0x60] sm:$0xff]
    %v3181 = vld [vmem:[%s3167 + $0x68] sm:$0xff]
    %v3182 = vld [vmem:[%s3167 + $0x70] sm:$0xff]
    %v3183 = vld [vmem:[%s3167 + $0x78] sm:$0xff]
    %v3184 = vld [vmem:[%s3167 + $0x80] sm:$0xff]
    %v3185 = vld [vmem:[%s3167 + $0x88] sm:$0xff]
    %v3186 = vld [vmem:[%s3167 + $0x90] sm:$0xff]
    %v3187 = vld [vmem:[%s3167 + $0x98] sm:$0xff]
    %v3188 = vld [vmem:[%s3167 + $0xa0] sm:$0xff]
    %v3189 = vld [vmem:[%s3167 + $0xa8] sm:$0xff]
    %v3190 = vld [vmem:[%s3167 + $0xb0] sm:$0xff]
    %v3191 = vld [vmem:[%s3167 + $0xb8] sm:$0xff]
    %v3192 = vld [vmem:[%s3167 + $0xc0] sm:$0xff]
    %v3193 = vld [vmem:[%s3167 + $0xc8] sm:$0xff]
    %v3194 = vld [vmem:[%s3167 + $0xd0] sm:$0xff]
    %v3195 = vld [vmem:[%s3167 + $0xd8] sm:$0xff]
    %v3196 = vld [vmem:[%s3167 + $0xe0] sm:$0xff]
    %v3197 = vld [vmem:[%s3167 + $0xe8] sm:$0xff]
    %v3198 = vld [vmem:[%s3167 + $0xf0] sm:$0xff]
    %v3199 = vld [vmem:[%s3167 + $0xf8] sm:$0xff]
    %v3200 = vld [vmem:[%s3167 + $0x100] sm:$0xff]
    %v3201 = vld [vmem:[%s3167 + $0x108] sm:$0xff]
    %v3202 = vld [vmem:[%s3167 + $0x110] sm:$0xff]
    %v3203 = vld [vmem:[%s3167 + $0x118] sm:$0xff]
    %v3204 = vld [vmem:[%s3167 + $0x120] sm:$0xff]
    %v3205 = vld [vmem:[%s3167 + $0x128] sm:$0xff]
    %v3206 = vld [vmem:[%s3167 + $0x130] sm:$0xff]
    %v3207 = vld [vmem:[%s3167 + $0x138] sm:$0xff]
    %v3208 = vld [vmem:[%s3167 + $0x140] sm:$0xff]
    %v3209 = vld [vmem:[%s3167 + $0x148] sm:$0xff]
    %v3210 = vld [vmem:[%s3167 + $0x150] sm:$0xff]
    %v3211 = vld [vmem:[%s3167 + $0x158] sm:$0xff]
    %v3212 = vld [vmem:[%s3167 + $0x160] sm:$0xff]
    %v3213 = vld [vmem:[%s3167 + $0x168] sm:$0xff]
    %v3214 = vld [vmem:[%s3167 + $0x170] sm:$0xff]
    %v3215 = vld [vmem:[%s3167 + $0x178] sm:$0xff]
    %v3216 = vld [vmem:[%s3167 + $0x180] sm:$0xff]
    %v3217 = vld [vmem:[%s3167 + $0x188] sm:$0xff]
    %v3218 = vld [vmem:[%s3167 + $0x190] sm:$0xff]
    %v3219 = vld [vmem:[%s3167 + $0x198] sm:$0xff]
    %v3220 = vld [vmem:[%s3167 + $0x1a0] sm:$0xff]
    %v3221 = vld [vmem:[%s3167 + $0x1a8] sm:$0xff]
    %v3222 = vld [vmem:[%s3167 + $0x1b0] sm:$0xff]
    %v3223 = vld [vmem:[%s3167 + $0x1b8] sm:$0xff]
    %v3224 = vld [vmem:[%s3167 + $0x1c0] sm:$0xff]
    %v3225 = vld [vmem:[%s3167 + $0x1c8] sm:$0xff]
    %v3226 = vld [vmem:[%s3167 + $0x1d0] sm:$0xff]
    %v3227 = vld [vmem:[%s3167 + $0x1d8] sm:$0xff]
    %v3228 = vld [vmem:[%s3167 + $0x1e0] sm:$0xff]
    %v3229 = vld [vmem:[%s3167 + $0x1e8] sm:$0xff]
    %v3230 = vld [vmem:[%s3167 + $0x1f0] sm:$0xff]
    %v3231 = vld [vmem:[%s3167 + $0x1f8] sm:$0xff]
    %s3232 = scalar_lea.vmem %s45, 4
    %v3233 = vld [vmem:[%s3232] sm:$0x3]
    %v3235 = vlaneseq
    %v3236 = vshrl.u32 %v3235, 7
    %v3237 = vsub.s32 0, %v3236
    %v3238 = vrot.slane %v3233, %v3237
    %v3239 = vlaneseq
    %v3240 = vshrl.u32 %v3239, 7
    %v3241 = vsub.s32 1, %v3240
    %v3242 = vrot.slane %v3233, %v3241
    %3245 = vmatprep.subr.mxu0 %v3169
    %3246 = vmatpush1.msra.mxu0 %v3168
    %3247 = vmatprep.subr.mxu0 %v3171
    %3248 = vmatpush1.msra.mxu0 %v3170
    %3249 = vmatprep.subr.mxu0 %v3173
    %3250 = vmatpush1.msra.mxu0 %v3172
    %3251 = vmatprep.subr.mxu0 %v3175
    %3252 = vmatpush1.msra.mxu0 %v3174
    %3253 = vmatprep.subr.mxu0 %v3177
    %3254 = vmatpush1.msra.mxu0 %v3176
    %3255 = vmatprep.subr.mxu0 %v3179
    %3256 = vmatpush1.msra.mxu0 %v3178
    %3257 = vmatprep.subr.mxu0 %v3181
    %3258 = vmatpush1.msra.mxu0 %v3180
    %3259 = vmatprep.subr.mxu0 %v3183
    %3260 = vmatpush1.msra.mxu0 %v3182
    %3261 = vmatprep.subr.mxu0 %v3185
    %3262 = vmatpush1.msra.mxu0 %v3184
    %3263 = vmatprep.subr.mxu0 %v3187
    %3264 = vmatpush1.msra.mxu0 %v3186
    %3265 = vmatprep.subr.mxu0 %v3189
    %3266 = vmatpush1.msra.mxu0 %v3188
    %3267 = vmatprep.subr.mxu0 %v3191
    %3268 = vmatpush1.msra.mxu0 %v3190
    %3269 = vmatprep.subr.mxu0 %v3193
    %3270 = vmatpush1.msra.mxu0 %v3192
    %3271 = vmatprep.subr.mxu0 %v3195
    %3272 = vmatpush1.msra.mxu0 %v3194
    %3273 = vmatprep.subr.mxu0 %v3197
    %3274 = vmatpush1.msra.mxu0 %v3196
    %3275 = vmatprep.subr.mxu0 %v3199
    %3276 = vmatpush1.msra.mxu0 %v3198
    %3277 = vmatprep.subr.mxu0 %v3201
    %3278 = vmatpush1.msra.mxu0 %v3200
    %3279 = vmatprep.subr.mxu0 %v3203
    %3280 = vmatpush1.msra.mxu0 %v3202
    %3281 = vmatprep.subr.mxu0 %v3205
    %3282 = vmatpush1.msra.mxu0 %v3204
    %3283 = vmatprep.subr.mxu0 %v3207
    %3284 = vmatpush1.msra.mxu0 %v3206
    %3285 = vmatprep.subr.mxu0 %v3209
    %3286 = vmatpush1.msra.mxu0 %v3208
    %3287 = vmatprep.subr.mxu0 %v3211
    %3288 = vmatpush1.msra.mxu0 %v3210
    %3289 = vmatprep.subr.mxu0 %v3213
    %3290 = vmatpush1.msra.mxu0 %v3212
    %3291 = vmatprep.subr.mxu0 %v3215
    %3292 = vmatpush1.msra.mxu0 %v3214
    %3293 = vmatprep.subr.mxu0 %v3217
    %3294 = vmatpush1.msra.mxu0 %v3216
    %3295 = vmatprep.subr.mxu0 %v3219
    %3296 = vmatpush1.msra.mxu0 %v3218
    %3297 = vmatprep.subr.mxu0 %v3221
    %3298 = vmatpush1.msra.mxu0 %v3220
    %3299 = vmatprep.subr.mxu0 %v3223
    %3300 = vmatpush1.msra.mxu0 %v3222
    %3301 = vmatprep.subr.mxu0 %v3225
    %3302 = vmatpush1.msra.mxu0 %v3224
    %3303 = vmatprep.subr.mxu0 %v3227
    %3304 = vmatpush1.msra.mxu0 %v3226
    %3305 = vmatprep.subr.mxu0 %v3229
    %3306 = vmatpush1.msra.mxu0 %v3228
    %3307 = vmatprep.subr.mxu0 %v3231
    %3308 = vmatpush1.msra.mxu0 %v3230
    %3309 = vmatprep.mubr.f32.mxu0 %v3165
    %3310 = vmatmul.mubr.f32.gmra.mrb[0].mxu0 %v3163
    %v3311 = vpop.f32.mrb[0].mxu0
    %v3312 = vadd.f32 %v3238, %v3311
    %v3313 = vpop.f32.mrb[0].mxu0
    %v3314 = vadd.f32 %v3242, %v3313
    %3315 = vdwg.mxu0
    %v3316 = vadd.f32 %v3016, %v3312
    %v3317 = vadd.f32 %v3017, %v3314
    %s3318 = scalar_lea.vmem %s55, 4
    %v3319 = vld [vmem:[%s3318] sm:$0x3]
    %s3320 = scalar_lea.vmem %s57, 4
    %v3321 = vld [vmem:[%s3320] sm:$0x3]
    %v3322 = vadd.f32 %v3316, %v3317
    %3323 = vadd.xlane.f32.xlu0 %v3322
    %v3324 = vpop.xlane.xlu0 %3323
    %v3325 = vmul.f32 %v3324, %v1610
    %v3326 = vsub.f32 %v3316, %v3325
    %v3327 = vsub.f32 %v3317, %v3325
    %v3328 = vmul.f32 %v3326, %v3326
    %v3329 = vmul.f32 %v3327, %v3327
    %v3330 = vadd.f32 %v3328, %v3329
    %3331 = vadd.xlane.f32.xlu0 %v3330
    %v3332 = vpop.xlane.xlu0 %3331
    %v3333 = vmul.f32 %v3332, %v1610
    %v3334 = vadd.f32 %v3333, 1e-05
    %v3335 = vrsqrt.pop %v3334
    %v3336 = vmul.f32 %v3326, %v3335
    %v3337 = vmul.f32 %v3327, %v3335
    %v3339 = vlaneseq
    %v3340 = vshrl.u32 %v3339, 7
    %v3341 = vsub.s32 0, %v3340
    %v3342 = vrot.slane %v3319, %v3341
    %v3343 = vlaneseq
    %v3344 = vshrl.u32 %v3343, 7
    %v3345 = vsub.s32 1, %v3344
    %v3346 = vrot.slane %v3319, %v3345
    %v3349 = vmul.f32 %v3336, %v3342
    %v3350 = vmul.f32 %v3337, %v3346
    %v3352 = vlaneseq
    %v3353 = vshrl.u32 %v3352, 7
    %v3354 = vsub.s32 0, %v3353
    %v3355 = vrot.slane %v3321, %v3354
    %v3356 = vlaneseq
    %v3357 = vshrl.u32 %v3356, 7
    %v3358 = vsub.s32 1, %v3357
    %v3359 = vrot.slane %v3321, %v3358
    %v3362 = vadd.f32 %v3349, %v3355
    %v3363 = vadd.f32 %v3350, %v3359
    %s3364 = scalar_lea.vmem [#allocation22], 1024
    %v3365 = vld [vmem:[%s3364] sm:$0xff]
    %v3366 = vld [vmem:[%s3364 + $0x8] sm:$0xff]
    %v3367 = vld [vmem:[%s3364 + $0x10] sm:$0xff]
    %v3368 = vld [vmem:[%s3364 + $0x18] sm:$0xff]
    %v3369 = vld [vmem:[%s3364 + $0x20] sm:$0xff]
    %v3370 = vld [vmem:[%s3364 + $0x28] sm:$0xff]
    %v3371 = vld [vmem:[%s3364 + $0x30] sm:$0xff]
    %v3372 = vld [vmem:[%s3364 + $0x38] sm:$0xff]
    %v3373 = vld [vmem:[%s3364 + $0x40] sm:$0xff]
    %v3374 = vld [vmem:[%s3364 + $0x48] sm:$0xff]
    %v3375 = vld [vmem:[%s3364 + $0x50] sm:$0xff]
    %v3376 = vld [vmem:[%s3364 + $0x58] sm:$0xff]
    %v3377 = vld [vmem:[%s3364 + $0x60] sm:$0xff]
    %v3378 = vld [vmem:[%s3364 + $0x68] sm:$0xff]
    %v3379 = vld [vmem:[%s3364 + $0x70] sm:$0xff]
    %v3380 = vld [vmem:[%s3364 + $0x78] sm:$0xff]
    %v3381 = vld [vmem:[%s3364 + $0x80] sm:$0xff]
    %v3382 = vld [vmem:[%s3364 + $0x88] sm:$0xff]
    %v3383 = vld [vmem:[%s3364 + $0x90] sm:$0xff]
    %v3384 = vld [vmem:[%s3364 + $0x98] sm:$0xff]
    %v3385 = vld [vmem:[%s3364 + $0xa0] sm:$0xff]
    %v3386 = vld [vmem:[%s3364 + $0xa8] sm:$0xff]
    %v3387 = vld [vmem:[%s3364 + $0xb0] sm:$0xff]
    %v3388 = vld [vmem:[%s3364 + $0xb8] sm:$0xff]
    %v3389 = vld [vmem:[%s3364 + $0xc0] sm:$0xff]
    %v3390 = vld [vmem:[%s3364 + $0xc8] sm:$0xff]
    %v3391 = vld [vmem:[%s3364 + $0xd0] sm:$0xff]
    %v3392 = vld [vmem:[%s3364 + $0xd8] sm:$0xff]
    %v3393 = vld [vmem:[%s3364 + $0xe0] sm:$0xff]
    %v3394 = vld [vmem:[%s3364 + $0xe8] sm:$0xff]
    %v3395 = vld [vmem:[%s3364 + $0xf0] sm:$0xff]
    %v3396 = vld [vmem:[%s3364 + $0xf8] sm:$0xff]
    %v3397 = vld [vmem:[%s3364 + $0x100] sm:$0xff]
    %v3398 = vld [vmem:[%s3364 + $0x108] sm:$0xff]
    %v3399 = vld [vmem:[%s3364 + $0x110] sm:$0xff]
    %v3400 = vld [vmem:[%s3364 + $0x118] sm:$0xff]
    %v3401 = vld [vmem:[%s3364 + $0x120] sm:$0xff]
    %v3402 = vld [vmem:[%s3364 + $0x128] sm:$0xff]
    %v3403 = vld [vmem:[%s3364 + $0x130] sm:$0xff]
    %v3404 = vld [vmem:[%s3364 + $0x138] sm:$0xff]
    %v3405 = vld [vmem:[%s3364 + $0x140] sm:$0xff]
    %v3406 = vld [vmem:[%s3364 + $0x148] sm:$0xff]
    %v3407 = vld [vmem:[%s3364 + $0x150] sm:$0xff]
    %v3408 = vld [vmem:[%s3364 + $0x158] sm:$0xff]
    %v3409 = vld [vmem:[%s3364 + $0x160] sm:$0xff]
    %v3410 = vld [vmem:[%s3364 + $0x168] sm:$0xff]
    %v3411 = vld [vmem:[%s3364 + $0x170] sm:$0xff]
    %v3412 = vld [vmem:[%s3364 + $0x178] sm:$0xff]
    %v3413 = vld [vmem:[%s3364 + $0x180] sm:$0xff]
    %v3414 = vld [vmem:[%s3364 + $0x188] sm:$0xff]
    %v3415 = vld [vmem:[%s3364 + $0x190] sm:$0xff]
    %v3416 = vld [vmem:[%s3364 + $0x198] sm:$0xff]
    %v3417 = vld [vmem:[%s3364 + $0x1a0] sm:$0xff]
    %v3418 = vld [vmem:[%s3364 + $0x1a8] sm:$0xff]
    %v3419 = vld [vmem:[%s3364 + $0x1b0] sm:$0xff]
    %v3420 = vld [vmem:[%s3364 + $0x1b8] sm:$0xff]
    %v3421 = vld [vmem:[%s3364 + $0x1c0] sm:$0xff]
    %v3422 = vld [vmem:[%s3364 + $0x1c8] sm:$0xff]
    %v3423 = vld [vmem:[%s3364 + $0x1d0] sm:$0xff]
    %v3424 = vld [vmem:[%s3364 + $0x1d8] sm:$0xff]
    %v3425 = vld [vmem:[%s3364 + $0x1e0] sm:$0xff]
    %v3426 = vld [vmem:[%s3364 + $0x1e8] sm:$0xff]
    %v3427 = vld [vmem:[%s3364 + $0x1f0] sm:$0xff]
    %v3428 = vld [vmem:[%s3364 + $0x1f8] sm:$0xff]
    %s3429 = scalar_lea.vmem %s49, 4
    %v3430 = vld [vmem:[%s3429] sm:$0x3]
    %v3432 = vlaneseq
    %v3433 = vshrl.u32 %v3432, 7
    %v3434 = vsub.s32 0, %v3433
    %v3435 = vrot.slane %v3430, %v3434
    %v3436 = vlaneseq
    %v3437 = vshrl.u32 %v3436, 7
    %v3438 = vsub.s32 1, %v3437
    %v3439 = vrot.slane %v3430, %v3438
    %3442 = vmatprep.subr.mxu0 %v3366
    %3443 = vmatpush1.msra.mxu0 %v3365
    %3444 = vmatprep.subr.mxu0 %v3368
    %3445 = vmatpush1.msra.mxu0 %v3367
    %3446 = vmatprep.subr.mxu0 %v3370
    %3447 = vmatpush1.msra.mxu0 %v3369
    %3448 = vmatprep.subr.mxu0 %v3372
    %3449 = vmatpush1.msra.mxu0 %v3371
    %3450 = vmatprep.subr.mxu0 %v3374
    %3451 = vmatpush1.msra.mxu0 %v3373
    %3452 = vmatprep.subr.mxu0 %v3376
    %3453 = vmatpush1.msra.mxu0 %v3375
    %3454 = vmatprep.subr.mxu0 %v3378
    %3455 = vmatpush1.msra.mxu0 %v3377
    %3456 = vmatprep.subr.mxu0 %v3380
    %3457 = vmatpush1.msra.mxu0 %v3379
    %3458 = vmatprep.subr.mxu0 %v3382
    %3459 = vmatpush1.msra.mxu0 %v3381
    %3460 = vmatprep.subr.mxu0 %v3384
    %3461 = vmatpush1.msra.mxu0 %v3383
    %3462 = vmatprep.subr.mxu0 %v3386
    %3463 = vmatpush1.msra.mxu0 %v3385
    %3464 = vmatprep.subr.mxu0 %v3388
    %3465 = vmatpush1.msra.mxu0 %v3387
    %3466 = vmatprep.subr.mxu0 %v3390
    %3467 = vmatpush1.msra.mxu0 %v3389
    %3468 = vmatprep.subr.mxu0 %v3392
    %3469 = vmatpush1.msra.mxu0 %v3391
    %3470 = vmatprep.subr.mxu0 %v3394
    %3471 = vmatpush1.msra.mxu0 %v3393
    %3472 = vmatprep.subr.mxu0 %v3396
    %3473 = vmatpush1.msra.mxu0 %v3395
    %3474 = vmatprep.subr.mxu0 %v3398
    %3475 = vmatpush1.msra.mxu0 %v3397
    %3476 = vmatprep.subr.mxu0 %v3400
    %3477 = vmatpush1.msra.mxu0 %v3399
    %3478 = vmatprep.subr.mxu0 %v3402
    %3479 = vmatpush1.msra.mxu0 %v3401
    %3480 = vmatprep.subr.mxu0 %v3404
    %3481 = vmatpush1.msra.mxu0 %v3403
    %3482 = vmatprep.subr.mxu0 %v3406
    %3483 = vmatpush1.msra.mxu0 %v3405
    %3484 = vmatprep.subr.mxu0 %v3408
    %3485 = vmatpush1.msra.mxu0 %v3407
    %3486 = vmatprep.subr.mxu0 %v3410
    %3487 = vmatpush1.msra.mxu0 %v3409
    %3488 = vmatprep.subr.mxu0 %v3412
    %3489 = vmatpush1.msra.mxu0 %v3411
    %3490 = vmatprep.subr.mxu0 %v3414
    %3491 = vmatpush1.msra.mxu0 %v3413
    %3492 = vmatprep.subr.mxu0 %v3416
    %3493 = vmatpush1.msra.mxu0 %v3415
    %3494 = vmatprep.subr.mxu0 %v3418
    %3495 = vmatpush1.msra.mxu0 %v3417
    %3496 = vmatprep.subr.mxu0 %v3420
    %3497 = vmatpush1.msra.mxu0 %v3419
    %3498 = vmatprep.subr.mxu0 %v3422
    %3499 = vmatpush1.msra.mxu0 %v3421
    %3500 = vmatprep.subr.mxu0 %v3424
    %3501 = vmatpush1.msra.mxu0 %v3423
    %3502 = vmatprep.subr.mxu0 %v3426
    %3503 = vmatpush1.msra.mxu0 %v3425
    %3504 = vmatprep.subr.mxu0 %v3428
    %3505 = vmatpush1.msra.mxu0 %v3427
    %3506 = vmatprep.mubr.f32.mxu0 %v3363
    %3507 = vmatmul.mubr.f32.gmra.mrb[0].mxu0 %v3362
    %v3508 = vpop.f32.mrb[0].mxu0
    %v3509 = vadd.f32 %v3435, %v3508
    %v3510 = vpop.f32.mrb[0].mxu0
    %v3511 = vadd.f32 %v3439, %v3510
    %3512 = vdwg.mxu0
    %v3513 = vmax.f32 %v3509, 0.0
    %v3514 = vmax.f32 %v3511, 0.0
    %s3515 = scalar_lea.vmem [#allocation24], 1024
    %v3516 = vld [vmem:[%s3515] sm:$0xff]
    %v3517 = vld [vmem:[%s3515 + $0x8] sm:$0xff]
    %v3518 = vld [vmem:[%s3515 + $0x10] sm:$0xff]
    %v3519 = vld [vmem:[%s3515 + $0x18] sm:$0xff]
    %v3520 = vld [vmem:[%s3515 + $0x20] sm:$0xff]
    %v3521 = vld [vmem:[%s3515 + $0x28] sm:$0xff]
    %v3522 = vld [vmem:[%s3515 + $0x30] sm:$0xff]
    %v3523 = vld [vmem:[%s3515 + $0x38] sm:$0xff]
    %v3524 = vld [vmem:[%s3515 + $0x40] sm:$0xff]
    %v3525 = vld [vmem:[%s3515 + $0x48] sm:$0xff]
    %v3526 = vld [vmem:[%s3515 + $0x50] sm:$0xff]
    %v3527 = vld [vmem:[%s3515 + $0x58] sm:$0xff]
    %v3528 = vld [vmem:[%s3515 + $0x60] sm:$0xff]
    %v3529 = vld [vmem:[%s3515 + $0x68] sm:$0xff]
    %v3530 = vld [vmem:[%s3515 + $0x70] sm:$0xff]
    %v3531 = vld [vmem:[%s3515 + $0x78] sm:$0xff]
    %v3532 = vld [vmem:[%s3515 + $0x80] sm:$0xff]
    %v3533 = vld [vmem:[%s3515 + $0x88] sm:$0xff]
    %v3534 = vld [vmem:[%s3515 + $0x90] sm:$0xff]
    %v3535 = vld [vmem:[%s3515 + $0x98] sm:$0xff]
    %v3536 = vld [vmem:[%s3515 + $0xa0] sm:$0xff]
    %v3537 = vld [vmem:[%s3515 + $0xa8] sm:$0xff]
    %v3538 = vld [vmem:[%s3515 + $0xb0] sm:$0xff]
    %v3539 = vld [vmem:[%s3515 + $0xb8] sm:$0xff]
    %v3540 = vld [vmem:[%s3515 + $0xc0] sm:$0xff]
    %v3541 = vld [vmem:[%s3515 + $0xc8] sm:$0xff]
    %v3542 = vld [vmem:[%s3515 + $0xd0] sm:$0xff]
    %v3543 = vld [vmem:[%s3515 + $0xd8] sm:$0xff]
    %v3544 = vld [vmem:[%s3515 + $0xe0] sm:$0xff]
    %v3545 = vld [vmem:[%s3515 + $0xe8] sm:$0xff]
    %v3546 = vld [vmem:[%s3515 + $0xf0] sm:$0xff]
    %v3547 = vld [vmem:[%s3515 + $0xf8] sm:$0xff]
    %v3548 = vld [vmem:[%s3515 + $0x100] sm:$0xff]
    %v3549 = vld [vmem:[%s3515 + $0x108] sm:$0xff]
    %v3550 = vld [vmem:[%s3515 + $0x110] sm:$0xff]
    %v3551 = vld [vmem:[%s3515 + $0x118] sm:$0xff]
    %v3552 = vld [vmem:[%s3515 + $0x120] sm:$0xff]
    %v3553 = vld [vmem:[%s3515 + $0x128] sm:$0xff]
    %v3554 = vld [vmem:[%s3515 + $0x130] sm:$0xff]
    %v3555 = vld [vmem:[%s3515 + $0x138] sm:$0xff]
    %v3556 = vld [vmem:[%s3515 + $0x140] sm:$0xff]
    %v3557 = vld [vmem:[%s3515 + $0x148] sm:$0xff]
    %v3558 = vld [vmem:[%s3515 + $0x150] sm:$0xff]
    %v3559 = vld [vmem:[%s3515 + $0x158] sm:$0xff]
    %v3560 = vld [vmem:[%s3515 + $0x160] sm:$0xff]
    %v3561 = vld [vmem:[%s3515 + $0x168] sm:$0xff]
    %v3562 = vld [vmem:[%s3515 + $0x170] sm:$0xff]
    %v3563 = vld [vmem:[%s3515 + $0x178] sm:$0xff]
    %v3564 = vld [vmem:[%s3515 + $0x180] sm:$0xff]
    %v3565 = vld [vmem:[%s3515 + $0x188] sm:$0xff]
    %v3566 = vld [vmem:[%s3515 + $0x190] sm:$0xff]
    %v3567 = vld [vmem:[%s3515 + $0x198] sm:$0xff]
    %v3568 = vld [vmem:[%s3515 + $0x1a0] sm:$0xff]
    %v3569 = vld [vmem:[%s3515 + $0x1a8] sm:$0xff]
    %v3570 = vld [vmem:[%s3515 + $0x1b0] sm:$0xff]
    %v3571 = vld [vmem:[%s3515 + $0x1b8] sm:$0xff]
    %v3572 = vld [vmem:[%s3515 + $0x1c0] sm:$0xff]
    %v3573 = vld [vmem:[%s3515 + $0x1c8] sm:$0xff]
    %v3574 = vld [vmem:[%s3515 + $0x1d0] sm:$0xff]
    %v3575 = vld [vmem:[%s3515 + $0x1d8] sm:$0xff]
    %v3576 = vld [vmem:[%s3515 + $0x1e0] sm:$0xff]
    %v3577 = vld [vmem:[%s3515 + $0x1e8] sm:$0xff]
    %v3578 = vld [vmem:[%s3515 + $0x1f0] sm:$0xff]
    %v3579 = vld [vmem:[%s3515 + $0x1f8] sm:$0xff]
    %s3580 = scalar_lea.vmem %s53, 4
    %v3581 = vld [vmem:[%s3580] sm:$0x3]
    %v3583 = vlaneseq
    %v3584 = vshrl.u32 %v3583, 7
    %v3585 = vsub.s32 0, %v3584
    %v3586 = vrot.slane %v3581, %v3585
    %v3587 = vlaneseq
    %v3588 = vshrl.u32 %v3587, 7
    %v3589 = vsub.s32 1, %v3588
    %v3590 = vrot.slane %v3581, %v3589
    %3593 = vmatprep.subr.mxu0 %v3517
    %3594 = vmatpush1.msra.mxu0 %v3516
    %3595 = vmatprep.subr.mxu0 %v3519
    %3596 = vmatpush1.msra.mxu0 %v3518
    %3597 = vmatprep.subr.mxu0 %v3521
    %3598 = vmatpush1.msra.mxu0 %v3520
    %3599 = vmatprep.subr.mxu0 %v3523
    %3600 = vmatpush1.msra.mxu0 %v3522
    %3601 = vmatprep.subr.mxu0 %v3525
    %3602 = vmatpush1.msra.mxu0 %v3524
    %3603 = vmatprep.subr.mxu0 %v3527
    %3604 = vmatpush1.msra.mxu0 %v3526
    %3605 = vmatprep.subr.mxu0 %v3529
    %3606 = vmatpush1.msra.mxu0 %v3528
    %3607 = vmatprep.subr.mxu0 %v3531
    %3608 = vmatpush1.msra.mxu0 %v3530
    %3609 = vmatprep.subr.mxu0 %v3533
    %3610 = vmatpush1.msra.mxu0 %v3532
    %3611 = vmatprep.subr.mxu0 %v3535
    %3612 = vmatpush1.msra.mxu0 %v3534
    %3613 = vmatprep.subr.mxu0 %v3537
    %3614 = vmatpush1.msra.mxu0 %v3536
    %3615 = vmatprep.subr.mxu0 %v3539
    %3616 = vmatpush1.msra.mxu0 %v3538
    %3617 = vmatprep.subr.mxu0 %v3541
    %3618 = vmatpush1.msra.mxu0 %v3540
    %3619 = vmatprep.subr.mxu0 %v3543
    %3620 = vmatpush1.msra.mxu0 %v3542
    %3621 = vmatprep.subr.mxu0 %v3545
    %3622 = vmatpush1.msra.mxu0 %v3544
    %3623 = vmatprep.subr.mxu0 %v3547
    %3624 = vmatpush1.msra.mxu0 %v3546
    %3625 = vmatprep.subr.mxu0 %v3549
    %3626 = vmatpush1.msra.mxu0 %v3548
    %3627 = vmatprep.subr.mxu0 %v3551
    %3628 = vmatpush1.msra.mxu0 %v3550
    %3629 = vmatprep.subr.mxu0 %v3553
    %3630 = vmatpush1.msra.mxu0 %v3552
    %3631 = vmatprep.subr.mxu0 %v3555
    %3632 = vmatpush1.msra.mxu0 %v3554
    %3633 = vmatprep.subr.mxu0 %v3557
    %3634 = vmatpush1.msra.mxu0 %v3556
    %3635 = vmatprep.subr.mxu0 %v3559
    %3636 = vmatpush1.msra.mxu0 %v3558
    %3637 = vmatprep.subr.mxu0 %v3561
    %3638 = vmatpush1.msra.mxu0 %v3560
    %3639 = vmatprep.subr.mxu0 %v3563
    %3640 = vmatpush1.msra.mxu0 %v3562
    %3641 = vmatprep.subr.mxu0 %v3565
    %3642 = vmatpush1.msra.mxu0 %v3564
    %3643 = vmatprep.subr.mxu0 %v3567
    %3644 = vmatpush1.msra.mxu0 %v3566
    %3645 = vmatprep.subr.mxu0 %v3569
    %3646 = vmatpush1.msra.mxu0 %v3568
    %3647 = vmatprep.subr.mxu0 %v3571
    %3648 = vmatpush1.msra.mxu0 %v3570
    %3649 = vmatprep.subr.mxu0 %v3573
    %3650 = vmatpush1.msra.mxu0 %v3572
    %3651 = vmatprep.subr.mxu0 %v3575
    %3652 = vmatpush1.msra.mxu0 %v3574
    %3653 = vmatprep.subr.mxu0 %v3577
    %3654 = vmatpush1.msra.mxu0 %v3576
    %3655 = vmatprep.subr.mxu0 %v3579
    %3656 = vmatpush1.msra.mxu0 %v3578
    %3657 = vmatprep.mubr.f32.mxu0 %v3514
    %3658 = vmatmul.mubr.f32.gmra.mrb[0].mxu0 %v3513
    %v3659 = vpop.f32.mrb[0].mxu0
    %v3660 = vadd.f32 %v3586, %v3659
    %v3661 = vpop.f32.mrb[0].mxu0
    %v3662 = vadd.f32 %v3590, %v3661
    %3663 = vdwg.mxu0
    %v3664 = vadd.f32 %v3362, %v3660
    %v3665 = vadd.f32 %v3363, %v3662
    %s3666 = scalar_lea.vmem %s59, 4
    %v3667 = vld [vmem:[%s3666] sm:$0x3]
    %s3668 = scalar_lea.vmem %s61, 4
    %v3669 = vld [vmem:[%s3668] sm:$0x3]
    %v3670 = vadd.f32 %v3664, %v3665
    %3671 = vadd.xlane.f32.xlu0 %v3670
    %v3672 = vpop.xlane.xlu0 %3671
    %v3673 = vmul.f32 %v3672, %v1610
    %v3674 = vsub.f32 %v3664, %v3673
    %v3675 = vsub.f32 %v3665, %v3673
    %v3676 = vmul.f32 %v3674, %v3674
    %v3677 = vmul.f32 %v3675, %v3675
    %v3678 = vadd.f32 %v3676, %v3677
    %3679 = vadd.xlane.f32.xlu0 %v3678
    %v3680 = vpop.xlane.xlu0 %3679
    %v3681 = vmul.f32 %v3680, %v1610
    %v3682 = vadd.f32 %v3681, 1e-05
    %v3683 = vrsqrt.pop %v3682
    %v3684 = vmul.f32 %v3674, %v3683
    %v3685 = vmul.f32 %v3675, %v3683
    %v3687 = vlaneseq
    %v3688 = vshrl.u32 %v3687, 7
    %v3689 = vsub.s32 0, %v3688
    %v3690 = vrot.slane %v3667, %v3689
    %v3691 = vlaneseq
    %v3692 = vshrl.u32 %v3691, 7
    %v3693 = vsub.s32 1, %v3692
    %v3694 = vrot.slane %v3667, %v3693
    %v3697 = vmul.f32 %v3684, %v3690
    %v3698 = vmul.f32 %v3685, %v3694
    %v3700 = vlaneseq
    %v3701 = vshrl.u32 %v3700, 7
    %v3702 = vsub.s32 0, %v3701
    %v3703 = vrot.slane %v3669, %v3702
    %v3704 = vlaneseq
    %v3705 = vshrl.u32 %v3704, 7
    %v3706 = vsub.s32 1, %v3705
    %v3707 = vrot.slane %v3669, %v3706
    %v3710 = vadd.f32 %v3697, %v3703
    %v3711 = vadd.f32 %v3698, %v3707
    %s3712 = sld [smem:[#allocation2]]
    %s3713 = sld [smem:[#allocation2 + $0x1]]
    %v3714 = vstv %s3712
    %v3715 = vmul.f32 %v3714, %v1990
    %v3716 = vmul.f32 %v3714, %v1991
    %v3717 = vstv %s3713
    %v3718 = vmul.f32 %v3717, %v2850
    %v3719 = vmul.f32 %v3717, %v2851
    %v3720 = vadd.f32 %v3715, %v3718
    %v3721 = vadd.f32 %v3716, %v3719
    %s3722 = ssub.f32 1.0, %s3712
    %s3723 = ssub.f32 %s3722, %s3713
    %v3724 = vstv %s3723
    %v3725 = vmul.f32 %v3724, %v3710
    %v3726 = vmul.f32 %v3724, %v3711
    %v3727 = vadd.f32 %v3720, %v3725
    %v3728 = vadd.f32 %v3721, %v3726
    %v3729 = vld [vmem:[#allocation25] sm:$0xff]
    %v3730 = vld [vmem:[#allocation25 + $0x8] sm:$0xff]
    %v3731 = vld [vmem:[#allocation25 + $0x10] sm:$0xff]
    %v3732 = vld [vmem:[#allocation25 + $0x18] sm:$0xff]
    %v3733 = vld [vmem:[#allocation25 + $0x20] sm:$0xff]
    %v3734 = vld [vmem:[#allocation25 + $0x28] sm:$0xff]
    %v3735 = vld [vmem:[#allocation25 + $0x30] sm:$0xff]
    %v3736 = vld [vmem:[#allocation25 + $0x38] sm:$0xff]
    %v3737 = vld [vmem:[#allocation25 + $0x40] sm:$0xff]
    %v3738 = vld [vmem:[#allocation25 + $0x48] sm:$0xff]
    %v3739 = vld [vmem:[#allocation25 + $0x50] sm:$0xff]
    %v3740 = vld [vmem:[#allocation25 + $0x58] sm:$0xff]
    %v3741 = vld [vmem:[#allocation25 + $0x60] sm:$0xff]
    %v3742 = vld [vmem:[#allocation25 + $0x68] sm:$0xff]
    %v3743 = vld [vmem:[#allocation25 + $0x70] sm:$0xff]
    %v3744 = vld [vmem:[#allocation25 + $0x78] sm:$0xff]
    %v3745 = vld [vmem:[#allocation25 + $0x80] sm:$0xff]
    %v3746 = vld [vmem:[#allocation25 + $0x88] sm:$0xff]
    %v3747 = vld [vmem:[#allocation25 + $0x90] sm:$0xff]
    %v3748 = vld [vmem:[#allocation25 + $0x98] sm:$0xff]
    %v3749 = vld [vmem:[#allocation25 + $0xa0] sm:$0xff]
    %v3750 = vld [vmem:[#allocation25 + $0xa8] sm:$0xff]
    %v3751 = vld [vmem:[#allocation25 + $0xb0] sm:$0xff]
    %v3752 = vld [vmem:[#allocation25 + $0xb8] sm:$0xff]
    %v3753 = vld [vmem:[#allocation25 + $0xc0] sm:$0xff]
    %v3754 = vld [vmem:[#allocation25 + $0xc8] sm:$0xff]
    %v3755 = vld [vmem:[#allocation25 + $0xd0] sm:$0xff]
    %v3756 = vld [vmem:[#allocation25 + $0xd8] sm:$0xff]
    %v3757 = vld [vmem:[#allocation25 + $0xe0] sm:$0xff]
    %v3758 = vld [vmem:[#allocation25 + $0xe8] sm:$0xff]
    %v3759 = vld [vmem:[#allocation25 + $0xf0] sm:$0xff]
    %v3760 = vld [vmem:[#allocation25 + $0xf8] sm:$0xff]
    %v3761 = vld [vmem:[#allocation25 + $0x100] sm:$0xff]
    %v3762 = vld [vmem:[#allocation25 + $0x108] sm:$0xff]
    %v3763 = vld [vmem:[#allocation25 + $0x110] sm:$0xff]
    %v3764 = vld [vmem:[#allocation25 + $0x118] sm:$0xff]
    %v3765 = vld [vmem:[#allocation25 + $0x120] sm:$0xff]
    %v3766 = vld [vmem:[#allocation25 + $0x128] sm:$0xff]
    %v3767 = vld [vmem:[#allocation25 + $0x130] sm:$0xff]
    %v3768 = vld [vmem:[#allocation25 + $0x138] sm:$0xff]
    %v3769 = vld [vmem:[#allocation25 + $0x140] sm:$0xff]
    %v3770 = vld [vmem:[#allocation25 + $0x148] sm:$0xff]
    %v3771 = vld [vmem:[#allocation25 + $0x150] sm:$0xff]
    %v3772 = vld [vmem:[#allocation25 + $0x158] sm:$0xff]
    %v3773 = vld [vmem:[#allocation25 + $0x160] sm:$0xff]
    %v3774 = vld [vmem:[#allocation25 + $0x168] sm:$0xff]
    %v3775 = vld [vmem:[#allocation25 + $0x170] sm:$0xff]
    %v3776 = vld [vmem:[#allocation25 + $0x178] sm:$0xff]
    %v3777 = vld [vmem:[#allocation25 + $0x180] sm:$0xff]
    %v3778 = vld [vmem:[#allocation25 + $0x188] sm:$0xff]
    %v3779 = vld [vmem:[#allocation25 + $0x190] sm:$0xff]
    %v3780 = vld [vmem:[#allocation25 + $0x198] sm:$0xff]
    %v3781 = vld [vmem:[#allocation25 + $0x1a0] sm:$0xff]
    %v3782 = vld [vmem:[#allocation25 + $0x1a8] sm:$0xff]
    %v3783 = vld [vmem:[#allocation25 + $0x1b0] sm:$0xff]
    %v3784 = vld [vmem:[#allocation25 + $0x1b8] sm:$0xff]
    %v3785 = vld [vmem:[#allocation25 + $0x1c0] sm:$0xff]
    %v3786 = vld [vmem:[#allocation25 + $0x1c8] sm:$0xff]
    %v3787 = vld [vmem:[#allocation25 + $0x1d0] sm:$0xff]
    %v3788 = vld [vmem:[#allocation25 + $0x1d8] sm:$0xff]
    %v3789 = vld [vmem:[#allocation25 + $0x1e0] sm:$0xff]
    %v3790 = vld [vmem:[#allocation25 + $0x1e8] sm:$0xff]
    %v3791 = vld [vmem:[#allocation25 + $0x1f0] sm:$0xff]
    %v3792 = vld [vmem:[#allocation25 + $0x1f8] sm:$0xff]
    %v3793 = vld [vmem:[#allocation27] sm:$0x3]
    %v3795 = vlaneseq
    %v3796 = vshrl.u32 %v3795, 7
    %v3797 = vsub.s32 0, %v3796
    %v3798 = vrot.slane %v3793, %v3797
    %v3799 = vlaneseq
    %v3800 = vshrl.u32 %v3799, 7
    %v3801 = vsub.s32 1, %v3800
    %v3802 = vrot.slane %v3793, %v3801
    %3805 = vmatprep.subr.mxu0 %v3730
    %3806 = vmatpush1.msra.mxu0 %v3729
    %3807 = vmatprep.subr.mxu0 %v3732
    %3808 = vmatpush1.msra.mxu0 %v3731
    %3809 = vmatprep.subr.mxu0 %v3734
    %3810 = vmatpush1.msra.mxu0 %v3733
    %3811 = vmatprep.subr.mxu0 %v3736
    %3812 = vmatpush1.msra.mxu0 %v3735
    %3813 = vmatprep.subr.mxu0 %v3738
    %3814 = vmatpush1.msra.mxu0 %v3737
    %3815 = vmatprep.subr.mxu0 %v3740
    %3816 = vmatpush1.msra.mxu0 %v3739
    %3817 = vmatprep.subr.mxu0 %v3742
    %3818 = vmatpush1.msra.mxu0 %v3741
    %3819 = vmatprep.subr.mxu0 %v3744
    %3820 = vmatpush1.msra.mxu0 %v3743
    %3821 = vmatprep.subr.mxu0 %v3746
    %3822 = vmatpush1.msra.mxu0 %v3745
    %3823 = vmatprep.subr.mxu0 %v3748
    %3824 = vmatpush1.msra.mxu0 %v3747
    %3825 = vmatprep.subr.mxu0 %v3750
    %3826 = vmatpush1.msra.mxu0 %v3749
    %3827 = vmatprep.subr.mxu0 %v3752
    %3828 = vmatpush1.msra.mxu0 %v3751
    %3829 = vmatprep.subr.mxu0 %v3754
    %3830 = vmatpush1.msra.mxu0 %v3753
    %3831 = vmatprep.subr.mxu0 %v3756
    %3832 = vmatpush1.msra.mxu0 %v3755
    %3833 = vmatprep.subr.mxu0 %v3758
    %3834 = vmatpush1.msra.mxu0 %v3757
    %3835 = vmatprep.subr.mxu0 %v3760
    %3836 = vmatpush1.msra.mxu0 %v3759
    %3837 = vmatprep.subr.mxu0 %v3762
    %3838 = vmatpush1.msra.mxu0 %v3761
    %3839 = vmatprep.subr.mxu0 %v3764
    %3840 = vmatpush1.msra.mxu0 %v3763
    %3841 = vmatprep.subr.mxu0 %v3766
    %3842 = vmatpush1.msra.mxu0 %v3765
    %3843 = vmatprep.subr.mxu0 %v3768
    %3844 = vmatpush1.msra.mxu0 %v3767
    %3845 = vmatprep.subr.mxu0 %v3770
    %3846 = vmatpush1.msra.mxu0 %v3769
    %3847 = vmatprep.subr.mxu0 %v3772
    %3848 = vmatpush1.msra.mxu0 %v3771
    %3849 = vmatprep.subr.mxu0 %v3774
    %3850 = vmatpush1.msra.mxu0 %v3773
    %3851 = vmatprep.subr.mxu0 %v3776
    %3852 = vmatpush1.msra.mxu0 %v3775
    %3853 = vmatprep.subr.mxu0 %v3778
    %3854 = vmatpush1.msra.mxu0 %v3777
    %3855 = vmatprep.subr.mxu0 %v3780
    %3856 = vmatpush1.msra.mxu0 %v3779
    %3857 = vmatprep.subr.mxu0 %v3782
    %3858 = vmatpush1.msra.mxu0 %v3781
    %3859 = vmatprep.subr.mxu0 %v3784
    %3860 = vmatpush1.msra.mxu0 %v3783
    %3861 = vmatprep.subr.mxu0 %v3786
    %3862 = vmatpush1.msra.mxu0 %v3785
    %3863 = vmatprep.subr.mxu0 %v3788
    %3864 = vmatpush1.msra.mxu0 %v3787
    %3865 = vmatprep.subr.mxu0 %v3790
    %3866 = vmatpush1.msra.mxu0 %v3789
    %3867 = vmatprep.subr.mxu0 %v3792
    %3868 = vmatpush1.msra.mxu0 %v3791
    %3869 = vmatprep.mubr.f32.mxu0 %v3728
    %3870 = vmatmul.mubr.f32.gmra.mrb[0].mxu0 %v3727
    %v3871 = vpop.f32.mrb[0].mxu0
    %v3872 = vadd.f32 %v3798, %v3871
    %v3873 = vpop.f32.mrb[0].mxu0
    %v3874 = vadd.f32 %v3802, %v3873
    %3875 = vdwg.mxu0
    %v3876 = vmax.f32 %v3872, 0.0
    %v3877 = vmax.f32 %v3874, 0.0
    %v3878 = vld [vmem:[#allocation28] sm:$0xff]
    %v3879 = vld [vmem:[#allocation28 + $0x8] sm:$0xff]
    %v3880 = vld [vmem:[#allocation28 + $0x10] sm:$0xff]
    %v3881 = vld [vmem:[#allocation28 + $0x18] sm:$0xff]
    %v3882 = vld [vmem:[#allocation28 + $0x20] sm:$0xff]
    %v3883 = vld [vmem:[#allocation28 + $0x28] sm:$0xff]
    %v3884 = vld [vmem:[#allocation28 + $0x30] sm:$0xff]
    %v3885 = vld [vmem:[#allocation28 + $0x38] sm:$0xff]
    %v3886 = vld [vmem:[#allocation28 + $0x40] sm:$0xff]
    %v3887 = vld [vmem:[#allocation28 + $0x48] sm:$0xff]
    %v3888 = vld [vmem:[#allocation28 + $0x50] sm:$0xff]
    %v3889 = vld [vmem:[#allocation28 + $0x58] sm:$0xff]
    %v3890 = vld [vmem:[#allocation28 + $0x60] sm:$0xff]
    %v3891 = vld [vmem:[#allocation28 + $0x68] sm:$0xff]
    %v3892 = vld [vmem:[#allocation28 + $0x70] sm:$0xff]
    %v3893 = vld [vmem:[#allocation28 + $0x78] sm:$0xff]
    %v3894 = vld [vmem:[#allocation28 + $0x80] sm:$0xff]
    %v3895 = vld [vmem:[#allocation28 + $0x88] sm:$0xff]
    %v3896 = vld [vmem:[#allocation28 + $0x90] sm:$0xff]
    %v3897 = vld [vmem:[#allocation28 + $0x98] sm:$0xff]
    %v3898 = vld [vmem:[#allocation28 + $0xa0] sm:$0xff]
    %v3899 = vld [vmem:[#allocation28 + $0xa8] sm:$0xff]
    %v3900 = vld [vmem:[#allocation28 + $0xb0] sm:$0xff]
    %v3901 = vld [vmem:[#allocation28 + $0xb8] sm:$0xff]
    %v3902 = vld [vmem:[#allocation28 + $0xc0] sm:$0xff]
    %v3903 = vld [vmem:[#allocation28 + $0xc8] sm:$0xff]
    %v3904 = vld [vmem:[#allocation28 + $0xd0] sm:$0xff]
    %v3905 = vld [vmem:[#allocation28 + $0xd8] sm:$0xff]
    %v3906 = vld [vmem:[#allocation28 + $0xe0] sm:$0xff]
    %v3907 = vld [vmem:[#allocation28 + $0xe8] sm:$0xff]
    %v3908 = vld [vmem:[#allocation28 + $0xf0] sm:$0xff]
    %v3909 = vld [vmem:[#allocation28 + $0xf8] sm:$0xff]
    %v3910 = vld [vmem:[#allocation28 + $0x100] sm:$0xff]
    %v3911 = vld [vmem:[#allocation28 + $0x108] sm:$0xff]
    %v3912 = vld [vmem:[#allocation28 + $0x110] sm:$0xff]
    %v3913 = vld [vmem:[#allocation28 + $0x118] sm:$0xff]
    %v3914 = vld [vmem:[#allocation28 + $0x120] sm:$0xff]
    %v3915 = vld [vmem:[#allocation28 + $0x128] sm:$0xff]
    %v3916 = vld [vmem:[#allocation28 + $0x130] sm:$0xff]
    %v3917 = vld [vmem:[#allocation28 + $0x138] sm:$0xff]
    %v3918 = vld [vmem:[#allocation28 + $0x140] sm:$0xff]
    %v3919 = vld [vmem:[#allocation28 + $0x148] sm:$0xff]
    %v3920 = vld [vmem:[#allocation28 + $0x150] sm:$0xff]
    %v3921 = vld [vmem:[#allocation28 + $0x158] sm:$0xff]
    %v3922 = vld [vmem:[#allocation28 + $0x160] sm:$0xff]
    %v3923 = vld [vmem:[#allocation28 + $0x168] sm:$0xff]
    %v3924 = vld [vmem:[#allocation28 + $0x170] sm:$0xff]
    %v3925 = vld [vmem:[#allocation28 + $0x178] sm:$0xff]
    %v3926 = vld [vmem:[#allocation28 + $0x180] sm:$0xff]
    %v3927 = vld [vmem:[#allocation28 + $0x188] sm:$0xff]
    %v3928 = vld [vmem:[#allocation28 + $0x190] sm:$0xff]
    %v3929 = vld [vmem:[#allocation28 + $0x198] sm:$0xff]
    %v3930 = vld [vmem:[#allocation28 + $0x1a0] sm:$0xff]
    %v3931 = vld [vmem:[#allocation28 + $0x1a8] sm:$0xff]
    %v3932 = vld [vmem:[#allocation28 + $0x1b0] sm:$0xff]
    %v3933 = vld [vmem:[#allocation28 + $0x1b8] sm:$0xff]
    %v3934 = vld [vmem:[#allocation28 + $0x1c0] sm:$0xff]
    %v3935 = vld [vmem:[#allocation28 + $0x1c8] sm:$0xff]
    %v3936 = vld [vmem:[#allocation28 + $0x1d0] sm:$0xff]
    %v3937 = vld [vmem:[#allocation28 + $0x1d8] sm:$0xff]
    %v3938 = vld [vmem:[#allocation28 + $0x1e0] sm:$0xff]
    %v3939 = vld [vmem:[#allocation28 + $0x1e8] sm:$0xff]
    %v3940 = vld [vmem:[#allocation28 + $0x1f0] sm:$0xff]
    %v3941 = vld [vmem:[#allocation28 + $0x1f8] sm:$0xff]
    %v3942 = vld [vmem:[#allocation30] sm:$0x3]
    %v3944 = vlaneseq
    %v3945 = vshrl.u32 %v3944, 7
    %v3946 = vsub.s32 0, %v3945
    %v3947 = vrot.slane %v3942, %v3946
    %v3948 = vlaneseq
    %v3949 = vshrl.u32 %v3948, 7
    %v3950 = vsub.s32 1, %v3949
    %v3951 = vrot.slane %v3942, %v3950
    %3954 = vmatprep.subr.mxu0 %v3879
    %3955 = vmatpush1.msra.mxu0 %v3878
    %3956 = vmatprep.subr.mxu0 %v3881
    %3957 = vmatpush1.msra.mxu0 %v3880
    %3958 = vmatprep.subr.mxu0 %v3883
    %3959 = vmatpush1.msra.mxu0 %v3882
    %3960 = vmatprep.subr.mxu0 %v3885
    %3961 = vmatpush1.msra.mxu0 %v3884
    %3962 = vmatprep.subr.mxu0 %v3887
    %3963 = vmatpush1.msra.mxu0 %v3886
    %3964 = vmatprep.subr.mxu0 %v3889
    %3965 = vmatpush1.msra.mxu0 %v3888
    %3966 = vmatprep.subr.mxu0 %v3891
    %3967 = vmatpush1.msra.mxu0 %v3890
    %3968 = vmatprep.subr.mxu0 %v3893
    %3969 = vmatpush1.msra.mxu0 %v3892
    %3970 = vmatprep.subr.mxu0 %v3895
    %3971 = vmatpush1.msra.mxu0 %v3894
    %3972 = vmatprep.subr.mxu0 %v3897
    %3973 = vmatpush1.msra.mxu0 %v3896
    %3974 = vmatprep.subr.mxu0 %v3899
    %3975 = vmatpush1.msra.mxu0 %v3898
    %3976 = vmatprep.subr.mxu0 %v3901
    %3977 = vmatpush1.msra.mxu0 %v3900
    %3978 = vmatprep.subr.mxu0 %v3903
    %3979 = vmatpush1.msra.mxu0 %v3902
    %3980 = vmatprep.subr.mxu0 %v3905
    %3981 = vmatpush1.msra.mxu0 %v3904
    %3982 = vmatprep.subr.mxu0 %v3907
    %3983 = vmatpush1.msra.mxu0 %v3906
    %3984 = vmatprep.subr.mxu0 %v3909
    %3985 = vmatpush1.msra.mxu0 %v3908
    %3986 = vmatprep.subr.mxu0 %v3911
    %3987 = vmatpush1.msra.mxu0 %v3910
    %3988 = vmatprep.subr.mxu0 %v3913
    %3989 = vmatpush1.msra.mxu0 %v3912
    %3990 = vmatprep.subr.mxu0 %v3915
    %3991 = vmatpush1.msra.mxu0 %v3914
    %3992 = vmatprep.subr.mxu0 %v3917
    %3993 = vmatpush1.msra.mxu0 %v3916
    %3994 = vmatprep.subr.mxu0 %v3919
    %3995 = vmatpush1.msra.mxu0 %v3918
    %3996 = vmatprep.subr.mxu0 %v3921
    %3997 = vmatpush1.msra.mxu0 %v3920
    %3998 = vmatprep.subr.mxu0 %v3923
    %3999 = vmatpush1.msra.mxu0 %v3922
    %4000 = vmatprep.subr.mxu0 %v3925
    %4001 = vmatpush1.msra.mxu0 %v3924
    %4002 = vmatprep.subr.mxu0 %v3927
    %4003 = vmatpush1.msra.mxu0 %v3926
    %4004 = vmatprep.subr.mxu0 %v3929
    %4005 = vmatpush1.msra.mxu0 %v3928
    %4006 = vmatprep.subr.mxu0 %v3931
    %4007 = vmatpush1.msra.mxu0 %v3930
    %4008 = vmatprep.subr.mxu0 %v3933
    %4009 = vmatpush1.msra.mxu0 %v3932
    %4010 = vmatprep.subr.mxu0 %v3935
    %4011 = vmatpush1.msra.mxu0 %v3934
    %4012 = vmatprep.subr.mxu0 %v3937
    %4013 = vmatpush1.msra.mxu0 %v3936
    %4014 = vmatprep.subr.mxu0 %v3939
    %4015 = vmatpush1.msra.mxu0 %v3938
    %4016 = vmatprep.subr.mxu0 %v3941
    %4017 = vmatpush1.msra.mxu0 %v3940
    %4018 = vmatprep.mubr.f32.mxu0 %v3877
    %4019 = vmatmul.mubr.f32.gmra.mrb[0].mxu0 %v3876
    %v4020 = vpop.f32.mrb[0].mxu0
    %v4021 = vadd.f32 %v3947, %v4020
    %v4022 = vpop.f32.mrb[0].mxu0
    %v4023 = vadd.f32 %v3951, %v4022
    %4024 = vdwg.mxu0
    %v4025 = vmax.f32 %v4021, 0.0
    %v4026 = vmax.f32 %v4023, 0.0
    %v4027 = vld [vmem:[%s71] sm:$0xff]
    %v4028 = vld [vmem:[%s71 + $0x8] sm:$0xff]
    %v4029 = vld [vmem:[%s71 + $0x10] sm:$0xff]
    %v4030 = vld [vmem:[%s71 + $0x18] sm:$0xff]
    %v4031 = vld [vmem:[%s71 + $0x20] sm:$0xff]
    %v4032 = vld [vmem:[%s71 + $0x28] sm:$0xff]
    %v4033 = vld [vmem:[%s71 + $0x30] sm:$0xff]
    %v4034 = vld [vmem:[%s71 + $0x38] sm:$0xff]
    %v4035 = vld [vmem:[%s71 + $0x40] sm:$0xff]
    %v4036 = vld [vmem:[%s71 + $0x48] sm:$0xff]
    %v4037 = vld [vmem:[%s71 + $0x50] sm:$0xff]
    %v4038 = vld [vmem:[%s71 + $0x58] sm:$0xff]
    %v4039 = vld [vmem:[%s71 + $0x60] sm:$0xff]
    %v4040 = vld [vmem:[%s71 + $0x68] sm:$0xff]
    %v4041 = vld [vmem:[%s71 + $0x70] sm:$0xff]
    %v4042 = vld [vmem:[%s71 + $0x78] sm:$0xff]
    %v4043 = vld [vmem:[%s71 + $0x80] sm:$0xff]
    %v4044 = vld [vmem:[%s71 + $0x88] sm:$0xff]
    %v4045 = vld [vmem:[%s71 + $0x90] sm:$0xff]
    %v4046 = vld [vmem:[%s71 + $0x98] sm:$0xff]
    %v4047 = vld [vmem:[%s71 + $0xa0] sm:$0xff]
    %v4048 = vld [vmem:[%s71 + $0xa8] sm:$0xff]
    %v4049 = vld [vmem:[%s71 + $0xb0] sm:$0xff]
    %v4050 = vld [vmem:[%s71 + $0xb8] sm:$0xff]
    %v4051 = vld [vmem:[%s71 + $0xc0] sm:$0xff]
    %v4052 = vld [vmem:[%s71 + $0xc8] sm:$0xff]
    %v4053 = vld [vmem:[%s71 + $0xd0] sm:$0xff]
    %v4054 = vld [vmem:[%s71 + $0xd8] sm:$0xff]
    %v4055 = vld [vmem:[%s71 + $0xe0] sm:$0xff]
    %v4056 = vld [vmem:[%s71 + $0xe8] sm:$0xff]
    %v4057 = vld [vmem:[%s71 + $0xf0] sm:$0xff]
    %v4058 = vld [vmem:[%s71 + $0xf8] sm:$0xff]
    %v4059 = vld [vmem:[#allocation31] sm:$0x1]
    %v4061 = vlaneseq
    %v4062 = vshrl.u32 %v4061, 7
    %v4063 = vsub.s32 0, %v4062
    %v4064 = vrot.slane %v4059, %v4063
    %4066 = vmatprep.subr.mxu0 0.0
    %4067 = vmatpush1.msra.mxu0 %v4027
    %4068 = vmatprep.subr.mxu0 0.0
    %4069 = vmatpush1.msra.mxu0 %v4028
    %4070 = vmatprep.subr.mxu0 0.0
    %4071 = vmatpush1.msra.mxu0 %v4029
    %4072 = vmatprep.subr.mxu0 0.0
    %4073 = vmatpush1.msra.mxu0 %v4030
    %4074 = vmatprep.subr.mxu0 0.0
    %4075 = vmatpush1.msra.mxu0 %v4031
    %4076 = vmatprep.subr.mxu0 0.0
    %4077 = vmatpush1.msra.mxu0 %v4032
    %4078 = vmatprep.subr.mxu0 0.0
    %4079 = vmatpush1.msra.mxu0 %v4033
    %4080 = vmatprep.subr.mxu0 0.0
    %4081 = vmatpush1.msra.mxu0 %v4034
    %4082 = vmatprep.subr.mxu0 0.0
    %4083 = vmatpush1.msra.mxu0 %v4035
    %4084 = vmatprep.subr.mxu0 0.0
    %4085 = vmatpush1.msra.mxu0 %v4036
    %4086 = vmatprep.subr.mxu0 0.0
    %4087 = vmatpush1.msra.mxu0 %v4037
    %4088 = vmatprep.subr.mxu0 0.0
    %4089 = vmatpush1.msra.mxu0 %v4038
    %4090 = vmatprep.subr.mxu0 0.0
    %4091 = vmatpush1.msra.mxu0 %v4039
    %4092 = vmatprep.subr.mxu0 0.0
    %4093 = vmatpush1.msra.mxu0 %v4040
    %4094 = vmatprep.subr.mxu0 0.0
    %4095 = vmatpush1.msra.mxu0 %v4041
    %4096 = vmatprep.subr.mxu0 0.0
    %4097 = vmatpush1.msra.mxu0 %v4042
    %4098 = vmatprep.subr.mxu0 0.0
    %4099 = vmatpush1.msra.mxu0 %v4043
    %4100 = vmatprep.subr.mxu0 0.0
    %4101 = vmatpush1.msra.mxu0 %v4044
    %4102 = vmatprep.subr.mxu0 0.0
    %4103 = vmatpush1.msra.mxu0 %v4045
    %4104 = vmatprep.subr.mxu0 0.0
    %4105 = vmatpush1.msra.mxu0 %v4046
    %4106 = vmatprep.subr.mxu0 0.0
    %4107 = vmatpush1.msra.mxu0 %v4047
    %4108 = vmatprep.subr.mxu0 0.0
    %4109 = vmatpush1.msra.mxu0 %v4048
    %4110 = vmatprep.subr.mxu0 0.0
    %4111 = vmatpush1.msra.mxu0 %v4049
    %4112 = vmatprep.subr.mxu0 0.0
    %4113 = vmatpush1.msra.mxu0 %v4050
    %4114 = vmatprep.subr.mxu0 0.0
    %4115 = vmatpush1.msra.mxu0 %v4051
    %4116 = vmatprep.subr.mxu0 0.0
    %4117 = vmatpush1.msra.mxu0 %v4052
    %4118 = vmatprep.subr.mxu0 0.0
    %4119 = vmatpush1.msra.mxu0 %v4053
    %4120 = vmatprep.subr.mxu0 0.0
    %4121 = vmatpush1.msra.mxu0 %v4054
    %4122 = vmatprep.subr.mxu0 0.0
    %4123 = vmatpush1.msra.mxu0 %v4055
    %4124 = vmatprep.subr.mxu0 0.0
    %4125 = vmatpush1.msra.mxu0 %v4056
    %4126 = vmatprep.subr.mxu0 0.0
    %4127 = vmatpush1.msra.mxu0 %v4057
    %4128 = vmatprep.subr.mxu0 0.0
    %4129 = vmatpush1.msra.mxu0 %v4058
    %4130 = vmatprep.mubr.f32.mxu0 %v4026
    %4131 = vmatmul.mubr.f32.gmra.mrb[0].mxu0 %v4025
    %v4132 = vpop.f32.mrb[0].mxu0
    %v4133 = vadd.f32 %v4064, %v4132
    %v4134 = vpop.f32.mrb[0].mxu0
    %4135 = vdwg.mxu0
    %vm4136 = vcmask 15360
    %4137 = vst.msk [vmem:[%s75] sm:$0xff] %vm4136, %v4133
    // Predicated region
    $region226: #{forward.1} parent=1 // pred_check
      _
    $region227: #{forward.1} parent=1 // pred_check_branch
      %4139 = sbr.rel (0) target = $region229
    $region228: #{forward.1} parent=1 // pred_region
      _
    $region229: #{forward.1} parent=1 // pred_fallthru
      _
    // Predicated region
    $region230: #{forward.1} parent=1 // pred_check
      _
    $region231: #{forward.1} parent=1 // pred_check_branch
      %4141 = sbr.rel (0) target = $region233
    $region232: #{forward.1} parent=1 // pred_region
      %s4143 = ssub.s32 256, 256
      %4144 = vsyncadd [#allocation4], %s4143
      %s4146 = sshll.u32 [#allocation33], 4
      %s4147 = int_to_ptr.vmem [resolvable:$true] %s4146
      %4149 = dma.vmem_to_hbm [thread:$0]  %s4147, 256, %s77, [#allocation4]
    $region233: #{forward.1} parent=1 // pred_fallthru
      _
    // Predicated region
    $region234: #{forward.1} parent=1 // pred_check
      _
    $region235: #{forward.1} parent=1 // pred_check_branch
      %4151 = sbr.rel (0) target = $region237
    $region236: #{forward.1} parent=1 // pred_region
      %s4153 = ssub.s32 128, 128
      %4154 = vsyncadd [#allocation35], %s4153
      %s4156 = sshll.u32 [#allocation34], 4
      %s4157 = int_to_ptr.vmem [resolvable:$true] %s4156
      %4159 = dma.vmem_to_hbm [thread:$0]  %s4157, 128, %s79, [#allocation35]
    $region237: #{forward.1} parent=1 // pred_fallthru
      _
    // Predicated region
    $region238: #{forward.1} parent=1 // pred_check
      _
    $region239: #{forward.1} parent=1 // pred_check_branch
      %4161 = sbr.rel (0) target = $region241
    $region240: #{forward.1} parent=1 // pred_region
      %s4163 = ssub.s32 128, 128
      %4164 = vsyncadd [#allocation35], %s4163
      %s4166 = sshll.u32 [#allocation36], 4
      %s4167 = int_to_ptr.vmem [resolvable:$true] %s4166
      %4169 = dma.vmem_to_hbm [thread:$0]  %s4167, 128, %s81, [#allocation35]
    $region241: #{forward.1} parent=1 // pred_fallthru
      _
    // Predicated region
    $region242: #{forward.1} parent=1 // pred_check
      _
    $region243: #{forward.1} parent=1 // pred_check_branch
      %4171 = sbr.rel (0) target = $region245
    $region244: #{forward.1} parent=1 // pred_region
      %s4173 = ssub.s32 256, 256
      %4174 = vsyncadd [#allocation38], %s4173
      %s4176 = sshll.u32 [#allocation37], 4
      %s4177 = int_to_ptr.vmem [resolvable:$true] %s4176
      %4179 = dma.vmem_to_hbm [thread:$0]  %s4177, 256, %s83, [#allocation38]
    $region245: #{forward.1} parent=1 // pred_fallthru
      _
    // Predicated region
    $region246: #{forward.1} parent=1 // pred_check
      _
    $region247: #{forward.1} parent=1 // pred_check_branch
      %4181 = sbr.rel (0) target = $region249
    $region248: #{forward.1} parent=1 // pred_region
      _
    $region249: #{forward.1} parent=1 // pred_fallthru
      _
    // Predicated region
    $region250: #{forward.1} parent=1 // pred_check
      _
    $region251: #{forward.1} parent=1 // pred_check_branch
      %4183 = sbr.rel (0) target = $region253
    $region252: #{forward.1} parent=1 // pred_region
      %4184 = dma.done [#allocation4], 256
    $region253: #{forward.1} parent=1 // pred_fallthru
      _
    // Predicated region
    $region254: #{forward.1} parent=1 // pred_check
      _
    $region255: #{forward.1} parent=1 // pred_check_branch
      %4186 = sbr.rel (0) target = $region257
    $region256: #{forward.1} parent=1 // pred_region
      %4187 = dma.done [#allocation35], 128
    $region257: #{forward.1} parent=1 // pred_fallthru
      _
    // Predicated region
    $region258: #{forward.1} parent=1 // pred_check
      _
    $region259: #{forward.1} parent=1 // pred_check_branch
      %4189 = sbr.rel (0) target = $region261
    $region260: #{forward.1} parent=1 // pred_region
      %4190 = dma.done [#allocation35], 128
    $region261: #{forward.1} parent=1 // pred_fallthru
      _
    // Predicated region
    $region262: #{forward.1} parent=1 // pred_check
      _
    $region263: #{forward.1} parent=1 // pred_check_branch
      %4192 = sbr.rel (0) target = $region265
    $region264: #{forward.1} parent=1 // pred_region
      %4193 = dma.done [#allocation38], 256
    $region265: #{forward.1} parent=1 // pred_fallthru
      _
    %4194 = vsyncpa [#allocation3], 1
    %4195 = vsyncpa [#allocation8], 1
    %4196 = vsyncpa [#allocation11], 1
    %4197 = vsyncpa [#allocation14], 1
    %4198 = vsyncpa [#allocation17], 1
    %4199 = vsyncpa [#allocation20], 1
    %4200 = vsyncpa [#allocation23], 1
    %4201 = vsyncpa [#allocation26], 1
    %4202 = vsyncpa [#allocation29], 1
    %4203 = vsyncpa [#allocation32], 1
    %4204 = vsyncpa [#allocation4], 1
    %4205 = vsyncpa [#allocation35], 1
    %4206 = vsyncpa [#allocation38], 1
    %4207 = vsyncpa [#allocation5], 1

</llo_original>
